<compile_context>
chip_gen: v7x
topology: tpu7x:2x2x1
jax: 0.10.0
libtpu: 0.0.40
codegen_flags: <defaults>
</compile_context>

<pallas_src>
import jax
import jax.numpy as jnp
from jax.experimental import pallas as pl
from jax.experimental.pallas import tpu as pltpu

CENTER = 0.5  # base_density=None path in FlowDecorrelator.__init__


def _flow_decorrelator_kernel(
    dctx_ref,    # [D+1, TB]  rows 0..D-1: features, row D: mass; batch on lanes
    w1T_ref,     # [H, D+1]   classifier layer 1 (mass column fused in)
    b1T_ref,     # [H, 1]
    w2T_ref,     # [1, H]     classifier layer 2
    b2_ref,      # [1, 1]
    wc1T_ref,    # [H, 1]     flow conditioner layer 1
    bc1T_ref,    # [H, 1]
    wc2stT_ref,  # [2, H]     fused (s, t) head
    bcstT_ref,   # [2, 1]
    logp_ref,    # [1, TB]
):
    dctx = dctx_ref[...]                                   # [D+1, TB]
    mass = dctx[-1:, :].astype(jnp.float32)                # [1, TB]  (f32 for the flow path)

    # ---- classifier: enc = sigmoid(W2ᵀ relu(W1ᵀ [data; mass] + b1) + b2)
    h1 = jnp.dot(w1T_ref[...], dctx, preferred_element_type=jnp.float32)       # [H, TB]
    h1 = jnp.maximum(h1 + b1T_ref[...], 0.0)
    enc_logit = jnp.dot(w2T_ref[...], h1, preferred_element_type=jnp.float32) + b2_ref[...]
    enc = jax.nn.sigmoid(enc_logit)                        # [1, TB]  (the 1-D discriminant)

    # ---- flow conditioner: mass -> (s, t), single fused head matmul
    hc = jnp.maximum(wc1T_ref[...] * mass + bc1T_ref[...], 0.0)                # [H, TB]
    st = jnp.dot(wc2stT_ref[...], hc, preferred_element_type=jnp.float32) + bcstT_ref[...]
    s = st[0:1, :]
    t = st[1:2, :]

    # ---- transform_to_noise (eval mode) — EUP-light tail
    u = s * enc + t
    au = jnp.abs(u)
    e = jnp.exp(-au)                                       # EUP exp
    r = pl.reciprocal(1.0 + e, approx=True)                # = sigmoid(|u|), near-free vrcp
    z = jnp.where(u >= 0.0, r, 1.0 - r)                    # = sigmoid(u), no 2nd sigmoid
    # log_sigmoid(u) + log_sigmoid(-u) == -(|u| + 2*log1p(e)) == log(r*r) - |u|
    logabsdet = jnp.log(jnp.abs(s) * r * r) - au           # EUP log

    # eval-mode ordering check: sigmoid strictly monotone, so
    # sigmoid(0.1*s + t) > sigmoid(0.8*s + t)  <=>  s < 0.  Flip z -> 2*center - z.
    z = jnp.where(s < 0.0, 2.0 * CENTER - z, z)

    # ---- log_prob = logabsdet + BoxUniform([0],[1]).log_prob(z)
    # (z is provably always in [0,1] for this flow; the check is kept for semantic fidelity)
    in_box = jnp.logical_and(z >= 0.0, z <= 1.0)
    logp_ref[...] = jnp.where(in_box, logabsdet, -jnp.inf)


def flow_decorrelator_log_prob(
    data_ctx, params, *, block_b=8192, input_dtype=jnp.bfloat16, core_parallel=False
):
    """Per-event log_prob of the FlowDecorrelatorClassifier.

    data_ctx : [D+1, B] feature-major array, last row = mass (lane-dense producer layout).
               Emitting this layout from the producer avoids an HBM re-materialization of
               the dominant operand; the loss wrapper below builds it only as demo plumbing.
    block_b  : batch tile.  8192 default; ~32768 is the safe ceiling on v7x (64 MiB
               physical / 32 MiB scoped VMEM), v5e/v6e (128 MiB) can go larger.
    input_dtype : streaming dtype for data_ctx / W1 (bf16 halves the dominant HBM stream;
               all flow / elementwise math stays f32).  On the bf16 path the fused mass row
               is bf16 too — pass f32 if the conditioner needs full-precision mass.
    core_parallel : mark the batch axis CORE_PARALLEL so v7x's two TensorCores split it
               (plain "parallel" does not shard across cores); no-op on v5e/v6e.
    Returns logp_row of shape [1, B] (f32).
    """
    Dp1, B = data_ctx.shape
    H = params["w1d"].shape[1]
    block_b = min(block_b, B)
    assert B % block_b == 0, "batch must be a multiple of the batch tile"
    assert block_b == B or block_b % 128 == 0, "batch tile must be lane-aligned (x128)"
    grid = (B // block_b,)

    data_ctx = data_ctx.astype(input_dtype)
    # classifier layer 1 with the mass column fused into the data matmul (MXU absorbs w1m*mass)
    w1T = jnp.concatenate([params["w1d"], params["w1m"]], axis=0).T.astype(input_dtype)  # [H, D+1]
    b1T = params["b1"].reshape(H, 1)
    w2T = params["w2"].reshape(1, H)
    b2 = params["b2"].reshape(1, 1)
    wc1T = params["wc1"].reshape(H, 1)
    bc1T = params["bc1"].reshape(H, 1)
    wc2stT = jnp.concatenate([params["wc2s"], params["wc2t"]], axis=1).T                 # [2, H]
    bcstT = jnp.concatenate([params["bc2s"], params["bc2t"]], axis=1).reshape(2, 1)
    weights = (w1T, b1T, w2T, b2, wc1T, bc1T, wc2stT, bcstT)

    def resident(arr):  # constant index_map -> stays VMEM-resident across grid steps
        return pl.BlockSpec(arr.shape, lambda i: (0, 0))
    # NOTE: pipeline_mode=pl.Buffered(1) on the resident weights would drop their (tiny)
    # second VMEM buffer; left at the default to keep the lowering maximally plain.

    in_specs = [pl.BlockSpec((Dp1, block_b), lambda i: (0, i))] + [resident(w) for w in weights]

    batch_sem = pltpu.CORE_PARALLEL if core_parallel else "parallel"

    logp_row = pl.pallas_call(
        _flow_decorrelator_kernel,
        grid=grid,
        in_specs=in_specs,
        out_specs=pl.BlockSpec((1, block_b), lambda i: (0, i)),
        out_shape=jax.ShapeDtypeStruct((1, B), jnp.float32),
        compiler_params=pltpu.CompilerParams(
            dimension_semantics=(batch_sem,),
        ),
    )(data_ctx, *weights)
    return logp_row


def flow_decorrelator_classifier_loss(data, mass, labels, params, **kwargs):
    """compute_loss: encodings = classifier(data, mass); loss = -log_prob[labels==0].mean().

    Builds the fused [D+1, B] data/mass stream from [B, D] + [B, 1] inputs.  In production
    the producer should emit that layout directly (or the transpose/concat/cast should be
    fused into the pallas_call via allow_input_fusion) so the dominant operand is not
    re-materialized in HBM before the kernel.
    Returns (log_prob [B, 1], loss scalar).
    """
    B = data.shape[0]
    data_ctx = jnp.concatenate([data.T, mass.reshape(1, B)], axis=0)   # [D+1, B]
    logp_row = flow_decorrelator_log_prob(data_ctx, params, **kwargs)
    log_prob = logp_row.reshape(B, 1)

    # Masked mean in the wrapper keeps the grid axis parallel and avoids a 0/0 on an
    # all-signal batch (the PyTorch reference would return NaN there; we return 0.0 —
    # intentional, documented divergence).
    mask = labels.reshape(-1) == 0
    n0 = jnp.sum(mask)
    sum_lp = jnp.sum(jnp.where(mask, logp_row.reshape(-1), 0.0))
    loss = jnp.where(
        n0 > 0, -sum_lp / jnp.maximum(n0, 1).astype(jnp.float32), jnp.float32(0.0)
    )
    return log_prob, loss


def _reference(data, mass, labels, p):
    """Pure-JAX reference of the original (unoptimized) math, for correctness check."""
    h1 = jnp.maximum(data @ p["w1d"] + mass * p["w1m"] + p["b1"], 0.0)
    enc = jax.nn.sigmoid(h1 @ p["w2"] + p["b2"])
    hc = jnp.maximum(mass * p["wc1"] + p["bc1"], 0.0)
    s = hc @ p["wc2s"] + p["bc2s"]
    t = hc @ p["wc2t"] + p["bc2t"]
    u = s * enc + t
    z = jax.nn.sigmoid(u)
    logabsdet = jnp.log(jnp.abs(s)) + jax.nn.log_sigmoid(u) + jax.nn.log_sigmoid(-u)
    lb = jax.nn.sigmoid(s * 0.1 + t)                       # original eval-mode ordering check
    rb = jax.nn.sigmoid(s * 0.8 + t)
    z = jnp.where(lb > rb, -z + 2.0 * CENTER, z)
    base_lp = jnp.where(jnp.logical_and(z >= 0.0, z <= 1.0), 0.0, -jnp.inf)
    log_prob = logabsdet + base_lp
    mask = labels == 0
    loss = -jnp.sum(jnp.where(mask, log_prob, 0.0)) / jnp.sum(mask.astype(jnp.float32))
    return log_prob, loss


if __name__ == "__main__":
    # Small demo shapes (single 2048-event lane tile; production default block_b=8192+).
    B, D, H = 2048, 16, 32

    key = jax.random.PRNGKey(0)
    keys = jax.random.split(key, 12)

    data = jax.random.normal(keys[0], (B, D), dtype=jnp.float32)
    mass = jax.random.uniform(keys[1], (B, 1), dtype=jnp.float32)
    labels = (jnp.arange(B, dtype=jnp.int32) % 2).reshape(B, 1)  # half signal, half background

    scale = 0.3
    params = {
        # classifier MLP ([data, mass] -> H -> 1)
        "w1d": scale * jax.random.normal(keys[2], (D, H), dtype=jnp.float32),
        "w1m": scale * jax.random.normal(keys[3], (1, H), dtype=jnp.float32),
        "b1":  scale * jax.random.normal(keys[4], (1, H), dtype=jnp.float32),
        "w2":  scale * jax.random.normal(keys[5], (H, 1), dtype=jnp.float32),
        "b2":  scale * jax.random.normal(keys[6], (1, 1), dtype=jnp.float32),
        # flow conditioner MLP (mass -> H -> (s, t))
        "wc1":  scale * jax.random.normal(keys[7], (1, H), dtype=jnp.float32),
        "bc1":  scale * jax.random.normal(keys[8], (1, H), dtype=jnp.float32),
        "wc2s": scale * jax.random.normal(keys[9], (H, 1), dtype=jnp.float32),
        "bc2s": jnp.ones((1, 1), dtype=jnp.float32),       # bias scale toward monotone-increasing
        "wc2t": scale * jax.random.normal(keys[10], (H, 1), dtype=jnp.float32),
        "bc2t": jnp.zeros((1, 1), dtype=jnp.float32),
    }

    # f32 streaming for the strict correctness check; production default is bf16 streaming
    # (input_dtype=jnp.bfloat16) which halves the dominant HBM stream on v5e/v6e.
    log_prob, loss = flow_decorrelator_classifier_loss(
        data, mass, labels, params, input_dtype=jnp.float32
    )
    jax.block_until_ready((log_prob, loss))

    ref_lp, ref_loss = _reference(data, mass, labels, params)
    # Tolerance covers the approximate EUP reciprocal used in the logabsdet tail
    # (few low-order bits vs the exact log1p form).
    assert jnp.allclose(log_prob, ref_lp, rtol=5e-3, atol=5e-3), "log_prob mismatch"
    assert jnp.allclose(loss, ref_loss, rtol=5e-3, atol=5e-3), "loss mismatch"

    print("KERNEL_OK")
</pallas_src>

<mosaic_0001>
module attributes {stable_mosaic.version = 11 : i64} {
  func.func @_flow_decorrelator_kernel(%arg0: i32, %arg1: memref<17x2048xf32, #tpu.memory_space<vmem>>, %arg2: memref<32x17xf32, #tpu.memory_space<vmem>>, %arg3: memref<32x1xf32, #tpu.memory_space<vmem>>, %arg4: memref<1x32xf32, #tpu.memory_space<vmem>>, %arg5: memref<1x1xf32, #tpu.memory_space<vmem>>, %arg6: memref<32x1xf32, #tpu.memory_space<vmem>>, %arg7: memref<32x1xf32, #tpu.memory_space<vmem>>, %arg8: memref<2x32xf32, #tpu.memory_space<vmem>>, %arg9: memref<2x1xf32, #tpu.memory_space<vmem>>, %arg10: memref<1x2048xf32, #tpu.memory_space<vmem>>) attributes {dimension_semantics = [#tpu.dimension_semantics<parallel>], iteration_bounds = array<i64: 1>, scalar_prefetch = 0 : i64, scratch_operands = 0 : i64, tpu.core_type = #tpu.core_type<tc>, window_params = [{transform_indices = @transform_0, window_bounds = array<i64: 17, 2048>}, {pipeline_mode = #tpu.pipeline_mode<synchronous>, transform_indices = @transform_1, window_bounds = array<i64: 32, 17>}, {pipeline_mode = #tpu.pipeline_mode<synchronous>, transform_indices = @transform_2, window_bounds = array<i64: 32, 1>}, {pipeline_mode = #tpu.pipeline_mode<synchronous>, transform_indices = @transform_3, window_bounds = array<i64: 1, 32>}, {pipeline_mode = #tpu.pipeline_mode<synchronous>, transform_indices = @transform_4, window_bounds = array<i64: 1, 1>}, {pipeline_mode = #tpu.pipeline_mode<synchronous>, transform_indices = @transform_5, window_bounds = array<i64: 32, 1>}, {pipeline_mode = #tpu.pipeline_mode<synchronous>, transform_indices = @transform_6, window_bounds = array<i64: 32, 1>}, {pipeline_mode = #tpu.pipeline_mode<synchronous>, transform_indices = @transform_7, window_bounds = array<i64: 2, 32>}, {pipeline_mode = #tpu.pipeline_mode<synchronous>, transform_indices = @transform_8, window_bounds = array<i64: 2, 1>}, {transform_indices = @transform_9, window_bounds = array<i64: 1, 2048>}]} {
    %c0 = arith.constant 0 : index
    %c0_0 = arith.constant 0 : index
    %0 = vector.load %arg1[%c0, %c0_0] : memref<17x2048xf32, #tpu.memory_space<vmem>>, vector<17x2048xf32>
    %1 = vector.extract_strided_slice %0 {offsets = [16, 0], sizes = [1, 2048], strides = [1, 1]} : vector<17x2048xf32> to vector<1x2048xf32>
    %c0_1 = arith.constant 0 : index
    %c0_2 = arith.constant 0 : index
    %2 = vector.load %arg2[%c0_1, %c0_2] : memref<32x17xf32, #tpu.memory_space<vmem>>, vector<32x17xf32>
    %cst = arith.constant dense<0.000000e+00> : vector<32x2048xf32>
    %3 = tpu.matmul %2, %0, %cst {dimension_numbers = #tpu.dot_dimension_numbers<[1], [0], [0], [1], [0, 0, 1, 1], [], []>} : vector<32x17xf32>, vector<17x2048xf32>, vector<32x2048xf32> -> vector<32x2048xf32>
    %c0_3 = arith.constant 0 : index
    %c0_4 = arith.constant 0 : index
    %4 = vector.load %arg3[%c0_3, %c0_4] : memref<32x1xf32, #tpu.memory_space<vmem>>, vector<32x1xf32>
    %5 = vector.broadcast %4 : vector<32x1xf32> to vector<32x2048xf32>
    %6 = arith.addf %3, %5 : vector<32x2048xf32>
    %cst_5 = arith.constant 0.000000e+00 : f32
    %7 = vector.broadcast %cst_5 : f32 to vector<32x2048xf32>
    %8 = arith.maximumf %6, %7 : vector<32x2048xf32>
    %c0_6 = arith.constant 0 : index
    %c0_7 = arith.constant 0 : index
    %9 = vector.load %arg4[%c0_6, %c0_7] : memref<1x32xf32, #tpu.memory_space<vmem>>, vector<1x32xf32>
    %cst_8 = arith.constant dense<0.000000e+00> : vector<1x2048xf32>
    %10 = tpu.matmul %9, %8, %cst_8 {dimension_numbers = #tpu.dot_dimension_numbers<[1], [0], [0], [1], [0, 0, 1, 1], [], []>} : vector<1x32xf32>, vector<32x2048xf32>, vector<1x2048xf32> -> vector<1x2048xf32>
    %c0_9 = arith.constant 0 : index
    %c0_10 = arith.constant 0 : index
    %11 = vector.load %arg5[%c0_9, %c0_10] : memref<1x1xf32, #tpu.memory_space<vmem>>, vector<1x1xf32>
    %12 = vector.broadcast %11 : vector<1x1xf32> to vector<1x2048xf32>
    %13 = arith.addf %10, %12 : vector<1x2048xf32>
    %14 = arith.negf %13 : vector<1x2048xf32>
    %15 = math.exp %14 : vector<1x2048xf32>
    %cst_11 = arith.constant 1.000000e+00 : f32
    %16 = vector.broadcast %cst_11 : f32 to vector<1x2048xf32>
    %17 = arith.addf %16, %15 : vector<1x2048xf32>
    %18 = arith.divf %16, %17 : vector<1x2048xf32>
    %c0_12 = arith.constant 0 : index
    %c0_13 = arith.constant 0 : index
    %19 = vector.load %arg6[%c0_12, %c0_13] : memref<32x1xf32, #tpu.memory_space<vmem>>, vector<32x1xf32>
    %20 = vector.broadcast %19 : vector<32x1xf32> to vector<32x2048xf32>
    %21 = vector.broadcast %1 : vector<1x2048xf32> to vector<32x2048xf32>
    %22 = arith.mulf %20, %21 : vector<32x2048xf32>
    %c0_14 = arith.constant 0 : index
    %c0_15 = arith.constant 0 : index
    %23 = vector.load %arg7[%c0_14, %c0_15] : memref<32x1xf32, #tpu.memory_space<vmem>>, vector<32x1xf32>
    %24 = vector.broadcast %23 : vector<32x1xf32> to vector<32x2048xf32>
    %25 = arith.addf %22, %24 : vector<32x2048xf32>
    %cst_16 = arith.constant 0.000000e+00 : f32
    %26 = vector.broadcast %cst_16 : f32 to vector<32x2048xf32>
    %27 = arith.maximumf %25, %26 : vector<32x2048xf32>
    %c0_17 = arith.constant 0 : index
    %c0_18 = arith.constant 0 : index
    %28 = vector.load %arg8[%c0_17, %c0_18] : memref<2x32xf32, #tpu.memory_space<vmem>>, vector<2x32xf32>
    %cst_19 = arith.constant dense<0.000000e+00> : vector<2x2048xf32>
    %29 = tpu.matmul %28, %27, %cst_19 {dimension_numbers = #tpu.dot_dimension_numbers<[1], [0], [0], [1], [0, 0, 1, 1], [], []>} : vector<2x32xf32>, vector<32x2048xf32>, vector<2x2048xf32> -> vector<2x2048xf32>
    %c0_20 = arith.constant 0 : index
    %c0_21 = arith.constant 0 : index
    %30 = vector.load %arg9[%c0_20, %c0_21] : memref<2x1xf32, #tpu.memory_space<vmem>>, vector<2x1xf32>
    %31 = vector.broadcast %30 : vector<2x1xf32> to vector<2x2048xf32>
    %32 = arith.addf %29, %31 : vector<2x2048xf32>
    %33 = vector.extract_strided_slice %32 {offsets = [0, 0], sizes = [1, 2048], strides = [1, 1]} : vector<2x2048xf32> to vector<1x2048xf32>
    %34 = vector.extract_strided_slice %32 {offsets = [1, 0], sizes = [1, 2048], strides = [1, 1]} : vector<2x2048xf32> to vector<1x2048xf32>
    %35 = arith.mulf %33, %18 : vector<1x2048xf32>
    %36 = arith.addf %35, %34 : vector<1x2048xf32>
    %37 = math.absf %36 : vector<1x2048xf32>
    %cst_22 = arith.constant 0.000000e+00 : f32
    %38 = vector.broadcast %cst_22 : f32 to vector<1x2048xf32>
    %39 = arith.subf %38, %37 : vector<1x2048xf32>
    %40 = math.exp %39 : vector<1x2048xf32>
    %cst_23 = arith.constant 1.000000e+00 : f32
    %41 = vector.broadcast %cst_23 : f32 to vector<1x2048xf32>
    %42 = arith.addf %41, %40 : vector<1x2048xf32>
    %43 = tpu.reciprocal %42 {approx = true} : vector<1x2048xf32> -> vector<1x2048xf32>
    %cst_24 = arith.constant 0.000000e+00 : f32
    %44 = vector.broadcast %cst_24 : f32 to vector<1x2048xf32>
    %45 = arith.cmpf oge, %36, %44 : vector<1x2048xf32>
    %cst_25 = arith.constant 1.000000e+00 : f32
    %46 = vector.broadcast %cst_25 : f32 to vector<1x2048xf32>
    %47 = arith.subf %46, %43 : vector<1x2048xf32>
    %48 = arith.select %45, %43, %47 : vector<1x2048xi1>, vector<1x2048xf32>
    %49 = math.absf %33 : vector<1x2048xf32>
    %50 = arith.mulf %49, %43 : vector<1x2048xf32>
    %51 = arith.mulf %50, %43 : vector<1x2048xf32>
    %52 = math.log %51 : vector<1x2048xf32>
    %53 = arith.subf %52, %37 : vector<1x2048xf32>
    %cst_26 = arith.constant 0.000000e+00 : f32
    %54 = vector.broadcast %cst_26 : f32 to vector<1x2048xf32>
    %55 = arith.cmpf olt, %33, %54 : vector<1x2048xf32>
    %cst_27 = arith.constant 1.000000e+00 : f32
    %56 = vector.broadcast %cst_27 : f32 to vector<1x2048xf32>
    %57 = arith.subf %56, %48 : vector<1x2048xf32>
    %58 = arith.select %55, %57, %48 : vector<1x2048xi1>, vector<1x2048xf32>
    %cst_28 = arith.constant 0.000000e+00 : f32
    %59 = vector.broadcast %cst_28 : f32 to vector<1x2048xf32>
    %60 = arith.cmpf oge, %58, %59 : vector<1x2048xf32>
    %cst_29 = arith.constant 1.000000e+00 : f32
    %61 = vector.broadcast %cst_29 : f32 to vector<1x2048xf32>
    %62 = arith.cmpf ole, %58, %61 : vector<1x2048xf32>
    %63 = arith.andi %60, %62 : vector<1x2048xi1>
    %cst_30 = arith.constant 0xFF800000 : f32
    %64 = vector.broadcast %cst_30 : f32 to vector<1x2048xf32>
    %65 = arith.select %63, %53, %64 : vector<1x2048xi1>, vector<1x2048xf32>
    %c0_31 = arith.constant 0 : index
    %c0_32 = arith.constant 0 : index
    %66 = vector.load %arg10[%c0_31, %c0_32] : memref<1x2048xf32, #tpu.memory_space<vmem>>, vector<1x2048xf32>
    tpu.vector_store %arg10[%c0_31, %c0_32], %65 {strides = array<i32>} : memref<1x2048xf32, #tpu.memory_space<vmem>>, vector<1x2048xf32>,
    return
  }
  func.func @transform_0(%arg0: i32) -> (i32, i32) {
    %c0_i32 = arith.constant 0 : i32
    %c0_i32_0 = arith.constant 0 : i32
    return %c0_i32, %arg0 : i32, i32
  }
  func.func @transform_1(%arg0: i32) -> (i32, i32) {
    %c0_i32 = arith.constant 0 : i32
    %c0_i32_0 = arith.constant 0 : i32
    %c0_i32_1 = arith.constant 0 : i32
    return %c0_i32, %c0_i32_0 : i32, i32
  }
  func.func @transform_2(%arg0: i32) -> (i32, i32) {
    %c0_i32 = arith.constant 0 : i32
    %c0_i32_0 = arith.constant 0 : i32
    %c0_i32_1 = arith.constant 0 : i32
    return %c0_i32, %c0_i32_0 : i32, i32
  }
  func.func @transform_3(%arg0: i32) -> (i32, i32) {
    %c0_i32 = arith.constant 0 : i32
    %c0_i32_0 = arith.constant 0 : i32
    %c0_i32_1 = arith.constant 0 : i32
    return %c0_i32, %c0_i32_0 : i32, i32
  }
  func.func @transform_4(%arg0: i32) -> (i32, i32) {
    %c0_i32 = arith.constant 0 : i32
    %c0_i32_0 = arith.constant 0 : i32
    %c0_i32_1 = arith.constant 0 : i32
    return %c0_i32, %c0_i32_0 : i32, i32
  }
  func.func @transform_5(%arg0: i32) -> (i32, i32) {
    %c0_i32 = arith.constant 0 : i32
    %c0_i32_0 = arith.constant 0 : i32
    %c0_i32_1 = arith.constant 0 : i32
    return %c0_i32, %c0_i32_0 : i32, i32
  }
  func.func @transform_6(%arg0: i32) -> (i32, i32) {
    %c0_i32 = arith.constant 0 : i32
    %c0_i32_0 = arith.constant 0 : i32
    %c0_i32_1 = arith.constant 0 : i32
    return %c0_i32, %c0_i32_0 : i32, i32
  }
  func.func @transform_7(%arg0: i32) -> (i32, i32) {
    %c0_i32 = arith.constant 0 : i32
    %c0_i32_0 = arith.constant 0 : i32
    %c0_i32_1 = arith.constant 0 : i32
    return %c0_i32, %c0_i32_0 : i32, i32
  }
  func.func @transform_8(%arg0: i32) -> (i32, i32) {
    %c0_i32 = arith.constant 0 : i32
    %c0_i32_0 = arith.constant 0 : i32
    %c0_i32_1 = arith.constant 0 : i32
    return %c0_i32, %c0_i32_0 : i32, i32
  }
  func.func @transform_9(%arg0: i32) -> (i32, i32) {
    %c0_i32 = arith.constant 0 : i32
    %c0_i32_0 = arith.constant 0 : i32
    return %c0_i32, %arg0 : i32, i32
  }
}

</mosaic_0001>

<llo_original>
// kernel: tpu_custom_call.1
$region0: #{tpu_custom_call.1}
  #allocation0 [shape = 'u32[]', space=smem, size = 0x4, offset = 0x4, fixed_abs, tag = 'smem constant byte address 0x4 - core index']
  #allocation1 [shape = 'u32[144,128]{1,0:T(1,128)}', space=vmem, size = 0x12000, scoped, tag = 'internal scratch']
  #allocation2 [shape = 'f32[1,1]{1,0:T(1,128)S(1)}', space=vmem, size = 0x200, scoped, tag = 'scoped memory for tpu_custom_call.1']
  %s0 = inlined_call_operand.hbm [shape: f32[17,2048], index: 0, kind: input, shape index: {}]
  %s1 = inlined_call_operand.vmem [shape: f32[32,17], index: 1, kind: input, shape index: {}]
  %s2 = inlined_call_operand.vmem [shape: f32[32,1], index: 2, kind: input, shape index: {}]
  %s3 = inlined_call_operand.vmem [shape: f32[1,32], index: 3, kind: input, shape index: {}]
  %s4 = inlined_call_operand.<no memory space> [shape: f32[1,1], index: 4, kind: input, shape index: {}]
  %s5 = inlined_call_operand.vmem [shape: f32[32,1], index: 5, kind: input, shape index: {}]
  %s6 = inlined_call_operand.vmem [shape: f32[32,1], index: 6, kind: input, shape index: {}]
  %s7 = inlined_call_operand.vmem [shape: f32[2,32], index: 7, kind: input, shape index: {}]
  %s8 = inlined_call_operand.vmem [shape: f32[2,1], index: 8, kind: input, shape index: {}]
  %s9 = inlined_call_operand.hbm [shape: f32[1,2048], index: 9, kind: output, shape index: {}]
  %s10 = sld [smem:[#allocation0]]
  $region50: #{tpu_custom_call.1} parent=0
    _
  %s12 = ssub.s32 1, %s10
  %s13 = scalar_select 0, %s12, %s10
  %v14 = vstv %s4
  %15 = vst [vmem:[#allocation2] sm:$0x1] %v14
  $region1: #{tpu_custom_call.1} parent=0
    #allocation3 [shape = 'u8[196608]{0}', space=vmem, size = 0x30000, scoped, tag = 'input window, operand 0, single buffered']
    #allocation4 [shape = 's32[1]{0}', space=sflag, size = 0x4, scoped, tag = 'scoped memory for tpu_custom_call.1']
    #allocation5 [shape = 's32[1]{0}', space=sflag, size = 0x4, scoped, tag = 'scoped memory for tpu_custom_call.1']
    #allocation6 [shape = 'u8[8192]{0}', space=vmem, size = 0x2000, scoped, tag = 'output window, operand 0, single buffered']
    %16 = vsyncpa [#allocation4], 0
    %17 = vsyncpa [#allocation5], 0
    // Predicated region
    $region2: #{tpu_custom_call.1} parent=1 // pred_check
      _
    $region3: #{tpu_custom_call.1} parent=1 // pred_check_branch
      %19 = sbr.rel (0) target = $region5
    $region4: #{tpu_custom_call.1} parent=1 // pred_region
      %s21 = ssub.s32 6144, 6144
      %22 = vsyncadd [#allocation4], %s21
      %s23 = sshll.u32 [#allocation3], 4
      %s24 = int_to_ptr.vmem [resolvable:$true] %s23
      %29 = dma.hbm_to_vmem [thread:$0]  %s0, 6144, %s24, [#allocation4], 2048, 2048, 128
    $region5: #{tpu_custom_call.1} parent=1 // pred_fallthru
      _
    // Predicated region
    $region6: #{tpu_custom_call.1} parent=1 // pred_check
      _
    $region7: #{tpu_custom_call.1} parent=1 // pred_check_branch
      %31 = sbr.rel (0) target = $region9
    $region8: #{tpu_custom_call.1} parent=1 // pred_region
      _
    $region9: #{tpu_custom_call.1} parent=1 // pred_fallthru
      _
    // Predicated region
    $region10: #{tpu_custom_call.1} parent=1 // pred_check
      _
    $region11: #{tpu_custom_call.1} parent=1 // pred_check_branch
      %33 = sbr.rel (0) target = $region13
    $region12: #{tpu_custom_call.1} parent=1 // pred_region
      _
    $region13: #{tpu_custom_call.1} parent=1 // pred_fallthru
      _
    // Predicated region
    $region14: #{tpu_custom_call.1} parent=1 // pred_check
      _
    $region15: #{tpu_custom_call.1} parent=1 // pred_check_branch
      %35 = sbr.rel (0) target = $region17
    $region16: #{tpu_custom_call.1} parent=1 // pred_region
      _
    $region17: #{tpu_custom_call.1} parent=1 // pred_fallthru
      _
    // Predicated region
    $region18: #{tpu_custom_call.1} parent=1 // pred_check
      _
    $region19: #{tpu_custom_call.1} parent=1 // pred_check_branch
      %37 = sbr.rel (0) target = $region21
    $region20: #{tpu_custom_call.1} parent=1 // pred_region
      _
    $region21: #{tpu_custom_call.1} parent=1 // pred_fallthru
      _
    // Predicated region
    $region22: #{tpu_custom_call.1} parent=1 // pred_check
      _
    $region23: #{tpu_custom_call.1} parent=1 // pred_check_branch
      %39 = sbr.rel (0) target = $region25
    $region24: #{tpu_custom_call.1} parent=1 // pred_region
      _
    $region25: #{tpu_custom_call.1} parent=1 // pred_fallthru
      _
    // Predicated region
    $region26: #{tpu_custom_call.1} parent=1 // pred_check
      _
    $region27: #{tpu_custom_call.1} parent=1 // pred_check_branch
      %41 = sbr.rel (0) target = $region29
    $region28: #{tpu_custom_call.1} parent=1 // pred_region
      _
    $region29: #{tpu_custom_call.1} parent=1 // pred_fallthru
      _
    // Predicated region
    $region30: #{tpu_custom_call.1} parent=1 // pred_check
      _
    $region31: #{tpu_custom_call.1} parent=1 // pred_check_branch
      %43 = sbr.rel (0) target = $region33
    $region32: #{tpu_custom_call.1} parent=1 // pred_region
      _
    $region33: #{tpu_custom_call.1} parent=1 // pred_fallthru
      _
    // Predicated region
    $region34: #{tpu_custom_call.1} parent=1 // pred_check
      _
    $region35: #{tpu_custom_call.1} parent=1 // pred_check_branch
      %45 = sbr.rel (0) target = $region37
    $region36: #{tpu_custom_call.1} parent=1 // pred_region
      _
    $region37: #{tpu_custom_call.1} parent=1 // pred_fallthru
      _
    // Predicated region
    $region38: #{tpu_custom_call.1} parent=1 // pred_check
      _
    $region39: #{tpu_custom_call.1} parent=1 // pred_check_branch
      %47 = sbr.rel (0) target = $region41
    $region40: #{tpu_custom_call.1} parent=1 // pred_region
      %48 = dma.done [#allocation4], 6144
    $region41: #{tpu_custom_call.1} parent=1 // pred_fallthru
      _
    %v49 = vld [vmem:[#allocation3] sm:$0xff]
    %v50 = vld [vmem:[#allocation3 + $0x8] sm:$0xff]
    %v51 = vld [vmem:[#allocation3 + $0x10] sm:$0xff]
    %v52 = vld [vmem:[#allocation3 + $0x18] sm:$0xff]
    %v53 = vld [vmem:[#allocation3 + $0x20] sm:$0xff]
    %v54 = vld [vmem:[#allocation3 + $0x28] sm:$0xff]
    %v55 = vld [vmem:[#allocation3 + $0x30] sm:$0xff]
    %v56 = vld [vmem:[#allocation3 + $0x38] sm:$0xff]
    %v57 = vld [vmem:[#allocation3 + $0x40] sm:$0xff]
    %v58 = vld [vmem:[#allocation3 + $0x48] sm:$0xff]
    %v59 = vld [vmem:[#allocation3 + $0x50] sm:$0xff]
    %v60 = vld [vmem:[#allocation3 + $0x58] sm:$0xff]
    %v61 = vld [vmem:[#allocation3 + $0x60] sm:$0xff]
    %v62 = vld [vmem:[#allocation3 + $0x68] sm:$0xff]
    %v63 = vld [vmem:[#allocation3 + $0x70] sm:$0xff]
    %v64 = vld [vmem:[#allocation3 + $0x78] sm:$0xff]
    %v65 = vld [vmem:[#allocation3 + $0x80] sm:$0xff]
    %v66 = vld [vmem:[#allocation3 + $0x88] sm:$0xff]
    %v67 = vld [vmem:[#allocation3 + $0x90] sm:$0xff]
    %v68 = vld [vmem:[#allocation3 + $0x98] sm:$0xff]
    %v69 = vld [vmem:[#allocation3 + $0xa0] sm:$0xff]
    %v70 = vld [vmem:[#allocation3 + $0xa8] sm:$0xff]
    %v71 = vld [vmem:[#allocation3 + $0xb0] sm:$0xff]
    %v72 = vld [vmem:[#allocation3 + $0xb8] sm:$0xff]
    %v73 = vld [vmem:[#allocation3 + $0xc0] sm:$0xff]
    %v74 = vld [vmem:[#allocation3 + $0xc8] sm:$0xff]
    %v75 = vld [vmem:[#allocation3 + $0xd0] sm:$0xff]
    %v76 = vld [vmem:[#allocation3 + $0xd8] sm:$0xff]
    %v77 = vld [vmem:[#allocation3 + $0xe0] sm:$0xff]
    %v78 = vld [vmem:[#allocation3 + $0xe8] sm:$0xff]
    %v79 = vld [vmem:[#allocation3 + $0xf0] sm:$0xff]
    %v80 = vld [vmem:[#allocation3 + $0xf8] sm:$0xff]
    %v81 = vld [vmem:[#allocation3 + $0x100] sm:$0x1]
    %v82 = vld [vmem:[#allocation3 + $0x108] sm:$0x1]
    %v83 = vld [vmem:[#allocation3 + $0x110] sm:$0x1]
    %v84 = vld [vmem:[#allocation3 + $0x118] sm:$0x1]
    %v85 = vld [vmem:[#allocation3 + $0x120] sm:$0x1]
    %v86 = vld [vmem:[#allocation3 + $0x128] sm:$0x1]
    %v87 = vld [vmem:[#allocation3 + $0x130] sm:$0x1]
    %v88 = vld [vmem:[#allocation3 + $0x138] sm:$0x1]
    %v89 = vld [vmem:[#allocation3 + $0x140] sm:$0x1]
    %v90 = vld [vmem:[#allocation3 + $0x148] sm:$0x1]
    %v91 = vld [vmem:[#allocation3 + $0x150] sm:$0x1]
    %v92 = vld [vmem:[#allocation3 + $0x158] sm:$0x1]
    %v93 = vld [vmem:[#allocation3 + $0x160] sm:$0x1]
    %v94 = vld [vmem:[#allocation3 + $0x168] sm:$0x1]
    %v95 = vld [vmem:[#allocation3 + $0x170] sm:$0x1]
    %v96 = vld [vmem:[#allocation3 + $0x178] sm:$0x1]
    %v97 = vld [vmem:[%s1] sm:$0xff]
    %v98 = vld [vmem:[%s1 + $0x8] sm:$0xff]
    %v99 = vld [vmem:[%s1 + $0x10] sm:$0xff]
    %v100 = vld [vmem:[%s1 + $0x18] sm:$0xff]
    %v101 = vld [vmem:[%s2] sm:$0xff]
    %v102 = vld [vmem:[%s2 + $0x8] sm:$0xff]
    %v103 = vld [vmem:[%s2 + $0x10] sm:$0xff]
    %v104 = vld [vmem:[%s2 + $0x18] sm:$0xff]
    %106 = vset.pattern.permute.xlu0 0
    %107 = vperm.xlu0 %106, %v101
    %v108 = vpop.permute.xlu0 %107
    %111 = vset.pattern.permute.xlu0 0
    %112 = vperm.xlu0 %111, %v102
    %v113 = vpop.permute.xlu0 %112
    %116 = vset.pattern.permute.xlu0 0
    %117 = vperm.xlu0 %116, %v103
    %v118 = vpop.permute.xlu0 %117
    %121 = vset.pattern.permute.xlu0 0
    %122 = vperm.xlu0 %121, %v104
    %v123 = vpop.permute.xlu0 %122
    %vm125 = vcmask 138240
    %v127 = vsel %vm125, %v97, 0
    %v130 = vsel %vm125, %v98, 0
    %v133 = vsel %vm125, %v99, 0
    %v136 = vsel %vm125, %v100, 0
    %vm138 = vcmask 1040384
    %v140 = vsel %vm138, %v81, 0
    %v143 = vsel %vm138, %v82, 0
    %v146 = vsel %vm138, %v83, 0
    %v149 = vsel %vm138, %v84, 0
    %v152 = vsel %vm138, %v85, 0
    %v155 = vsel %vm138, %v86, 0
    %v158 = vsel %vm138, %v87, 0
    %v161 = vsel %vm138, %v88, 0
    %v164 = vsel %vm138, %v89, 0
    %v167 = vsel %vm138, %v90, 0
    %v170 = vsel %vm138, %v91, 0
    %v173 = vsel %vm138, %v92, 0
    %v176 = vsel %vm138, %v93, 0
    %v179 = vsel %vm138, %v94, 0
    %v182 = vsel %vm138, %v95, 0
    %v185 = vsel %vm138, %v96, 0
    %187 = vmatprep.subr.mxu0 %v50
    %188 = vmatpush1.msra.mxu0 %v49
    %189 = vmatprep.subr.mxu0 %v66
    %190 = vmatpush1.msra.mxu0 %v65
    %191 = vmatprep.subr.mxu0 %v143
    %192 = vmatpush1.msra.mxu0 %v140
    %193 = vmatprep.subr.mxu0 0.0
    %194 = vmatpush1.msra.mxu0 0.0
    %195 = vmatprep.subr.mxu0 0.0
    %196 = vmatpush1.msra.mxu0 0.0
    %197 = vmatprep.subr.mxu0 0.0
    %198 = vmatpush1.msra.mxu0 0.0
    %199 = vmatprep.subr.mxu0 0.0
    %200 = vmatpush1.msra.mxu0 0.0
    %201 = vmatprep.subr.mxu0 0.0
    %202 = vmatpush1.msra.mxu0 0.0
    %203 = vmatprep.subr.mxu0 0.0
    %204 = vmatpush1.msra.mxu0 0.0
    %205 = vmatprep.subr.mxu0 0.0
    %206 = vmatpush1.msra.mxu0 0.0
    %207 = vmatprep.subr.mxu0 0.0
    %208 = vmatpush1.msra.mxu0 0.0
    %209 = vmatprep.subr.mxu0 0.0
    %210 = vmatpush1.msra.mxu0 0.0
    %211 = vmatprep.subr.mxu0 0.0
    %212 = vmatpush1.msra.mxu0 0.0
    %213 = vmatprep.subr.mxu0 0.0
    %214 = vmatpush1.msra.mxu0 0.0
    %215 = vmatprep.subr.mxu0 0.0
    %216 = vmatpush1.msra.mxu0 0.0
    %217 = vmatprep.subr.mxu0 0.0
    %218 = vmatpush1.msra.mxu0 0.0
    %219 = vmatprep.subr.mxu0 0.0
    %220 = vmatpush1.msra.mxu0 0.0
    %221 = vmatprep.subr.mxu0 0.0
    %222 = vmatpush1.msra.mxu0 0.0
    %223 = vmatprep.subr.mxu0 0.0
    %224 = vmatpush1.msra.mxu0 0.0
    %225 = vmatprep.subr.mxu0 0.0
    %226 = vmatpush1.msra.mxu0 0.0
    %227 = vmatprep.subr.mxu0 0.0
    %228 = vmatpush1.msra.mxu0 0.0
    %229 = vmatprep.subr.mxu0 0.0
    %230 = vmatpush1.msra.mxu0 0.0
    %231 = vmatprep.subr.mxu0 0.0
    %232 = vmatpush1.msra.mxu0 0.0
    %233 = vmatprep.subr.mxu0 0.0
    %234 = vmatpush1.msra.mxu0 0.0
    %235 = vmatprep.subr.mxu0 0.0
    %236 = vmatpush1.msra.mxu0 0.0
    %237 = vmatprep.subr.mxu0 0.0
    %238 = vmatpush1.msra.mxu0 0.0
    %239 = vmatprep.subr.mxu0 0.0
    %240 = vmatpush1.msra.mxu0 0.0
    %241 = vmatprep.subr.mxu0 0.0
    %242 = vmatpush1.msra.mxu0 0.0
    %243 = vmatprep.subr.mxu0 0.0
    %244 = vmatpush1.msra.mxu0 0.0
    %245 = vmatprep.subr.mxu0 0.0
    %246 = vmatpush1.msra.mxu0 0.0
    %247 = vmatprep.subr.mxu0 0.0
    %248 = vmatpush1.msra.mxu0 0.0
    %249 = vmatprep.subr.mxu0 0.0
    %250 = vmatpush1.msra.mxu0 0.0
    %251 = vmatprep.mubr.f32.mxu0 0.0
    %252 = vmatmul.mubr.f32.gmra.mrb[0].mxu0 %v127
    %v253 = vpop.f32.mrb[0].mxu0
    %v254 = vadd.f32 %v108, %v253
    %v255 = vpop.f32.mrb[0].mxu0
    %v256 = vadd.f32 %v108, %v255
    %257 = vmatprep.mubr.f32.mxu0 0.0
    %258 = vmatmul.mubr.f32.gmra.mrb[0].mxu0 %v130
    %v259 = vpop.f32.mrb[0].mxu0
    %v260 = vadd.f32 %v113, %v259
    %v261 = vpop.f32.mrb[0].mxu0
    %v262 = vadd.f32 %v113, %v261
    %263 = vmatprep.mubr.f32.mxu0 0.0
    %264 = vmatmul.mubr.f32.gmra.mrb[0].mxu0 %v133
    %v265 = vpop.f32.mrb[0].mxu0
    %v266 = vadd.f32 %v118, %v265
    %v267 = vpop.f32.mrb[0].mxu0
    %v268 = vadd.f32 %v118, %v267
    %269 = vmatprep.mubr.f32.mxu0 0.0
    %270 = vmatmul.mubr.f32.gmra.mrb[0].mxu0 %v136
    %v271 = vpop.f32.mrb[0].mxu0
    %v272 = vadd.f32 %v123, %v271
    %v273 = vpop.f32.mrb[0].mxu0
    %v274 = vadd.f32 %v123, %v273
    %275 = vdwg.mxu0
    %276 = vmatprep.subr.mxu0 %v52
    %277 = vmatpush1.msra.mxu0 %v51
    %278 = vmatprep.subr.mxu0 %v68
    %279 = vmatpush1.msra.mxu0 %v67
    %280 = vmatprep.subr.mxu0 %v149
    %281 = vmatpush1.msra.mxu0 %v146
    %282 = vmatprep.subr.mxu0 0.0
    %283 = vmatpush1.msra.mxu0 0.0
    %284 = vmatprep.subr.mxu0 0.0
    %285 = vmatpush1.msra.mxu0 0.0
    %286 = vmatprep.subr.mxu0 0.0
    %287 = vmatpush1.msra.mxu0 0.0
    %288 = vmatprep.subr.mxu0 0.0
    %289 = vmatpush1.msra.mxu0 0.0
    %290 = vmatprep.subr.mxu0 0.0
    %291 = vmatpush1.msra.mxu0 0.0
    %292 = vmatprep.subr.mxu0 0.0
    %293 = vmatpush1.msra.mxu0 0.0
    %294 = vmatprep.subr.mxu0 0.0
    %295 = vmatpush1.msra.mxu0 0.0
    %296 = vmatprep.subr.mxu0 0.0
    %297 = vmatpush1.msra.mxu0 0.0
    %298 = vmatprep.subr.mxu0 0.0
    %299 = vmatpush1.msra.mxu0 0.0
    %300 = vmatprep.subr.mxu0 0.0
    %301 = vmatpush1.msra.mxu0 0.0
    %302 = vmatprep.subr.mxu0 0.0
    %303 = vmatpush1.msra.mxu0 0.0
    %304 = vmatprep.subr.mxu0 0.0
    %305 = vmatpush1.msra.mxu0 0.0
    %306 = vmatprep.subr.mxu0 0.0
    %307 = vmatpush1.msra.mxu0 0.0
    %308 = vmatprep.subr.mxu0 0.0
    %309 = vmatpush1.msra.mxu0 0.0
    %310 = vmatprep.subr.mxu0 0.0
    %311 = vmatpush1.msra.mxu0 0.0
    %312 = vmatprep.subr.mxu0 0.0
    %313 = vmatpush1.msra.mxu0 0.0
    %314 = vmatprep.subr.mxu0 0.0
    %315 = vmatpush1.msra.mxu0 0.0
    %316 = vmatprep.subr.mxu0 0.0
    %317 = vmatpush1.msra.mxu0 0.0
    %318 = vmatprep.subr.mxu0 0.0
    %319 = vmatpush1.msra.mxu0 0.0
    %320 = vmatprep.subr.mxu0 0.0
    %321 = vmatpush1.msra.mxu0 0.0
    %322 = vmatprep.subr.mxu0 0.0
    %323 = vmatpush1.msra.mxu0 0.0
    %324 = vmatprep.subr.mxu0 0.0
    %325 = vmatpush1.msra.mxu0 0.0
    %326 = vmatprep.subr.mxu0 0.0
    %327 = vmatpush1.msra.mxu0 0.0
    %328 = vmatprep.subr.mxu0 0.0
    %329 = vmatpush1.msra.mxu0 0.0
    %330 = vmatprep.subr.mxu0 0.0
    %331 = vmatpush1.msra.mxu0 0.0
    %332 = vmatprep.subr.mxu0 0.0
    %333 = vmatpush1.msra.mxu0 0.0
    %334 = vmatprep.subr.mxu0 0.0
    %335 = vmatpush1.msra.mxu0 0.0
    %336 = vmatprep.subr.mxu0 0.0
    %337 = vmatpush1.msra.mxu0 0.0
    %338 = vmatprep.subr.mxu0 0.0
    %339 = vmatpush1.msra.mxu0 0.0
    %340 = vmatprep.mubr.f32.mxu0 0.0
    %341 = vmatmul.mubr.f32.gmra.mrb[0].mxu0 %v127
    %v342 = vpop.f32.mrb[0].mxu0
    %v343 = vadd.f32 %v108, %v342
    %v344 = vpop.f32.mrb[0].mxu0
    %v345 = vadd.f32 %v108, %v344
    %346 = vmatprep.mubr.f32.mxu0 0.0
    %347 = vmatmul.mubr.f32.gmra.mrb[0].mxu0 %v130
    %v348 = vpop.f32.mrb[0].mxu0
    %v349 = vadd.f32 %v113, %v348
    %v350 = vpop.f32.mrb[0].mxu0
    %v351 = vadd.f32 %v113, %v350
    %352 = vmatprep.mubr.f32.mxu0 0.0
    %353 = vmatmul.mubr.f32.gmra.mrb[0].mxu0 %v133
    %v354 = vpop.f32.mrb[0].mxu0
    %v355 = vadd.f32 %v118, %v354
    %v356 = vpop.f32.mrb[0].mxu0
    %v357 = vadd.f32 %v118, %v356
    %358 = vmatprep.mubr.f32.mxu0 0.0
    %359 = vmatmul.mubr.f32.gmra.mrb[0].mxu0 %v136
    %v360 = vpop.f32.mrb[0].mxu0
    %v361 = vadd.f32 %v123, %v360
    %v362 = vpop.f32.mrb[0].mxu0
    %v363 = vadd.f32 %v123, %v362
    %364 = vdwg.mxu0
    %365 = vmatprep.subr.mxu0 %v54
    %366 = vmatpush1.msra.mxu0 %v53
    %367 = vmatprep.subr.mxu0 %v70
    %368 = vmatpush1.msra.mxu0 %v69
    %369 = vmatprep.subr.mxu0 %v155
    %370 = vmatpush1.msra.mxu0 %v152
    %371 = vmatprep.subr.mxu0 0.0
    %372 = vmatpush1.msra.mxu0 0.0
    %373 = vmatprep.subr.mxu0 0.0
    %374 = vmatpush1.msra.mxu0 0.0
    %375 = vmatprep.subr.mxu0 0.0
    %376 = vmatpush1.msra.mxu0 0.0
    %377 = vmatprep.subr.mxu0 0.0
    %378 = vmatpush1.msra.mxu0 0.0
    %379 = vmatprep.subr.mxu0 0.0
    %380 = vmatpush1.msra.mxu0 0.0
    %381 = vmatprep.subr.mxu0 0.0
    %382 = vmatpush1.msra.mxu0 0.0
    %383 = vmatprep.subr.mxu0 0.0
    %384 = vmatpush1.msra.mxu0 0.0
    %385 = vmatprep.subr.mxu0 0.0
    %386 = vmatpush1.msra.mxu0 0.0
    %387 = vmatprep.subr.mxu0 0.0
    %388 = vmatpush1.msra.mxu0 0.0
    %389 = vmatprep.subr.mxu0 0.0
    %390 = vmatpush1.msra.mxu0 0.0
    %391 = vmatprep.subr.mxu0 0.0
    %392 = vmatpush1.msra.mxu0 0.0
    %393 = vmatprep.subr.mxu0 0.0
    %394 = vmatpush1.msra.mxu0 0.0
    %395 = vmatprep.subr.mxu0 0.0
    %396 = vmatpush1.msra.mxu0 0.0
    %397 = vmatprep.subr.mxu0 0.0
    %398 = vmatpush1.msra.mxu0 0.0
    %399 = vmatprep.subr.mxu0 0.0
    %400 = vmatpush1.msra.mxu0 0.0
    %401 = vmatprep.subr.mxu0 0.0
    %402 = vmatpush1.msra.mxu0 0.0
    %403 = vmatprep.subr.mxu0 0.0
    %404 = vmatpush1.msra.mxu0 0.0
    %405 = vmatprep.subr.mxu0 0.0
    %406 = vmatpush1.msra.mxu0 0.0
    %407 = vmatprep.subr.mxu0 0.0
    %408 = vmatpush1.msra.mxu0 0.0
    %409 = vmatprep.subr.mxu0 0.0
    %410 = vmatpush1.msra.mxu0 0.0
    %411 = vmatprep.subr.mxu0 0.0
    %412 = vmatpush1.msra.mxu0 0.0
    %413 = vmatprep.subr.mxu0 0.0
    %414 = vmatpush1.msra.mxu0 0.0
    %415 = vmatprep.subr.mxu0 0.0
    %416 = vmatpush1.msra.mxu0 0.0
    %417 = vmatprep.subr.mxu0 0.0
    %418 = vmatpush1.msra.mxu0 0.0
    %419 = vmatprep.subr.mxu0 0.0
    %420 = vmatpush1.msra.mxu0 0.0
    %421 = vmatprep.subr.mxu0 0.0
    %422 = vmatpush1.msra.mxu0 0.0
    %423 = vmatprep.subr.mxu0 0.0
    %424 = vmatpush1.msra.mxu0 0.0
    %425 = vmatprep.subr.mxu0 0.0
    %426 = vmatpush1.msra.mxu0 0.0
    %427 = vmatprep.subr.mxu0 0.0
    %428 = vmatpush1.msra.mxu0 0.0
    %429 = vmatprep.mubr.f32.mxu0 0.0
    %430 = vmatmul.mubr.f32.gmra.mrb[0].mxu0 %v127
    %v431 = vpop.f32.mrb[0].mxu0
    %v432 = vadd.f32 %v108, %v431
    %v433 = vpop.f32.mrb[0].mxu0
    %v434 = vadd.f32 %v108, %v433
    %435 = vmatprep.mubr.f32.mxu0 0.0
    %436 = vmatmul.mubr.f32.gmra.mrb[0].mxu0 %v130
    %v437 = vpop.f32.mrb[0].mxu0
    %v438 = vadd.f32 %v113, %v437
    %v439 = vpop.f32.mrb[0].mxu0
    %v440 = vadd.f32 %v113, %v439
    %441 = vmatprep.mubr.f32.mxu0 0.0
    %442 = vmatmul.mubr.f32.gmra.mrb[0].mxu0 %v133
    %v443 = vpop.f32.mrb[0].mxu0
    %v444 = vadd.f32 %v118, %v443
    %v445 = vpop.f32.mrb[0].mxu0
    %v446 = vadd.f32 %v118, %v445
    %447 = vmatprep.mubr.f32.mxu0 0.0
    %448 = vmatmul.mubr.f32.gmra.mrb[0].mxu0 %v136
    %v449 = vpop.f32.mrb[0].mxu0
    %v450 = vadd.f32 %v123, %v449
    %v451 = vpop.f32.mrb[0].mxu0
    %v452 = vadd.f32 %v123, %v451
    %453 = vdwg.mxu0
    %454 = vmatprep.subr.mxu0 %v56
    %455 = vmatpush1.msra.mxu0 %v55
    %456 = vmatprep.subr.mxu0 %v72
    %457 = vmatpush1.msra.mxu0 %v71
    %458 = vmatprep.subr.mxu0 %v161
    %459 = vmatpush1.msra.mxu0 %v158
    %460 = vmatprep.subr.mxu0 0.0
    %461 = vmatpush1.msra.mxu0 0.0
    %462 = vmatprep.subr.mxu0 0.0
    %463 = vmatpush1.msra.mxu0 0.0
    %464 = vmatprep.subr.mxu0 0.0
    %465 = vmatpush1.msra.mxu0 0.0
    %466 = vmatprep.subr.mxu0 0.0
    %467 = vmatpush1.msra.mxu0 0.0
    %468 = vmatprep.subr.mxu0 0.0
    %469 = vmatpush1.msra.mxu0 0.0
    %470 = vmatprep.subr.mxu0 0.0
    %471 = vmatpush1.msra.mxu0 0.0
    %472 = vmatprep.subr.mxu0 0.0
    %473 = vmatpush1.msra.mxu0 0.0
    %474 = vmatprep.subr.mxu0 0.0
    %475 = vmatpush1.msra.mxu0 0.0
    %476 = vmatprep.subr.mxu0 0.0
    %477 = vmatpush1.msra.mxu0 0.0
    %478 = vmatprep.subr.mxu0 0.0
    %479 = vmatpush1.msra.mxu0 0.0
    %480 = vmatprep.subr.mxu0 0.0
    %481 = vmatpush1.msra.mxu0 0.0
    %482 = vmatprep.subr.mxu0 0.0
    %483 = vmatpush1.msra.mxu0 0.0
    %484 = vmatprep.subr.mxu0 0.0
    %485 = vmatpush1.msra.mxu0 0.0
    %486 = vmatprep.subr.mxu0 0.0
    %487 = vmatpush1.msra.mxu0 0.0
    %488 = vmatprep.subr.mxu0 0.0
    %489 = vmatpush1.msra.mxu0 0.0
    %490 = vmatprep.subr.mxu0 0.0
    %491 = vmatpush1.msra.mxu0 0.0
    %492 = vmatprep.subr.mxu0 0.0
    %493 = vmatpush1.msra.mxu0 0.0
    %494 = vmatprep.subr.mxu0 0.0
    %495 = vmatpush1.msra.mxu0 0.0
    %496 = vmatprep.subr.mxu0 0.0
    %497 = vmatpush1.msra.mxu0 0.0
    %498 = vmatprep.subr.mxu0 0.0
    %499 = vmatpush1.msra.mxu0 0.0
    %500 = vmatprep.subr.mxu0 0.0
    %501 = vmatpush1.msra.mxu0 0.0
    %502 = vmatprep.subr.mxu0 0.0
    %503 = vmatpush1.msra.mxu0 0.0
    %504 = vmatprep.subr.mxu0 0.0
    %505 = vmatpush1.msra.mxu0 0.0
    %506 = vmatprep.subr.mxu0 0.0
    %507 = vmatpush1.msra.mxu0 0.0
    %508 = vmatprep.subr.mxu0 0.0
    %509 = vmatpush1.msra.mxu0 0.0
    %510 = vmatprep.subr.mxu0 0.0
    %511 = vmatpush1.msra.mxu0 0.0
    %512 = vmatprep.subr.mxu0 0.0
    %513 = vmatpush1.msra.mxu0 0.0
    %514 = vmatprep.subr.mxu0 0.0
    %515 = vmatpush1.msra.mxu0 0.0
    %516 = vmatprep.subr.mxu0 0.0
    %517 = vmatpush1.msra.mxu0 0.0
    %518 = vmatprep.mubr.f32.mxu0 0.0
    %519 = vmatmul.mubr.f32.gmra.mrb[0].mxu0 %v127
    %v520 = vpop.f32.mrb[0].mxu0
    %v521 = vadd.f32 %v108, %v520
    %v522 = vpop.f32.mrb[0].mxu0
    %v523 = vadd.f32 %v108, %v522
    %524 = vmatprep.mubr.f32.mxu0 0.0
    %525 = vmatmul.mubr.f32.gmra.mrb[0].mxu0 %v130
    %v526 = vpop.f32.mrb[0].mxu0
    %v527 = vadd.f32 %v113, %v526
    %v528 = vpop.f32.mrb[0].mxu0
    %v529 = vadd.f32 %v113, %v528
    %530 = vmatprep.mubr.f32.mxu0 0.0
    %531 = vmatmul.mubr.f32.gmra.mrb[0].mxu0 %v133
    %v532 = vpop.f32.mrb[0].mxu0
    %v533 = vadd.f32 %v118, %v532
    %v534 = vpop.f32.mrb[0].mxu0
    %v535 = vadd.f32 %v118, %v534
    %536 = vmatprep.mubr.f32.mxu0 0.0
    %537 = vmatmul.mubr.f32.gmra.mrb[0].mxu0 %v136
    %v538 = vpop.f32.mrb[0].mxu0
    %v539 = vadd.f32 %v123, %v538
    %v540 = vpop.f32.mrb[0].mxu0
    %v541 = vadd.f32 %v123, %v540
    %542 = vdwg.mxu0
    %543 = vmatprep.subr.mxu0 %v58
    %544 = vmatpush1.msra.mxu0 %v57
    %545 = vmatprep.subr.mxu0 %v74
    %546 = vmatpush1.msra.mxu0 %v73
    %547 = vmatprep.subr.mxu0 %v167
    %548 = vmatpush1.msra.mxu0 %v164
    %549 = vmatprep.subr.mxu0 0.0
    %550 = vmatpush1.msra.mxu0 0.0
    %551 = vmatprep.subr.mxu0 0.0
    %552 = vmatpush1.msra.mxu0 0.0
    %553 = vmatprep.subr.mxu0 0.0
    %554 = vmatpush1.msra.mxu0 0.0
    %555 = vmatprep.subr.mxu0 0.0
    %556 = vmatpush1.msra.mxu0 0.0
    %557 = vmatprep.subr.mxu0 0.0
    %558 = vmatpush1.msra.mxu0 0.0
    %559 = vmatprep.subr.mxu0 0.0
    %560 = vmatpush1.msra.mxu0 0.0
    %561 = vmatprep.subr.mxu0 0.0
    %562 = vmatpush1.msra.mxu0 0.0
    %563 = vmatprep.subr.mxu0 0.0
    %564 = vmatpush1.msra.mxu0 0.0
    %565 = vmatprep.subr.mxu0 0.0
    %566 = vmatpush1.msra.mxu0 0.0
    %567 = vmatprep.subr.mxu0 0.0
    %568 = vmatpush1.msra.mxu0 0.0
    %569 = vmatprep.subr.mxu0 0.0
    %570 = vmatpush1.msra.mxu0 0.0
    %571 = vmatprep.subr.mxu0 0.0
    %572 = vmatpush1.msra.mxu0 0.0
    %573 = vmatprep.subr.mxu0 0.0
    %574 = vmatpush1.msra.mxu0 0.0
    %575 = vmatprep.subr.mxu0 0.0
    %576 = vmatpush1.msra.mxu0 0.0
    %577 = vmatprep.subr.mxu0 0.0
    %578 = vmatpush1.msra.mxu0 0.0
    %579 = vmatprep.subr.mxu0 0.0
    %580 = vmatpush1.msra.mxu0 0.0
    %581 = vmatprep.subr.mxu0 0.0
    %582 = vmatpush1.msra.mxu0 0.0
    %583 = vmatprep.subr.mxu0 0.0
    %584 = vmatpush1.msra.mxu0 0.0
    %585 = vmatprep.subr.mxu0 0.0
    %586 = vmatpush1.msra.mxu0 0.0
    %587 = vmatprep.subr.mxu0 0.0
    %588 = vmatpush1.msra.mxu0 0.0
    %589 = vmatprep.subr.mxu0 0.0
    %590 = vmatpush1.msra.mxu0 0.0
    %591 = vmatprep.subr.mxu0 0.0
    %592 = vmatpush1.msra.mxu0 0.0
    %593 = vmatprep.subr.mxu0 0.0
    %594 = vmatpush1.msra.mxu0 0.0
    %595 = vmatprep.subr.mxu0 0.0
    %596 = vmatpush1.msra.mxu0 0.0
    %597 = vmatprep.subr.mxu0 0.0
    %598 = vmatpush1.msra.mxu0 0.0
    %599 = vmatprep.subr.mxu0 0.0
    %600 = vmatpush1.msra.mxu0 0.0
    %601 = vmatprep.subr.mxu0 0.0
    %602 = vmatpush1.msra.mxu0 0.0
    %603 = vmatprep.subr.mxu0 0.0
    %604 = vmatpush1.msra.mxu0 0.0
    %605 = vmatprep.subr.mxu0 0.0
    %606 = vmatpush1.msra.mxu0 0.0
    %607 = vmatprep.mubr.f32.mxu0 0.0
    %608 = vmatmul.mubr.f32.gmra.mrb[0].mxu0 %v127
    %v609 = vpop.f32.mrb[0].mxu0
    %v610 = vadd.f32 %v108, %v609
    %v611 = vpop.f32.mrb[0].mxu0
    %v612 = vadd.f32 %v108, %v611
    %613 = vmatprep.mubr.f32.mxu0 0.0
    %614 = vmatmul.mubr.f32.gmra.mrb[0].mxu0 %v130
    %v615 = vpop.f32.mrb[0].mxu0
    %v616 = vadd.f32 %v113, %v615
    %v617 = vpop.f32.mrb[0].mxu0
    %v618 = vadd.f32 %v113, %v617
    %619 = vmatprep.mubr.f32.mxu0 0.0
    %620 = vmatmul.mubr.f32.gmra.mrb[0].mxu0 %v133
    %v621 = vpop.f32.mrb[0].mxu0
    %v622 = vadd.f32 %v118, %v621
    %v623 = vpop.f32.mrb[0].mxu0
    %v624 = vadd.f32 %v118, %v623
    %625 = vmatprep.mubr.f32.mxu0 0.0
    %626 = vmatmul.mubr.f32.gmra.mrb[0].mxu0 %v136
    %v627 = vpop.f32.mrb[0].mxu0
    %v628 = vadd.f32 %v123, %v627
    %v629 = vpop.f32.mrb[0].mxu0
    %v630 = vadd.f32 %v123, %v629
    %631 = vdwg.mxu0
    %632 = vmatprep.subr.mxu0 %v60
    %633 = vmatpush1.msra.mxu0 %v59
    %634 = vmatprep.subr.mxu0 %v76
    %635 = vmatpush1.msra.mxu0 %v75
    %636 = vmatprep.subr.mxu0 %v173
    %637 = vmatpush1.msra.mxu0 %v170
    %638 = vmatprep.subr.mxu0 0.0
    %639 = vmatpush1.msra.mxu0 0.0
    %640 = vmatprep.subr.mxu0 0.0
    %641 = vmatpush1.msra.mxu0 0.0
    %642 = vmatprep.subr.mxu0 0.0
    %643 = vmatpush1.msra.mxu0 0.0
    %644 = vmatprep.subr.mxu0 0.0
    %645 = vmatpush1.msra.mxu0 0.0
    %646 = vmatprep.subr.mxu0 0.0
    %647 = vmatpush1.msra.mxu0 0.0
    %648 = vmatprep.subr.mxu0 0.0
    %649 = vmatpush1.msra.mxu0 0.0
    %650 = vmatprep.subr.mxu0 0.0
    %651 = vmatpush1.msra.mxu0 0.0
    %652 = vmatprep.subr.mxu0 0.0
    %653 = vmatpush1.msra.mxu0 0.0
    %654 = vmatprep.subr.mxu0 0.0
    %655 = vmatpush1.msra.mxu0 0.0
    %656 = vmatprep.subr.mxu0 0.0
    %657 = vmatpush1.msra.mxu0 0.0
    %658 = vmatprep.subr.mxu0 0.0
    %659 = vmatpush1.msra.mxu0 0.0
    %660 = vmatprep.subr.mxu0 0.0
    %661 = vmatpush1.msra.mxu0 0.0
    %662 = vmatprep.subr.mxu0 0.0
    %663 = vmatpush1.msra.mxu0 0.0
    %664 = vmatprep.subr.mxu0 0.0
    %665 = vmatpush1.msra.mxu0 0.0
    %666 = vmatprep.subr.mxu0 0.0
    %667 = vmatpush1.msra.mxu0 0.0
    %668 = vmatprep.subr.mxu0 0.0
    %669 = vmatpush1.msra.mxu0 0.0
    %670 = vmatprep.subr.mxu0 0.0
    %671 = vmatpush1.msra.mxu0 0.0
    %672 = vmatprep.subr.mxu0 0.0
    %673 = vmatpush1.msra.mxu0 0.0
    %674 = vmatprep.subr.mxu0 0.0
    %675 = vmatpush1.msra.mxu0 0.0
    %676 = vmatprep.subr.mxu0 0.0
    %677 = vmatpush1.msra.mxu0 0.0
    %678 = vmatprep.subr.mxu0 0.0
    %679 = vmatpush1.msra.mxu0 0.0
    %680 = vmatprep.subr.mxu0 0.0
    %681 = vmatpush1.msra.mxu0 0.0
    %682 = vmatprep.subr.mxu0 0.0
    %683 = vmatpush1.msra.mxu0 0.0
    %684 = vmatprep.subr.mxu0 0.0
    %685 = vmatpush1.msra.mxu0 0.0
    %686 = vmatprep.subr.mxu0 0.0
    %687 = vmatpush1.msra.mxu0 0.0
    %688 = vmatprep.subr.mxu0 0.0
    %689 = vmatpush1.msra.mxu0 0.0
    %690 = vmatprep.subr.mxu0 0.0
    %691 = vmatpush1.msra.mxu0 0.0
    %692 = vmatprep.subr.mxu0 0.0
    %693 = vmatpush1.msra.mxu0 0.0
    %694 = vmatprep.subr.mxu0 0.0
    %695 = vmatpush1.msra.mxu0 0.0
    %696 = vmatprep.mubr.f32.mxu0 0.0
    %697 = vmatmul.mubr.f32.gmra.mrb[0].mxu0 %v127
    %v698 = vpop.f32.mrb[0].mxu0
    %v699 = vadd.f32 %v108, %v698
    %v700 = vpop.f32.mrb[0].mxu0
    %v701 = vadd.f32 %v108, %v700
    %702 = vmatprep.mubr.f32.mxu0 0.0
    %703 = vmatmul.mubr.f32.gmra.mrb[0].mxu0 %v130
    %v704 = vpop.f32.mrb[0].mxu0
    %v705 = vadd.f32 %v113, %v704
    %v706 = vpop.f32.mrb[0].mxu0
    %v707 = vadd.f32 %v113, %v706
    %708 = vmatprep.mubr.f32.mxu0 0.0
    %709 = vmatmul.mubr.f32.gmra.mrb[0].mxu0 %v133
    %v710 = vpop.f32.mrb[0].mxu0
    %v711 = vadd.f32 %v118, %v710
    %v712 = vpop.f32.mrb[0].mxu0
    %v713 = vadd.f32 %v118, %v712
    %714 = vmatprep.mubr.f32.mxu0 0.0
    %715 = vmatmul.mubr.f32.gmra.mrb[0].mxu0 %v136
    %v716 = vpop.f32.mrb[0].mxu0
    %v717 = vadd.f32 %v123, %v716
    %v718 = vpop.f32.mrb[0].mxu0
    %v719 = vadd.f32 %v123, %v718
    %720 = vdwg.mxu0
    %721 = vmatprep.subr.mxu0 %v62
    %722 = vmatpush1.msra.mxu0 %v61
    %723 = vmatprep.subr.mxu0 %v78
    %724 = vmatpush1.msra.mxu0 %v77
    %725 = vmatprep.subr.mxu0 %v179
    %726 = vmatpush1.msra.mxu0 %v176
    %727 = vmatprep.subr.mxu0 0.0
    %728 = vmatpush1.msra.mxu0 0.0
    %729 = vmatprep.subr.mxu0 0.0
    %730 = vmatpush1.msra.mxu0 0.0
    %731 = vmatprep.subr.mxu0 0.0
    %732 = vmatpush1.msra.mxu0 0.0
    %733 = vmatprep.subr.mxu0 0.0
    %734 = vmatpush1.msra.mxu0 0.0
    %735 = vmatprep.subr.mxu0 0.0
    %736 = vmatpush1.msra.mxu0 0.0
    %737 = vmatprep.subr.mxu0 0.0
    %738 = vmatpush1.msra.mxu0 0.0
    %739 = vmatprep.subr.mxu0 0.0
    %740 = vmatpush1.msra.mxu0 0.0
    %741 = vmatprep.subr.mxu0 0.0
    %742 = vmatpush1.msra.mxu0 0.0
    %743 = vmatprep.subr.mxu0 0.0
    %744 = vmatpush1.msra.mxu0 0.0
    %745 = vmatprep.subr.mxu0 0.0
    %746 = vmatpush1.msra.mxu0 0.0
    %747 = vmatprep.subr.mxu0 0.0
    %748 = vmatpush1.msra.mxu0 0.0
    %749 = vmatprep.subr.mxu0 0.0
    %750 = vmatpush1.msra.mxu0 0.0
    %751 = vmatprep.subr.mxu0 0.0
    %752 = vmatpush1.msra.mxu0 0.0
    %753 = vmatprep.subr.mxu0 0.0
    %754 = vmatpush1.msra.mxu0 0.0
    %755 = vmatprep.subr.mxu0 0.0
    %756 = vmatpush1.msra.mxu0 0.0
    %757 = vmatprep.subr.mxu0 0.0
    %758 = vmatpush1.msra.mxu0 0.0
    %759 = vmatprep.subr.mxu0 0.0
    %760 = vmatpush1.msra.mxu0 0.0
    %761 = vmatprep.subr.mxu0 0.0
    %762 = vmatpush1.msra.mxu0 0.0
    %763 = vmatprep.subr.mxu0 0.0
    %764 = vmatpush1.msra.mxu0 0.0
    %765 = vmatprep.subr.mxu0 0.0
    %766 = vmatpush1.msra.mxu0 0.0
    %767 = vmatprep.subr.mxu0 0.0
    %768 = vmatpush1.msra.mxu0 0.0
    %769 = vmatprep.subr.mxu0 0.0
    %770 = vmatpush1.msra.mxu0 0.0
    %771 = vmatprep.subr.mxu0 0.0
    %772 = vmatpush1.msra.mxu0 0.0
    %773 = vmatprep.subr.mxu0 0.0
    %774 = vmatpush1.msra.mxu0 0.0
    %775 = vmatprep.subr.mxu0 0.0
    %776 = vmatpush1.msra.mxu0 0.0
    %777 = vmatprep.subr.mxu0 0.0
    %778 = vmatpush1.msra.mxu0 0.0
    %779 = vmatprep.subr.mxu0 0.0
    %780 = vmatpush1.msra.mxu0 0.0
    %781 = vmatprep.subr.mxu0 0.0
    %782 = vmatpush1.msra.mxu0 0.0
    %783 = vmatprep.subr.mxu0 0.0
    %784 = vmatpush1.msra.mxu0 0.0
    %785 = vmatprep.mubr.f32.mxu0 0.0
    %786 = vmatmul.mubr.f32.gmra.mrb[0].mxu0 %v127
    %v787 = vpop.f32.mrb[0].mxu0
    %v788 = vadd.f32 %v108, %v787
    %v789 = vpop.f32.mrb[0].mxu0
    %v790 = vadd.f32 %v108, %v789
    %791 = vmatprep.mubr.f32.mxu0 0.0
    %792 = vmatmul.mubr.f32.gmra.mrb[0].mxu0 %v130
    %v793 = vpop.f32.mrb[0].mxu0
    %v794 = vadd.f32 %v113, %v793
    %v795 = vpop.f32.mrb[0].mxu0
    %v796 = vadd.f32 %v113, %v795
    %797 = vmatprep.mubr.f32.mxu0 0.0
    %798 = vmatmul.mubr.f32.gmra.mrb[0].mxu0 %v133
    %v799 = vpop.f32.mrb[0].mxu0
    %v800 = vadd.f32 %v118, %v799
    %v801 = vpop.f32.mrb[0].mxu0
    %v802 = vadd.f32 %v118, %v801
    %803 = vmatprep.mubr.f32.mxu0 0.0
    %804 = vmatmul.mubr.f32.gmra.mrb[0].mxu0 %v136
    %v805 = vpop.f32.mrb[0].mxu0
    %v806 = vadd.f32 %v123, %v805
    %v807 = vpop.f32.mrb[0].mxu0
    %v808 = vadd.f32 %v123, %v807
    %809 = vdwg.mxu0
    %810 = vmatprep.subr.mxu0 %v64
    %811 = vmatpush1.msra.mxu0 %v63
    %812 = vmatprep.subr.mxu0 %v80
    %813 = vmatpush1.msra.mxu0 %v79
    %814 = vmatprep.subr.mxu0 %v185
    %815 = vmatpush1.msra.mxu0 %v182
    %816 = vmatprep.subr.mxu0 0.0
    %817 = vmatpush1.msra.mxu0 0.0
    %818 = vmatprep.subr.mxu0 0.0
    %819 = vmatpush1.msra.mxu0 0.0
    %820 = vmatprep.subr.mxu0 0.0
    %821 = vmatpush1.msra.mxu0 0.0
    %822 = vmatprep.subr.mxu0 0.0
    %823 = vmatpush1.msra.mxu0 0.0
    %824 = vmatprep.subr.mxu0 0.0
    %825 = vmatpush1.msra.mxu0 0.0
    %826 = vmatprep.subr.mxu0 0.0
    %827 = vmatpush1.msra.mxu0 0.0
    %828 = vmatprep.subr.mxu0 0.0
    %829 = vmatpush1.msra.mxu0 0.0
    %830 = vmatprep.subr.mxu0 0.0
    %831 = vmatpush1.msra.mxu0 0.0
    %832 = vmatprep.subr.mxu0 0.0
    %833 = vmatpush1.msra.mxu0 0.0
    %834 = vmatprep.subr.mxu0 0.0
    %835 = vmatpush1.msra.mxu0 0.0
    %836 = vmatprep.subr.mxu0 0.0
    %837 = vmatpush1.msra.mxu0 0.0
    %838 = vmatprep.subr.mxu0 0.0
    %839 = vmatpush1.msra.mxu0 0.0
    %840 = vmatprep.subr.mxu0 0.0
    %841 = vmatpush1.msra.mxu0 0.0
    %842 = vmatprep.subr.mxu0 0.0
    %843 = vmatpush1.msra.mxu0 0.0
    %844 = vmatprep.subr.mxu0 0.0
    %845 = vmatpush1.msra.mxu0 0.0
    %846 = vmatprep.subr.mxu0 0.0
    %847 = vmatpush1.msra.mxu0 0.0
    %848 = vmatprep.subr.mxu0 0.0
    %849 = vmatpush1.msra.mxu0 0.0
    %850 = vmatprep.subr.mxu0 0.0
    %851 = vmatpush1.msra.mxu0 0.0
    %852 = vmatprep.subr.mxu0 0.0
    %853 = vmatpush1.msra.mxu0 0.0
    %854 = vmatprep.subr.mxu0 0.0
    %855 = vmatpush1.msra.mxu0 0.0
    %856 = vmatprep.subr.mxu0 0.0
    %857 = vmatpush1.msra.mxu0 0.0
    %858 = vmatprep.subr.mxu0 0.0
    %859 = vmatpush1.msra.mxu0 0.0
    %860 = vmatprep.subr.mxu0 0.0
    %861 = vmatpush1.msra.mxu0 0.0
    %862 = vmatprep.subr.mxu0 0.0
    %863 = vmatpush1.msra.mxu0 0.0
    %864 = vmatprep.subr.mxu0 0.0
    %865 = vmatpush1.msra.mxu0 0.0
    %866 = vmatprep.subr.mxu0 0.0
    %867 = vmatpush1.msra.mxu0 0.0
    %868 = vmatprep.subr.mxu0 0.0
    %869 = vmatpush1.msra.mxu0 0.0
    %870 = vmatprep.subr.mxu0 0.0
    %871 = vmatpush1.msra.mxu0 0.0
    %872 = vmatprep.subr.mxu0 0.0
    %873 = vmatpush1.msra.mxu0 0.0
    %874 = vmatprep.mubr.f32.mxu0 0.0
    %875 = vmatmul.mubr.f32.gmra.mrb[0].mxu0 %v127
    %v876 = vpop.f32.mrb[0].mxu0
    %v877 = vadd.f32 %v108, %v876
    %v878 = vpop.f32.mrb[0].mxu0
    %v879 = vadd.f32 %v108, %v878
    %880 = vmatprep.mubr.f32.mxu0 0.0
    %881 = vmatmul.mubr.f32.gmra.mrb[0].mxu0 %v130
    %v882 = vpop.f32.mrb[0].mxu0
    %v883 = vadd.f32 %v113, %v882
    %v884 = vpop.f32.mrb[0].mxu0
    %v885 = vadd.f32 %v113, %v884
    %886 = vmatprep.mubr.f32.mxu0 0.0
    %887 = vmatmul.mubr.f32.gmra.mrb[0].mxu0 %v133
    %v888 = vpop.f32.mrb[0].mxu0
    %v889 = vadd.f32 %v118, %v888
    %v890 = vpop.f32.mrb[0].mxu0
    %v891 = vadd.f32 %v118, %v890
    %892 = vmatprep.mubr.f32.mxu0 0.0
    %893 = vmatmul.mubr.f32.gmra.mrb[0].mxu0 %v136
    %v894 = vpop.f32.mrb[0].mxu0
    %v895 = vadd.f32 %v123, %v894
    %v896 = vpop.f32.mrb[0].mxu0
    %v897 = vadd.f32 %v123, %v896
    %898 = vdwg.mxu0
    %v899 = vmax.f32 %v254, 0.0
    %v900 = vmax.f32 %v256, 0.0
    %v901 = vmax.f32 %v343, 0.0
    %v902 = vmax.f32 %v345, 0.0
    %v903 = vmax.f32 %v432, 0.0
    %v904 = vmax.f32 %v434, 0.0
    %v905 = vmax.f32 %v521, 0.0
    %v906 = vmax.f32 %v523, 0.0
    %v907 = vmax.f32 %v610, 0.0
    %v908 = vmax.f32 %v612, 0.0
    %v909 = vmax.f32 %v699, 0.0
    %v910 = vmax.f32 %v701, 0.0
    %v911 = vmax.f32 %v788, 0.0
    %v912 = vmax.f32 %v790, 0.0
    %v913 = vmax.f32 %v877, 0.0
    %v914 = vmax.f32 %v879, 0.0
    %v915 = vmax.f32 %v260, 0.0
    %v916 = vmax.f32 %v262, 0.0
    %v917 = vmax.f32 %v349, 0.0
    %v918 = vmax.f32 %v351, 0.0
    %v919 = vmax.f32 %v438, 0.0
    %v920 = vmax.f32 %v440, 0.0
    %v921 = vmax.f32 %v527, 0.0
    %v922 = vmax.f32 %v529, 0.0
    %v923 = vmax.f32 %v616, 0.0
    %v924 = vmax.f32 %v618, 0.0
    %v925 = vmax.f32 %v705, 0.0
    %v926 = vmax.f32 %v707, 0.0
    %v927 = vmax.f32 %v794, 0.0
    %v928 = vmax.f32 %v796, 0.0
    %v929 = vmax.f32 %v883, 0.0
    %v930 = vmax.f32 %v885, 0.0
    %v931 = vmax.f32 %v266, 0.0
    %v932 = vmax.f32 %v268, 0.0
    %v933 = vmax.f32 %v355, 0.0
    %v934 = vmax.f32 %v357, 0.0
    %v935 = vmax.f32 %v444, 0.0
    %v936 = vmax.f32 %v446, 0.0
    %v937 = vmax.f32 %v533, 0.0
    %v938 = vmax.f32 %v535, 0.0
    %v939 = vmax.f32 %v622, 0.0
    %v940 = vmax.f32 %v624, 0.0
    %v941 = vmax.f32 %v711, 0.0
    %v942 = vmax.f32 %v713, 0.0
    %v943 = vmax.f32 %v800, 0.0
    %v944 = vmax.f32 %v802, 0.0
    %v945 = vmax.f32 %v889, 0.0
    %v946 = vmax.f32 %v891, 0.0
    %v947 = vmax.f32 %v272, 0.0
    %v948 = vmax.f32 %v274, 0.0
    %v949 = vmax.f32 %v361, 0.0
    %v950 = vmax.f32 %v363, 0.0
    %v951 = vmax.f32 %v450, 0.0
    %v952 = vmax.f32 %v452, 0.0
    %v953 = vmax.f32 %v539, 0.0
    %v954 = vmax.f32 %v541, 0.0
    %v955 = vmax.f32 %v628, 0.0
    %v956 = vmax.f32 %v630, 0.0
    %v957 = vmax.f32 %v717, 0.0
    %v958 = vmax.f32 %v719, 0.0
    %v959 = vmax.f32 %v806, 0.0
    %v960 = vmax.f32 %v808, 0.0
    %v961 = vmax.f32 %v895, 0.0
    %v962 = vmax.f32 %v897, 0.0
    %v963 = vld [vmem:[%s3] sm:$0x1]
    %v964 = vld [vmem:[#allocation2] sm:$0x1]
    %966 = vset.pattern.permute.xlu0 0
    %967 = vperm.xlu0 %966, %v964
    %v968 = vpop.permute.xlu0 %967
    %v970 = vlaneseq
    %v971 = vshrl.u32 %v970, 7
    %v972 = vsub.s32 0, %v971
    %v973 = vrot.slane %v968, %v972
    %vm974 = vcmask 261120
    %v976 = vsel %vm974, %v963, 0
    %978 = vmatprep.subr.mxu0 %v900
    %979 = vmatpush1.msra.mxu0 %v899
    %980 = vmatprep.subr.mxu0 %v916
    %981 = vmatpush1.msra.mxu0 %v915
    %982 = vmatprep.subr.mxu0 %v932
    %983 = vmatpush1.msra.mxu0 %v931
    %984 = vmatprep.subr.mxu0 %v948
    %985 = vmatpush1.msra.mxu0 %v947
    %986 = vmatprep.subr.mxu0 0.0
    %987 = vmatpush1.msra.mxu0 0.0
    %988 = vmatprep.subr.mxu0 0.0
    %989 = vmatpush1.msra.mxu0 0.0
    %990 = vmatprep.subr.mxu0 0.0
    %991 = vmatpush1.msra.mxu0 0.0
    %992 = vmatprep.subr.mxu0 0.0
    %993 = vmatpush1.msra.mxu0 0.0
    %994 = vmatprep.subr.mxu0 0.0
    %995 = vmatpush1.msra.mxu0 0.0
    %996 = vmatprep.subr.mxu0 0.0
    %997 = vmatpush1.msra.mxu0 0.0
    %998 = vmatprep.subr.mxu0 0.0
    %999 = vmatpush1.msra.mxu0 0.0
    %1000 = vmatprep.subr.mxu0 0.0
    %1001 = vmatpush1.msra.mxu0 0.0
    %1002 = vmatprep.subr.mxu0 0.0
    %1003 = vmatpush1.msra.mxu0 0.0
    %1004 = vmatprep.subr.mxu0 0.0
    %1005 = vmatpush1.msra.mxu0 0.0
    %1006 = vmatprep.subr.mxu0 0.0
    %1007 = vmatpush1.msra.mxu0 0.0
    %1008 = vmatprep.subr.mxu0 0.0
    %1009 = vmatpush1.msra.mxu0 0.0
    %1010 = vmatprep.subr.mxu0 0.0
    %1011 = vmatpush1.msra.mxu0 0.0
    %1012 = vmatprep.subr.mxu0 0.0
    %1013 = vmatpush1.msra.mxu0 0.0
    %1014 = vmatprep.subr.mxu0 0.0
    %1015 = vmatpush1.msra.mxu0 0.0
    %1016 = vmatprep.subr.mxu0 0.0
    %1017 = vmatpush1.msra.mxu0 0.0
    %1018 = vmatprep.subr.mxu0 0.0
    %1019 = vmatpush1.msra.mxu0 0.0
    %1020 = vmatprep.subr.mxu0 0.0
    %1021 = vmatpush1.msra.mxu0 0.0
    %1022 = vmatprep.subr.mxu0 0.0
    %1023 = vmatpush1.msra.mxu0 0.0
    %1024 = vmatprep.subr.mxu0 0.0
    %1025 = vmatpush1.msra.mxu0 0.0
    %1026 = vmatprep.subr.mxu0 0.0
    %1027 = vmatpush1.msra.mxu0 0.0
    %1028 = vmatprep.subr.mxu0 0.0
    %1029 = vmatpush1.msra.mxu0 0.0
    %1030 = vmatprep.subr.mxu0 0.0
    %1031 = vmatpush1.msra.mxu0 0.0
    %1032 = vmatprep.subr.mxu0 0.0
    %1033 = vmatpush1.msra.mxu0 0.0
    %1034 = vmatprep.subr.mxu0 0.0
    %1035 = vmatpush1.msra.mxu0 0.0
    %1036 = vmatprep.subr.mxu0 0.0
    %1037 = vmatpush1.msra.mxu0 0.0
    %1038 = vmatprep.subr.mxu0 0.0
    %1039 = vmatpush1.msra.mxu0 0.0
    %1040 = vmatprep.subr.mxu0 0.0
    %1041 = vmatpush1.msra.mxu0 0.0
    %1042 = vmatprep.mubr.f32.mxu0 0.0
    %1043 = vmatmul.mubr.f32.gmra.mrb[0].mxu0 %v976
    %v1044 = vpop.f32.mrb[0].mxu0
    %v1045 = vadd.f32 %v973, %v1044
    %v1046 = vpop.f32.mrb[0].mxu0
    %v1047 = vadd.f32 %v973, %v1046
    %1048 = vdwg.mxu0
    %1049 = vmatprep.subr.mxu0 %v902
    %1050 = vmatpush1.msra.mxu0 %v901
    %1051 = vmatprep.subr.mxu0 %v918
    %1052 = vmatpush1.msra.mxu0 %v917
    %1053 = vmatprep.subr.mxu0 %v934
    %1054 = vmatpush1.msra.mxu0 %v933
    %1055 = vmatprep.subr.mxu0 %v950
    %1056 = vmatpush1.msra.mxu0 %v949
    %1057 = vmatprep.subr.mxu0 0.0
    %1058 = vmatpush1.msra.mxu0 0.0
    %1059 = vmatprep.subr.mxu0 0.0
    %1060 = vmatpush1.msra.mxu0 0.0
    %1061 = vmatprep.subr.mxu0 0.0
    %1062 = vmatpush1.msra.mxu0 0.0
    %1063 = vmatprep.subr.mxu0 0.0
    %1064 = vmatpush1.msra.mxu0 0.0
    %1065 = vmatprep.subr.mxu0 0.0
    %1066 = vmatpush1.msra.mxu0 0.0
    %1067 = vmatprep.subr.mxu0 0.0
    %1068 = vmatpush1.msra.mxu0 0.0
    %1069 = vmatprep.subr.mxu0 0.0
    %1070 = vmatpush1.msra.mxu0 0.0
    %1071 = vmatprep.subr.mxu0 0.0
    %1072 = vmatpush1.msra.mxu0 0.0
    %1073 = vmatprep.subr.mxu0 0.0
    %1074 = vmatpush1.msra.mxu0 0.0
    %1075 = vmatprep.subr.mxu0 0.0
    %1076 = vmatpush1.msra.mxu0 0.0
    %1077 = vmatprep.subr.mxu0 0.0
    %1078 = vmatpush1.msra.mxu0 0.0
    %1079 = vmatprep.subr.mxu0 0.0
    %1080 = vmatpush1.msra.mxu0 0.0
    %1081 = vmatprep.subr.mxu0 0.0
    %1082 = vmatpush1.msra.mxu0 0.0
    %1083 = vmatprep.subr.mxu0 0.0
    %1084 = vmatpush1.msra.mxu0 0.0
    %1085 = vmatprep.subr.mxu0 0.0
    %1086 = vmatpush1.msra.mxu0 0.0
    %1087 = vmatprep.subr.mxu0 0.0
    %1088 = vmatpush1.msra.mxu0 0.0
    %1089 = vmatprep.subr.mxu0 0.0
    %1090 = vmatpush1.msra.mxu0 0.0
    %1091 = vmatprep.subr.mxu0 0.0
    %1092 = vmatpush1.msra.mxu0 0.0
    %1093 = vmatprep.subr.mxu0 0.0
    %1094 = vmatpush1.msra.mxu0 0.0
    %1095 = vmatprep.subr.mxu0 0.0
    %1096 = vmatpush1.msra.mxu0 0.0
    %1097 = vmatprep.subr.mxu0 0.0
    %1098 = vmatpush1.msra.mxu0 0.0
    %1099 = vmatprep.subr.mxu0 0.0
    %1100 = vmatpush1.msra.mxu0 0.0
    %1101 = vmatprep.subr.mxu0 0.0
    %1102 = vmatpush1.msra.mxu0 0.0
    %1103 = vmatprep.subr.mxu0 0.0
    %1104 = vmatpush1.msra.mxu0 0.0
    %1105 = vmatprep.subr.mxu0 0.0
    %1106 = vmatpush1.msra.mxu0 0.0
    %1107 = vmatprep.subr.mxu0 0.0
    %1108 = vmatpush1.msra.mxu0 0.0
    %1109 = vmatprep.subr.mxu0 0.0
    %1110 = vmatpush1.msra.mxu0 0.0
    %1111 = vmatprep.subr.mxu0 0.0
    %1112 = vmatpush1.msra.mxu0 0.0
    %1113 = vmatprep.mubr.f32.mxu0 0.0
    %1114 = vmatmul.mubr.f32.gmra.mrb[0].mxu0 %v976
    %v1115 = vpop.f32.mrb[0].mxu0
    %v1116 = vadd.f32 %v973, %v1115
    %v1117 = vpop.f32.mrb[0].mxu0
    %v1118 = vadd.f32 %v973, %v1117
    %1119 = vdwg.mxu0
    %1120 = vmatprep.subr.mxu0 %v904
    %1121 = vmatpush1.msra.mxu0 %v903
    %1122 = vmatprep.subr.mxu0 %v920
    %1123 = vmatpush1.msra.mxu0 %v919
    %1124 = vmatprep.subr.mxu0 %v936
    %1125 = vmatpush1.msra.mxu0 %v935
    %1126 = vmatprep.subr.mxu0 %v952
    %1127 = vmatpush1.msra.mxu0 %v951
    %1128 = vmatprep.subr.mxu0 0.0
    %1129 = vmatpush1.msra.mxu0 0.0
    %1130 = vmatprep.subr.mxu0 0.0
    %1131 = vmatpush1.msra.mxu0 0.0
    %1132 = vmatprep.subr.mxu0 0.0
    %1133 = vmatpush1.msra.mxu0 0.0
    %1134 = vmatprep.subr.mxu0 0.0
    %1135 = vmatpush1.msra.mxu0 0.0
    %1136 = vmatprep.subr.mxu0 0.0
    %1137 = vmatpush1.msra.mxu0 0.0
    %1138 = vmatprep.subr.mxu0 0.0
    %1139 = vmatpush1.msra.mxu0 0.0
    %1140 = vmatprep.subr.mxu0 0.0
    %1141 = vmatpush1.msra.mxu0 0.0
    %1142 = vmatprep.subr.mxu0 0.0
    %1143 = vmatpush1.msra.mxu0 0.0
    %1144 = vmatprep.subr.mxu0 0.0
    %1145 = vmatpush1.msra.mxu0 0.0
    %1146 = vmatprep.subr.mxu0 0.0
    %1147 = vmatpush1.msra.mxu0 0.0
    %1148 = vmatprep.subr.mxu0 0.0
    %1149 = vmatpush1.msra.mxu0 0.0
    %1150 = vmatprep.subr.mxu0 0.0
    %1151 = vmatpush1.msra.mxu0 0.0
    %1152 = vmatprep.subr.mxu0 0.0
    %1153 = vmatpush1.msra.mxu0 0.0
    %1154 = vmatprep.subr.mxu0 0.0
    %1155 = vmatpush1.msra.mxu0 0.0
    %1156 = vmatprep.subr.mxu0 0.0
    %1157 = vmatpush1.msra.mxu0 0.0
    %1158 = vmatprep.subr.mxu0 0.0
    %1159 = vmatpush1.msra.mxu0 0.0
    %1160 = vmatprep.subr.mxu0 0.0
    %1161 = vmatpush1.msra.mxu0 0.0
    %1162 = vmatprep.subr.mxu0 0.0
    %1163 = vmatpush1.msra.mxu0 0.0
    %1164 = vmatprep.subr.mxu0 0.0
    %1165 = vmatpush1.msra.mxu0 0.0
    %1166 = vmatprep.subr.mxu0 0.0
    %1167 = vmatpush1.msra.mxu0 0.0
    %1168 = vmatprep.subr.mxu0 0.0
    %1169 = vmatpush1.msra.mxu0 0.0
    %1170 = vmatprep.subr.mxu0 0.0
    %1171 = vmatpush1.msra.mxu0 0.0
    %1172 = vmatprep.subr.mxu0 0.0
    %1173 = vmatpush1.msra.mxu0 0.0
    %1174 = vmatprep.subr.mxu0 0.0
    %1175 = vmatpush1.msra.mxu0 0.0
    %1176 = vmatprep.subr.mxu0 0.0
    %1177 = vmatpush1.msra.mxu0 0.0
    %1178 = vmatprep.subr.mxu0 0.0
    %1179 = vmatpush1.msra.mxu0 0.0
    %1180 = vmatprep.subr.mxu0 0.0
    %1181 = vmatpush1.msra.mxu0 0.0
    %1182 = vmatprep.subr.mxu0 0.0
    %1183 = vmatpush1.msra.mxu0 0.0
    %1184 = vmatprep.mubr.f32.mxu0 0.0
    %1185 = vmatmul.mubr.f32.gmra.mrb[0].mxu0 %v976
    %v1186 = vpop.f32.mrb[0].mxu0
    %v1187 = vadd.f32 %v973, %v1186
    %v1188 = vpop.f32.mrb[0].mxu0
    %v1189 = vadd.f32 %v973, %v1188
    %1190 = vdwg.mxu0
    %1191 = vmatprep.subr.mxu0 %v906
    %1192 = vmatpush1.msra.mxu0 %v905
    %1193 = vmatprep.subr.mxu0 %v922
    %1194 = vmatpush1.msra.mxu0 %v921
    %1195 = vmatprep.subr.mxu0 %v938
    %1196 = vmatpush1.msra.mxu0 %v937
    %1197 = vmatprep.subr.mxu0 %v954
    %1198 = vmatpush1.msra.mxu0 %v953
    %1199 = vmatprep.subr.mxu0 0.0
    %1200 = vmatpush1.msra.mxu0 0.0
    %1201 = vmatprep.subr.mxu0 0.0
    %1202 = vmatpush1.msra.mxu0 0.0
    %1203 = vmatprep.subr.mxu0 0.0
    %1204 = vmatpush1.msra.mxu0 0.0
    %1205 = vmatprep.subr.mxu0 0.0
    %1206 = vmatpush1.msra.mxu0 0.0
    %1207 = vmatprep.subr.mxu0 0.0
    %1208 = vmatpush1.msra.mxu0 0.0
    %1209 = vmatprep.subr.mxu0 0.0
    %1210 = vmatpush1.msra.mxu0 0.0
    %1211 = vmatprep.subr.mxu0 0.0
    %1212 = vmatpush1.msra.mxu0 0.0
    %1213 = vmatprep.subr.mxu0 0.0
    %1214 = vmatpush1.msra.mxu0 0.0
    %1215 = vmatprep.subr.mxu0 0.0
    %1216 = vmatpush1.msra.mxu0 0.0
    %1217 = vmatprep.subr.mxu0 0.0
    %1218 = vmatpush1.msra.mxu0 0.0
    %1219 = vmatprep.subr.mxu0 0.0
    %1220 = vmatpush1.msra.mxu0 0.0
    %1221 = vmatprep.subr.mxu0 0.0
    %1222 = vmatpush1.msra.mxu0 0.0
    %1223 = vmatprep.subr.mxu0 0.0
    %1224 = vmatpush1.msra.mxu0 0.0
    %1225 = vmatprep.subr.mxu0 0.0
    %1226 = vmatpush1.msra.mxu0 0.0
    %1227 = vmatprep.subr.mxu0 0.0
    %1228 = vmatpush1.msra.mxu0 0.0
    %1229 = vmatprep.subr.mxu0 0.0
    %1230 = vmatpush1.msra.mxu0 0.0
    %1231 = vmatprep.subr.mxu0 0.0
    %1232 = vmatpush1.msra.mxu0 0.0
    %1233 = vmatprep.subr.mxu0 0.0
    %1234 = vmatpush1.msra.mxu0 0.0
    %1235 = vmatprep.subr.mxu0 0.0
    %1236 = vmatpush1.msra.mxu0 0.0
    %1237 = vmatprep.subr.mxu0 0.0
    %1238 = vmatpush1.msra.mxu0 0.0
    %1239 = vmatprep.subr.mxu0 0.0
    %1240 = vmatpush1.msra.mxu0 0.0
    %1241 = vmatprep.subr.mxu0 0.0
    %1242 = vmatpush1.msra.mxu0 0.0
    %1243 = vmatprep.subr.mxu0 0.0
    %1244 = vmatpush1.msra.mxu0 0.0
    %1245 = vmatprep.subr.mxu0 0.0
    %1246 = vmatpush1.msra.mxu0 0.0
    %1247 = vmatprep.subr.mxu0 0.0
    %1248 = vmatpush1.msra.mxu0 0.0
    %1249 = vmatprep.subr.mxu0 0.0
    %1250 = vmatpush1.msra.mxu0 0.0
    %1251 = vmatprep.subr.mxu0 0.0
    %1252 = vmatpush1.msra.mxu0 0.0
    %1253 = vmatprep.subr.mxu0 0.0
    %1254 = vmatpush1.msra.mxu0 0.0
    %1255 = vmatprep.mubr.f32.mxu0 0.0
    %1256 = vmatmul.mubr.f32.gmra.mrb[0].mxu0 %v976
    %v1257 = vpop.f32.mrb[0].mxu0
    %v1258 = vadd.f32 %v973, %v1257
    %v1259 = vpop.f32.mrb[0].mxu0
    %v1260 = vadd.f32 %v973, %v1259
    %1261 = vdwg.mxu0
    %1262 = vmatprep.subr.mxu0 %v908
    %1263 = vmatpush1.msra.mxu0 %v907
    %1264 = vmatprep.subr.mxu0 %v924
    %1265 = vmatpush1.msra.mxu0 %v923
    %1266 = vmatprep.subr.mxu0 %v940
    %1267 = vmatpush1.msra.mxu0 %v939
    %1268 = vmatprep.subr.mxu0 %v956
    %1269 = vmatpush1.msra.mxu0 %v955
    %1270 = vmatprep.subr.mxu0 0.0
    %1271 = vmatpush1.msra.mxu0 0.0
    %1272 = vmatprep.subr.mxu0 0.0
    %1273 = vmatpush1.msra.mxu0 0.0
    %1274 = vmatprep.subr.mxu0 0.0
    %1275 = vmatpush1.msra.mxu0 0.0
    %1276 = vmatprep.subr.mxu0 0.0
    %1277 = vmatpush1.msra.mxu0 0.0
    %1278 = vmatprep.subr.mxu0 0.0
    %1279 = vmatpush1.msra.mxu0 0.0
    %1280 = vmatprep.subr.mxu0 0.0
    %1281 = vmatpush1.msra.mxu0 0.0
    %1282 = vmatprep.subr.mxu0 0.0
    %1283 = vmatpush1.msra.mxu0 0.0
    %1284 = vmatprep.subr.mxu0 0.0
    %1285 = vmatpush1.msra.mxu0 0.0
    %1286 = vmatprep.subr.mxu0 0.0
    %1287 = vmatpush1.msra.mxu0 0.0
    %1288 = vmatprep.subr.mxu0 0.0
    %1289 = vmatpush1.msra.mxu0 0.0
    %1290 = vmatprep.subr.mxu0 0.0
    %1291 = vmatpush1.msra.mxu0 0.0
    %1292 = vmatprep.subr.mxu0 0.0
    %1293 = vmatpush1.msra.mxu0 0.0
    %1294 = vmatprep.subr.mxu0 0.0
    %1295 = vmatpush1.msra.mxu0 0.0
    %1296 = vmatprep.subr.mxu0 0.0
    %1297 = vmatpush1.msra.mxu0 0.0
    %1298 = vmatprep.subr.mxu0 0.0
    %1299 = vmatpush1.msra.mxu0 0.0
    %1300 = vmatprep.subr.mxu0 0.0
    %1301 = vmatpush1.msra.mxu0 0.0
    %1302 = vmatprep.subr.mxu0 0.0
    %1303 = vmatpush1.msra.mxu0 0.0
    %1304 = vmatprep.subr.mxu0 0.0
    %1305 = vmatpush1.msra.mxu0 0.0
    %1306 = vmatprep.subr.mxu0 0.0
    %1307 = vmatpush1.msra.mxu0 0.0
    %1308 = vmatprep.subr.mxu0 0.0
    %1309 = vmatpush1.msra.mxu0 0.0
    %1310 = vmatprep.subr.mxu0 0.0
    %1311 = vmatpush1.msra.mxu0 0.0
    %1312 = vmatprep.subr.mxu0 0.0
    %1313 = vmatpush1.msra.mxu0 0.0
    %1314 = vmatprep.subr.mxu0 0.0
    %1315 = vmatpush1.msra.mxu0 0.0
    %1316 = vmatprep.subr.mxu0 0.0
    %1317 = vmatpush1.msra.mxu0 0.0
    %1318 = vmatprep.subr.mxu0 0.0
    %1319 = vmatpush1.msra.mxu0 0.0
    %1320 = vmatprep.subr.mxu0 0.0
    %1321 = vmatpush1.msra.mxu0 0.0
    %1322 = vmatprep.subr.mxu0 0.0
    %1323 = vmatpush1.msra.mxu0 0.0
    %1324 = vmatprep.subr.mxu0 0.0
    %1325 = vmatpush1.msra.mxu0 0.0
    %1326 = vmatprep.mubr.f32.mxu0 0.0
    %1327 = vmatmul.mubr.f32.gmra.mrb[0].mxu0 %v976
    %v1328 = vpop.f32.mrb[0].mxu0
    %v1329 = vadd.f32 %v973, %v1328
    %v1330 = vpop.f32.mrb[0].mxu0
    %v1331 = vadd.f32 %v973, %v1330
    %1332 = vdwg.mxu0
    %1333 = vmatprep.subr.mxu0 %v910
    %1334 = vmatpush1.msra.mxu0 %v909
    %1335 = vmatprep.subr.mxu0 %v926
    %1336 = vmatpush1.msra.mxu0 %v925
    %1337 = vmatprep.subr.mxu0 %v942
    %1338 = vmatpush1.msra.mxu0 %v941
    %1339 = vmatprep.subr.mxu0 %v958
    %1340 = vmatpush1.msra.mxu0 %v957
    %1341 = vmatprep.subr.mxu0 0.0
    %1342 = vmatpush1.msra.mxu0 0.0
    %1343 = vmatprep.subr.mxu0 0.0
    %1344 = vmatpush1.msra.mxu0 0.0
    %1345 = vmatprep.subr.mxu0 0.0
    %1346 = vmatpush1.msra.mxu0 0.0
    %1347 = vmatprep.subr.mxu0 0.0
    %1348 = vmatpush1.msra.mxu0 0.0
    %1349 = vmatprep.subr.mxu0 0.0
    %1350 = vmatpush1.msra.mxu0 0.0
    %1351 = vmatprep.subr.mxu0 0.0
    %1352 = vmatpush1.msra.mxu0 0.0
    %1353 = vmatprep.subr.mxu0 0.0
    %1354 = vmatpush1.msra.mxu0 0.0
    %1355 = vmatprep.subr.mxu0 0.0
    %1356 = vmatpush1.msra.mxu0 0.0
    %1357 = vmatprep.subr.mxu0 0.0
    %1358 = vmatpush1.msra.mxu0 0.0
    %1359 = vmatprep.subr.mxu0 0.0
    %1360 = vmatpush1.msra.mxu0 0.0
    %1361 = vmatprep.subr.mxu0 0.0
    %1362 = vmatpush1.msra.mxu0 0.0
    %1363 = vmatprep.subr.mxu0 0.0
    %1364 = vmatpush1.msra.mxu0 0.0
    %1365 = vmatprep.subr.mxu0 0.0
    %1366 = vmatpush1.msra.mxu0 0.0
    %1367 = vmatprep.subr.mxu0 0.0
    %1368 = vmatpush1.msra.mxu0 0.0
    %1369 = vmatprep.subr.mxu0 0.0
    %1370 = vmatpush1.msra.mxu0 0.0
    %1371 = vmatprep.subr.mxu0 0.0
    %1372 = vmatpush1.msra.mxu0 0.0
    %1373 = vmatprep.subr.mxu0 0.0
    %1374 = vmatpush1.msra.mxu0 0.0
    %1375 = vmatprep.subr.mxu0 0.0
    %1376 = vmatpush1.msra.mxu0 0.0
    %1377 = vmatprep.subr.mxu0 0.0
    %1378 = vmatpush1.msra.mxu0 0.0
    %1379 = vmatprep.subr.mxu0 0.0
    %1380 = vmatpush1.msra.mxu0 0.0
    %1381 = vmatprep.subr.mxu0 0.0
    %1382 = vmatpush1.msra.mxu0 0.0
    %1383 = vmatprep.subr.mxu0 0.0
    %1384 = vmatpush1.msra.mxu0 0.0
    %1385 = vmatprep.subr.mxu0 0.0
    %1386 = vmatpush1.msra.mxu0 0.0
    %1387 = vmatprep.subr.mxu0 0.0
    %1388 = vmatpush1.msra.mxu0 0.0
    %1389 = vmatprep.subr.mxu0 0.0
    %1390 = vmatpush1.msra.mxu0 0.0
    %1391 = vmatprep.subr.mxu0 0.0
    %1392 = vmatpush1.msra.mxu0 0.0
    %1393 = vmatprep.subr.mxu0 0.0
    %1394 = vmatpush1.msra.mxu0 0.0
    %1395 = vmatprep.subr.mxu0 0.0
    %1396 = vmatpush1.msra.mxu0 0.0
    %1397 = vmatprep.mubr.f32.mxu0 0.0
    %1398 = vmatmul.mubr.f32.gmra.mrb[0].mxu0 %v976
    %v1399 = vpop.f32.mrb[0].mxu0
    %v1400 = vadd.f32 %v973, %v1399
    %v1401 = vpop.f32.mrb[0].mxu0
    %v1402 = vadd.f32 %v973, %v1401
    %1403 = vdwg.mxu0
    %1404 = vmatprep.subr.mxu0 %v912
    %1405 = vmatpush1.msra.mxu0 %v911
    %1406 = vmatprep.subr.mxu0 %v928
    %1407 = vmatpush1.msra.mxu0 %v927
    %1408 = vmatprep.subr.mxu0 %v944
    %1409 = vmatpush1.msra.mxu0 %v943
    %1410 = vmatprep.subr.mxu0 %v960
    %1411 = vmatpush1.msra.mxu0 %v959
    %1412 = vmatprep.subr.mxu0 0.0
    %1413 = vmatpush1.msra.mxu0 0.0
    %1414 = vmatprep.subr.mxu0 0.0
    %1415 = vmatpush1.msra.mxu0 0.0
    %1416 = vmatprep.subr.mxu0 0.0
    %1417 = vmatpush1.msra.mxu0 0.0
    %1418 = vmatprep.subr.mxu0 0.0
    %1419 = vmatpush1.msra.mxu0 0.0
    %1420 = vmatprep.subr.mxu0 0.0
    %1421 = vmatpush1.msra.mxu0 0.0
    %1422 = vmatprep.subr.mxu0 0.0
    %1423 = vmatpush1.msra.mxu0 0.0
    %1424 = vmatprep.subr.mxu0 0.0
    %1425 = vmatpush1.msra.mxu0 0.0
    %1426 = vmatprep.subr.mxu0 0.0
    %1427 = vmatpush1.msra.mxu0 0.0
    %1428 = vmatprep.subr.mxu0 0.0
    %1429 = vmatpush1.msra.mxu0 0.0
    %1430 = vmatprep.subr.mxu0 0.0
    %1431 = vmatpush1.msra.mxu0 0.0
    %1432 = vmatprep.subr.mxu0 0.0
    %1433 = vmatpush1.msra.mxu0 0.0
    %1434 = vmatprep.subr.mxu0 0.0
    %1435 = vmatpush1.msra.mxu0 0.0
    %1436 = vmatprep.subr.mxu0 0.0
    %1437 = vmatpush1.msra.mxu0 0.0
    %1438 = vmatprep.subr.mxu0 0.0
    %1439 = vmatpush1.msra.mxu0 0.0
    %1440 = vmatprep.subr.mxu0 0.0
    %1441 = vmatpush1.msra.mxu0 0.0
    %1442 = vmatprep.subr.mxu0 0.0
    %1443 = vmatpush1.msra.mxu0 0.0
    %1444 = vmatprep.subr.mxu0 0.0
    %1445 = vmatpush1.msra.mxu0 0.0
    %1446 = vmatprep.subr.mxu0 0.0
    %1447 = vmatpush1.msra.mxu0 0.0
    %1448 = vmatprep.subr.mxu0 0.0
    %1449 = vmatpush1.msra.mxu0 0.0
    %1450 = vmatprep.subr.mxu0 0.0
    %1451 = vmatpush1.msra.mxu0 0.0
    %1452 = vmatprep.subr.mxu0 0.0
    %1453 = vmatpush1.msra.mxu0 0.0
    %1454 = vmatprep.subr.mxu0 0.0
    %1455 = vmatpush1.msra.mxu0 0.0
    %1456 = vmatprep.subr.mxu0 0.0
    %1457 = vmatpush1.msra.mxu0 0.0
    %1458 = vmatprep.subr.mxu0 0.0
    %1459 = vmatpush1.msra.mxu0 0.0
    %1460 = vmatprep.subr.mxu0 0.0
    %1461 = vmatpush1.msra.mxu0 0.0
    %1462 = vmatprep.subr.mxu0 0.0
    %1463 = vmatpush1.msra.mxu0 0.0
    %1464 = vmatprep.subr.mxu0 0.0
    %1465 = vmatpush1.msra.mxu0 0.0
    %1466 = vmatprep.subr.mxu0 0.0
    %1467 = vmatpush1.msra.mxu0 0.0
    %1468 = vmatprep.mubr.f32.mxu0 0.0
    %1469 = vmatmul.mubr.f32.gmra.mrb[0].mxu0 %v976
    %v1470 = vpop.f32.mrb[0].mxu0
    %v1471 = vadd.f32 %v973, %v1470
    %v1472 = vpop.f32.mrb[0].mxu0
    %v1473 = vadd.f32 %v973, %v1472
    %1474 = vdwg.mxu0
    %1475 = vmatprep.subr.mxu0 %v914
    %1476 = vmatpush1.msra.mxu0 %v913
    %1477 = vmatprep.subr.mxu0 %v930
    %1478 = vmatpush1.msra.mxu0 %v929
    %1479 = vmatprep.subr.mxu0 %v946
    %1480 = vmatpush1.msra.mxu0 %v945
    %1481 = vmatprep.subr.mxu0 %v962
    %1482 = vmatpush1.msra.mxu0 %v961
    %1483 = vmatprep.subr.mxu0 0.0
    %1484 = vmatpush1.msra.mxu0 0.0
    %1485 = vmatprep.subr.mxu0 0.0
    %1486 = vmatpush1.msra.mxu0 0.0
    %1487 = vmatprep.subr.mxu0 0.0
    %1488 = vmatpush1.msra.mxu0 0.0
    %1489 = vmatprep.subr.mxu0 0.0
    %1490 = vmatpush1.msra.mxu0 0.0
    %1491 = vmatprep.subr.mxu0 0.0
    %1492 = vmatpush1.msra.mxu0 0.0
    %1493 = vmatprep.subr.mxu0 0.0
    %1494 = vmatpush1.msra.mxu0 0.0
    %1495 = vmatprep.subr.mxu0 0.0
    %1496 = vmatpush1.msra.mxu0 0.0
    %1497 = vmatprep.subr.mxu0 0.0
    %1498 = vmatpush1.msra.mxu0 0.0
    %1499 = vmatprep.subr.mxu0 0.0
    %1500 = vmatpush1.msra.mxu0 0.0
    %1501 = vmatprep.subr.mxu0 0.0
    %1502 = vmatpush1.msra.mxu0 0.0
    %1503 = vmatprep.subr.mxu0 0.0
    %1504 = vmatpush1.msra.mxu0 0.0
    %1505 = vmatprep.subr.mxu0 0.0
    %1506 = vmatpush1.msra.mxu0 0.0
    %1507 = vmatprep.subr.mxu0 0.0
    %1508 = vmatpush1.msra.mxu0 0.0
    %1509 = vmatprep.subr.mxu0 0.0
    %1510 = vmatpush1.msra.mxu0 0.0
    %1511 = vmatprep.subr.mxu0 0.0
    %1512 = vmatpush1.msra.mxu0 0.0
    %1513 = vmatprep.subr.mxu0 0.0
    %1514 = vmatpush1.msra.mxu0 0.0
    %1515 = vmatprep.subr.mxu0 0.0
    %1516 = vmatpush1.msra.mxu0 0.0
    %1517 = vmatprep.subr.mxu0 0.0
    %1518 = vmatpush1.msra.mxu0 0.0
    %1519 = vmatprep.subr.mxu0 0.0
    %1520 = vmatpush1.msra.mxu0 0.0
    %1521 = vmatprep.subr.mxu0 0.0
    %1522 = vmatpush1.msra.mxu0 0.0
    %1523 = vmatprep.subr.mxu0 0.0
    %1524 = vmatpush1.msra.mxu0 0.0
    %1525 = vmatprep.subr.mxu0 0.0
    %1526 = vmatpush1.msra.mxu0 0.0
    %1527 = vmatprep.subr.mxu0 0.0
    %1528 = vmatpush1.msra.mxu0 0.0
    %1529 = vmatprep.subr.mxu0 0.0
    %1530 = vmatpush1.msra.mxu0 0.0
    %1531 = vmatprep.subr.mxu0 0.0
    %1532 = vmatpush1.msra.mxu0 0.0
    %1533 = vmatprep.subr.mxu0 0.0
    %1534 = vmatpush1.msra.mxu0 0.0
    %1535 = vmatprep.subr.mxu0 0.0
    %1536 = vmatpush1.msra.mxu0 0.0
    %1537 = vmatprep.subr.mxu0 0.0
    %1538 = vmatpush1.msra.mxu0 0.0
    %1539 = vmatprep.mubr.f32.mxu0 0.0
    %1540 = vmatmul.mubr.f32.gmra.mrb[0].mxu0 %v976
    %v1541 = vpop.f32.mrb[0].mxu0
    %v1542 = vadd.f32 %v973, %v1541
    %v1543 = vpop.f32.mrb[0].mxu0
    %v1544 = vadd.f32 %v973, %v1543
    %1545 = vdwg.mxu0
    %v1546 = vxor.u32 %v1045, 2147483648
    %v1547 = vxor.u32 %v1047, 2147483648
    %v1548 = vxor.u32 %v1116, 2147483648
    %v1549 = vxor.u32 %v1118, 2147483648
    %v1550 = vxor.u32 %v1187, 2147483648
    %v1551 = vxor.u32 %v1189, 2147483648
    %v1552 = vxor.u32 %v1258, 2147483648
    %v1553 = vxor.u32 %v1260, 2147483648
    %v1554 = vxor.u32 %v1329, 2147483648
    %v1555 = vxor.u32 %v1331, 2147483648
    %v1556 = vxor.u32 %v1400, 2147483648
    %v1557 = vxor.u32 %v1402, 2147483648
    %v1558 = vxor.u32 %v1471, 2147483648
    %v1559 = vxor.u32 %v1473, 2147483648
    %v1560 = vxor.u32 %v1542, 2147483648
    %v1561 = vxor.u32 %v1544, 2147483648
    %v1562 = vmul.f32 %v1546, 1.442695
    %v1563 = vpow.pop %v1562
    %v1564 = vmul.f32 %v1547, 1.442695
    %v1565 = vpow.pop %v1564
    %v1566 = vmul.f32 %v1548, 1.442695
    %v1567 = vpow.pop %v1566
    %v1568 = vmul.f32 %v1549, 1.442695
    %v1569 = vpow.pop %v1568
    %v1570 = vmul.f32 %v1550, 1.442695
    %v1571 = vpow.pop %v1570
    %v1572 = vmul.f32 %v1551, 1.442695
    %v1573 = vpow.pop %v1572
    %v1574 = vmul.f32 %v1552, 1.442695
    %v1575 = vpow.pop %v1574
    %v1576 = vmul.f32 %v1553, 1.442695
    %v1577 = vpow.pop %v1576
    %v1578 = vmul.f32 %v1554, 1.442695
    %v1579 = vpow.pop %v1578
    %v1580 = vmul.f32 %v1555, 1.442695
    %v1581 = vpow.pop %v1580
    %v1582 = vmul.f32 %v1556, 1.442695
    %v1583 = vpow.pop %v1582
    %v1584 = vmul.f32 %v1557, 1.442695
    %v1585 = vpow.pop %v1584
    %v1586 = vmul.f32 %v1558, 1.442695
    %v1587 = vpow.pop %v1586
    %v1588 = vmul.f32 %v1559, 1.442695
    %v1589 = vpow.pop %v1588
    %v1590 = vmul.f32 %v1560, 1.442695
    %v1591 = vpow.pop %v1590
    %v1592 = vmul.f32 %v1561, 1.442695
    %v1593 = vpow.pop %v1592
    %v1594 = vadd.f32 %v1563, 1.0
    %v1595 = vadd.f32 %v1565, 1.0
    %v1596 = vadd.f32 %v1567, 1.0
    %v1597 = vadd.f32 %v1569, 1.0
    %v1598 = vadd.f32 %v1571, 1.0
    %v1599 = vadd.f32 %v1573, 1.0
    %v1600 = vadd.f32 %v1575, 1.0
    %v1601 = vadd.f32 %v1577, 1.0
    %v1602 = vadd.f32 %v1579, 1.0
    %v1603 = vadd.f32 %v1581, 1.0
    %v1604 = vadd.f32 %v1583, 1.0
    %v1605 = vadd.f32 %v1585, 1.0
    %v1606 = vadd.f32 %v1587, 1.0
    %v1607 = vadd.f32 %v1589, 1.0
    %v1608 = vadd.f32 %v1591, 1.0
    %v1609 = vadd.f32 %v1593, 1.0
    %v1610 = vrcp.pop %v1594
    %v1611 = vmul.f32 1.0, %v1610
    %v1612 = vrcp.pop %v1595
    %v1613 = vmul.f32 1.0, %v1612
    %v1614 = vrcp.pop %v1596
    %v1615 = vmul.f32 1.0, %v1614
    %v1616 = vrcp.pop %v1597
    %v1617 = vmul.f32 1.0, %v1616
    %v1618 = vrcp.pop %v1598
    %v1619 = vmul.f32 1.0, %v1618
    %v1620 = vrcp.pop %v1599
    %v1621 = vmul.f32 1.0, %v1620
    %v1622 = vrcp.pop %v1600
    %v1623 = vmul.f32 1.0, %v1622
    %v1624 = vrcp.pop %v1601
    %v1625 = vmul.f32 1.0, %v1624
    %v1626 = vrcp.pop %v1602
    %v1627 = vmul.f32 1.0, %v1626
    %v1628 = vrcp.pop %v1603
    %v1629 = vmul.f32 1.0, %v1628
    %v1630 = vrcp.pop %v1604
    %v1631 = vmul.f32 1.0, %v1630
    %v1632 = vrcp.pop %v1605
    %v1633 = vmul.f32 1.0, %v1632
    %v1634 = vrcp.pop %v1606
    %v1635 = vmul.f32 1.0, %v1634
    %v1636 = vrcp.pop %v1607
    %v1637 = vmul.f32 1.0, %v1636
    %v1638 = vrcp.pop %v1608
    %v1639 = vmul.f32 1.0, %v1638
    %v1640 = vrcp.pop %v1609
    %v1641 = vmul.f32 1.0, %v1640
    %v1642 = vld [vmem:[%s5] sm:$0xff]
    %v1643 = vld [vmem:[%s5 + $0x8] sm:$0xff]
    %v1644 = vld [vmem:[%s5 + $0x10] sm:$0xff]
    %v1645 = vld [vmem:[%s5 + $0x18] sm:$0xff]
    %1647 = vset.pattern.permute.xlu0 0
    %1648 = vperm.xlu0 %1647, %v1642
    %v1649 = vpop.permute.xlu0 %1648
    %1652 = vset.pattern.permute.xlu0 0
    %1653 = vperm.xlu0 %1652, %v1643
    %v1654 = vpop.permute.xlu0 %1653
    %1657 = vset.pattern.permute.xlu0 0
    %1658 = vperm.xlu0 %1657, %v1644
    %v1659 = vpop.permute.xlu0 %1658
    %1662 = vset.pattern.permute.xlu0 0
    %1663 = vperm.xlu0 %1662, %v1645
    %v1664 = vpop.permute.xlu0 %1663
    %v1666 = vlaneseq
    %v1667 = vshrl.u32 %v1666, 7
    %v1668 = vsub.s32 0, %v1667
    %v1669 = vrot.slane %v81, %v1668
    %v1670 = vlaneseq
    %v1671 = vshrl.u32 %v1670, 7
    %v1672 = vsub.s32 0, %v1671
    %v1673 = vrot.slane %v82, %v1672
    %v1674 = vlaneseq
    %v1675 = vshrl.u32 %v1674, 7
    %v1676 = vsub.s32 0, %v1675
    %v1677 = vrot.slane %v83, %v1676
    %v1678 = vlaneseq
    %v1679 = vshrl.u32 %v1678, 7
    %v1680 = vsub.s32 0, %v1679
    %v1681 = vrot.slane %v84, %v1680
    %v1682 = vlaneseq
    %v1683 = vshrl.u32 %v1682, 7
    %v1684 = vsub.s32 0, %v1683
    %v1685 = vrot.slane %v85, %v1684
    %v1686 = vlaneseq
    %v1687 = vshrl.u32 %v1686, 7
    %v1688 = vsub.s32 0, %v1687
    %v1689 = vrot.slane %v86, %v1688
    %v1690 = vlaneseq
    %v1691 = vshrl.u32 %v1690, 7
    %v1692 = vsub.s32 0, %v1691
    %v1693 = vrot.slane %v87, %v1692
    %v1694 = vlaneseq
    %v1695 = vshrl.u32 %v1694, 7
    %v1696 = vsub.s32 0, %v1695
    %v1697 = vrot.slane %v88, %v1696
    %v1698 = vlaneseq
    %v1699 = vshrl.u32 %v1698, 7
    %v1700 = vsub.s32 0, %v1699
    %v1701 = vrot.slane %v89, %v1700
    %v1702 = vlaneseq
    %v1703 = vshrl.u32 %v1702, 7
    %v1704 = vsub.s32 0, %v1703
    %v1705 = vrot.slane %v90, %v1704
    %v1706 = vlaneseq
    %v1707 = vshrl.u32 %v1706, 7
    %v1708 = vsub.s32 0, %v1707
    %v1709 = vrot.slane %v91, %v1708
    %v1710 = vlaneseq
    %v1711 = vshrl.u32 %v1710, 7
    %v1712 = vsub.s32 0, %v1711
    %v1713 = vrot.slane %v92, %v1712
    %v1714 = vlaneseq
    %v1715 = vshrl.u32 %v1714, 7
    %v1716 = vsub.s32 0, %v1715
    %v1717 = vrot.slane %v93, %v1716
    %v1718 = vlaneseq
    %v1719 = vshrl.u32 %v1718, 7
    %v1720 = vsub.s32 0, %v1719
    %v1721 = vrot.slane %v94, %v1720
    %v1722 = vlaneseq
    %v1723 = vshrl.u32 %v1722, 7
    %v1724 = vsub.s32 0, %v1723
    %v1725 = vrot.slane %v95, %v1724
    %v1726 = vlaneseq
    %v1727 = vshrl.u32 %v1726, 7
    %v1728 = vsub.s32 0, %v1727
    %v1729 = vrot.slane %v96, %v1728
    %v1730 = vmul.f32 %v1649, %v1669
    %v1731 = vmul.f32 %v1649, %v1673
    %v1732 = vmul.f32 %v1649, %v1677
    %v1733 = vmul.f32 %v1649, %v1681
    %v1734 = vmul.f32 %v1649, %v1685
    %v1735 = vmul.f32 %v1649, %v1689
    %v1736 = vmul.f32 %v1649, %v1693
    %v1737 = vmul.f32 %v1649, %v1697
    %v1738 = vmul.f32 %v1649, %v1701
    %v1739 = vmul.f32 %v1649, %v1705
    %v1740 = vmul.f32 %v1649, %v1709
    %v1741 = vmul.f32 %v1649, %v1713
    %v1742 = vmul.f32 %v1649, %v1717
    %v1743 = vmul.f32 %v1649, %v1721
    %v1744 = vmul.f32 %v1649, %v1725
    %v1745 = vmul.f32 %v1649, %v1729
    %v1746 = vmul.f32 %v1654, %v1669
    %v1747 = vmul.f32 %v1654, %v1673
    %v1748 = vmul.f32 %v1654, %v1677
    %v1749 = vmul.f32 %v1654, %v1681
    %v1750 = vmul.f32 %v1654, %v1685
    %v1751 = vmul.f32 %v1654, %v1689
    %v1752 = vmul.f32 %v1654, %v1693
    %v1753 = vmul.f32 %v1654, %v1697
    %v1754 = vmul.f32 %v1654, %v1701
    %v1755 = vmul.f32 %v1654, %v1705
    %v1756 = vmul.f32 %v1654, %v1709
    %v1757 = vmul.f32 %v1654, %v1713
    %v1758 = vmul.f32 %v1654, %v1717
    %v1759 = vmul.f32 %v1654, %v1721
    %v1760 = vmul.f32 %v1654, %v1725
    %v1761 = vmul.f32 %v1654, %v1729
    %v1762 = vmul.f32 %v1659, %v1669
    %v1763 = vmul.f32 %v1659, %v1673
    %v1764 = vmul.f32 %v1659, %v1677
    %v1765 = vmul.f32 %v1659, %v1681
    %v1766 = vmul.f32 %v1659, %v1685
    %v1767 = vmul.f32 %v1659, %v1689
    %v1768 = vmul.f32 %v1659, %v1693
    %v1769 = vmul.f32 %v1659, %v1697
    %v1770 = vmul.f32 %v1659, %v1701
    %v1771 = vmul.f32 %v1659, %v1705
    %v1772 = vmul.f32 %v1659, %v1709
    %v1773 = vmul.f32 %v1659, %v1713
    %v1774 = vmul.f32 %v1659, %v1717
    %v1775 = vmul.f32 %v1659, %v1721
    %v1776 = vmul.f32 %v1659, %v1725
    %v1777 = vmul.f32 %v1659, %v1729
    %v1778 = vmul.f32 %v1664, %v1669
    %v1779 = vmul.f32 %v1664, %v1673
    %v1780 = vmul.f32 %v1664, %v1677
    %v1781 = vmul.f32 %v1664, %v1681
    %v1782 = vmul.f32 %v1664, %v1685
    %v1783 = vmul.f32 %v1664, %v1689
    %v1784 = vmul.f32 %v1664, %v1693
    %v1785 = vmul.f32 %v1664, %v1697
    %v1786 = vmul.f32 %v1664, %v1701
    %v1787 = vmul.f32 %v1664, %v1705
    %v1788 = vmul.f32 %v1664, %v1709
    %v1789 = vmul.f32 %v1664, %v1713
    %v1790 = vmul.f32 %v1664, %v1717
    %v1791 = vmul.f32 %v1664, %v1721
    %v1792 = vmul.f32 %v1664, %v1725
    %v1793 = vmul.f32 %v1664, %v1729
    %v1794 = vld [vmem:[%s6] sm:$0xff]
    %v1795 = vld [vmem:[%s6 + $0x8] sm:$0xff]
    %v1796 = vld [vmem:[%s6 + $0x10] sm:$0xff]
    %v1797 = vld [vmem:[%s6 + $0x18] sm:$0xff]
    %1799 = vset.pattern.permute.xlu0 0
    %1800 = vperm.xlu0 %1799, %v1794
    %v1801 = vpop.permute.xlu0 %1800
    %1804 = vset.pattern.permute.xlu0 0
    %1805 = vperm.xlu0 %1804, %v1795
    %v1806 = vpop.permute.xlu0 %1805
    %1809 = vset.pattern.permute.xlu0 0
    %1810 = vperm.xlu0 %1809, %v1796
    %v1811 = vpop.permute.xlu0 %1810
    %1814 = vset.pattern.permute.xlu0 0
    %1815 = vperm.xlu0 %1814, %v1797
    %v1816 = vpop.permute.xlu0 %1815
    %v1818 = vadd.f32 %v1730, %v1801
    %v1819 = vadd.f32 %v1731, %v1801
    %v1820 = vadd.f32 %v1732, %v1801
    %v1821 = vadd.f32 %v1733, %v1801
    %v1822 = vadd.f32 %v1734, %v1801
    %v1823 = vadd.f32 %v1735, %v1801
    %v1824 = vadd.f32 %v1736, %v1801
    %v1825 = vadd.f32 %v1737, %v1801
    %v1826 = vadd.f32 %v1738, %v1801
    %v1827 = vadd.f32 %v1739, %v1801
    %v1828 = vadd.f32 %v1740, %v1801
    %v1829 = vadd.f32 %v1741, %v1801
    %v1830 = vadd.f32 %v1742, %v1801
    %v1831 = vadd.f32 %v1743, %v1801
    %v1832 = vadd.f32 %v1744, %v1801
    %v1833 = vadd.f32 %v1745, %v1801
    %v1834 = vadd.f32 %v1746, %v1806
    %v1835 = vadd.f32 %v1747, %v1806
    %v1836 = vadd.f32 %v1748, %v1806
    %v1837 = vadd.f32 %v1749, %v1806
    %v1838 = vadd.f32 %v1750, %v1806
    %v1839 = vadd.f32 %v1751, %v1806
    %v1840 = vadd.f32 %v1752, %v1806
    %v1841 = vadd.f32 %v1753, %v1806
    %v1842 = vadd.f32 %v1754, %v1806
    %v1843 = vadd.f32 %v1755, %v1806
    %v1844 = vadd.f32 %v1756, %v1806
    %v1845 = vadd.f32 %v1757, %v1806
    %v1846 = vadd.f32 %v1758, %v1806
    %v1847 = vadd.f32 %v1759, %v1806
    %v1848 = vadd.f32 %v1760, %v1806
    %v1849 = vadd.f32 %v1761, %v1806
    %v1850 = vadd.f32 %v1762, %v1811
    %v1851 = vadd.f32 %v1763, %v1811
    %v1852 = vadd.f32 %v1764, %v1811
    %v1853 = vadd.f32 %v1765, %v1811
    %v1854 = vadd.f32 %v1766, %v1811
    %v1855 = vadd.f32 %v1767, %v1811
    %v1856 = vadd.f32 %v1768, %v1811
    %v1857 = vadd.f32 %v1769, %v1811
    %v1858 = vadd.f32 %v1770, %v1811
    %v1859 = vadd.f32 %v1771, %v1811
    %v1860 = vadd.f32 %v1772, %v1811
    %v1861 = vadd.f32 %v1773, %v1811
    %v1862 = vadd.f32 %v1774, %v1811
    %v1863 = vadd.f32 %v1775, %v1811
    %v1864 = vadd.f32 %v1776, %v1811
    %v1865 = vadd.f32 %v1777, %v1811
    %v1866 = vadd.f32 %v1778, %v1816
    %v1867 = vadd.f32 %v1779, %v1816
    %v1868 = vadd.f32 %v1780, %v1816
    %v1869 = vadd.f32 %v1781, %v1816
    %v1870 = vadd.f32 %v1782, %v1816
    %v1871 = vadd.f32 %v1783, %v1816
    %v1872 = vadd.f32 %v1784, %v1816
    %v1873 = vadd.f32 %v1785, %v1816
    %v1874 = vadd.f32 %v1786, %v1816
    %v1875 = vadd.f32 %v1787, %v1816
    %v1876 = vadd.f32 %v1788, %v1816
    %v1877 = vadd.f32 %v1789, %v1816
    %v1878 = vadd.f32 %v1790, %v1816
    %v1879 = vadd.f32 %v1791, %v1816
    %v1880 = vadd.f32 %v1792, %v1816
    %v1881 = vadd.f32 %v1793, %v1816
    %v1882 = vmax.f32 %v1818, 0.0
    %v1883 = vmax.f32 %v1819, 0.0
    %v1884 = vmax.f32 %v1820, 0.0
    %v1885 = vmax.f32 %v1821, 0.0
    %v1886 = vmax.f32 %v1822, 0.0
    %v1887 = vmax.f32 %v1823, 0.0
    %v1888 = vmax.f32 %v1824, 0.0
    %v1889 = vmax.f32 %v1825, 0.0
    %v1890 = vmax.f32 %v1826, 0.0
    %v1891 = vmax.f32 %v1827, 0.0
    %v1892 = vmax.f32 %v1828, 0.0
    %v1893 = vmax.f32 %v1829, 0.0
    %v1894 = vmax.f32 %v1830, 0.0
    %v1895 = vmax.f32 %v1831, 0.0
    %v1896 = vmax.f32 %v1832, 0.0
    %v1897 = vmax.f32 %v1833, 0.0
    %v1898 = vmax.f32 %v1834, 0.0
    %v1899 = vmax.f32 %v1835, 0.0
    %v1900 = vmax.f32 %v1836, 0.0
    %v1901 = vmax.f32 %v1837, 0.0
    %v1902 = vmax.f32 %v1838, 0.0
    %v1903 = vmax.f32 %v1839, 0.0
    %v1904 = vmax.f32 %v1840, 0.0
    %v1905 = vmax.f32 %v1841, 0.0
    %v1906 = vmax.f32 %v1842, 0.0
    %v1907 = vmax.f32 %v1843, 0.0
    %v1908 = vmax.f32 %v1844, 0.0
    %v1909 = vmax.f32 %v1845, 0.0
    %v1910 = vmax.f32 %v1846, 0.0
    %v1911 = vmax.f32 %v1847, 0.0
    %v1912 = vmax.f32 %v1848, 0.0
    %v1913 = vmax.f32 %v1849, 0.0
    %v1914 = vmax.f32 %v1850, 0.0
    %v1915 = vmax.f32 %v1851, 0.0
    %v1916 = vmax.f32 %v1852, 0.0
    %v1917 = vmax.f32 %v1853, 0.0
    %v1918 = vmax.f32 %v1854, 0.0
    %v1919 = vmax.f32 %v1855, 0.0
    %v1920 = vmax.f32 %v1856, 0.0
    %v1921 = vmax.f32 %v1857, 0.0
    %v1922 = vmax.f32 %v1858, 0.0
    %v1923 = vmax.f32 %v1859, 0.0
    %v1924 = vmax.f32 %v1860, 0.0
    %v1925 = vmax.f32 %v1861, 0.0
    %v1926 = vmax.f32 %v1862, 0.0
    %v1927 = vmax.f32 %v1863, 0.0
    %v1928 = vmax.f32 %v1864, 0.0
    %v1929 = vmax.f32 %v1865, 0.0
    %v1930 = vmax.f32 %v1866, 0.0
    %v1931 = vmax.f32 %v1867, 0.0
    %v1932 = vmax.f32 %v1868, 0.0
    %v1933 = vmax.f32 %v1869, 0.0
    %v1934 = vmax.f32 %v1870, 0.0
    %v1935 = vmax.f32 %v1871, 0.0
    %v1936 = vmax.f32 %v1872, 0.0
    %v1937 = vmax.f32 %v1873, 0.0
    %v1938 = vmax.f32 %v1874, 0.0
    %v1939 = vmax.f32 %v1875, 0.0
    %v1940 = vmax.f32 %v1876, 0.0
    %v1941 = vmax.f32 %v1877, 0.0
    %v1942 = vmax.f32 %v1878, 0.0
    %v1943 = vmax.f32 %v1879, 0.0
    %v1944 = vmax.f32 %v1880, 0.0
    %v1945 = vmax.f32 %v1881, 0.0
    %v1946 = vld [vmem:[%s7] sm:$0x3]
    %v1947 = vld [vmem:[%s8] sm:$0x3]
    %1949 = vset.pattern.permute.xlu0 0
    %1950 = vperm.xlu0 %1949, %v1947
    %v1951 = vpop.permute.xlu0 %1950
    %v1954 = vsel %vm974, %v1946, 0
    %1956 = vmatprep.subr.mxu0 %v1883
    %1957 = vmatpush1.msra.mxu0 %v1882
    %1958 = vmatprep.subr.mxu0 %v1899
    %1959 = vmatpush1.msra.mxu0 %v1898
    %1960 = vmatprep.subr.mxu0 %v1915
    %1961 = vmatpush1.msra.mxu0 %v1914
    %1962 = vmatprep.subr.mxu0 %v1931
    %1963 = vmatpush1.msra.mxu0 %v1930
    %1964 = vmatprep.subr.mxu0 0.0
    %1965 = vmatpush1.msra.mxu0 0.0
    %1966 = vmatprep.subr.mxu0 0.0
    %1967 = vmatpush1.msra.mxu0 0.0
    %1968 = vmatprep.subr.mxu0 0.0
    %1969 = vmatpush1.msra.mxu0 0.0
    %1970 = vmatprep.subr.mxu0 0.0
    %1971 = vmatpush1.msra.mxu0 0.0
    %1972 = vmatprep.subr.mxu0 0.0
    %1973 = vmatpush1.msra.mxu0 0.0
    %1974 = vmatprep.subr.mxu0 0.0
    %1975 = vmatpush1.msra.mxu0 0.0
    %1976 = vmatprep.subr.mxu0 0.0
    %1977 = vmatpush1.msra.mxu0 0.0
    %1978 = vmatprep.subr.mxu0 0.0
    %1979 = vmatpush1.msra.mxu0 0.0
    %1980 = vmatprep.subr.mxu0 0.0
    %1981 = vmatpush1.msra.mxu0 0.0
    %1982 = vmatprep.subr.mxu0 0.0
    %1983 = vmatpush1.msra.mxu0 0.0
    %1984 = vmatprep.subr.mxu0 0.0
    %1985 = vmatpush1.msra.mxu0 0.0
    %1986 = vmatprep.subr.mxu0 0.0
    %1987 = vmatpush1.msra.mxu0 0.0
    %1988 = vmatprep.subr.mxu0 0.0
    %1989 = vmatpush1.msra.mxu0 0.0
    %1990 = vmatprep.subr.mxu0 0.0
    %1991 = vmatpush1.msra.mxu0 0.0
    %1992 = vmatprep.subr.mxu0 0.0
    %1993 = vmatpush1.msra.mxu0 0.0
    %1994 = vmatprep.subr.mxu0 0.0
    %1995 = vmatpush1.msra.mxu0 0.0
    %1996 = vmatprep.subr.mxu0 0.0
    %1997 = vmatpush1.msra.mxu0 0.0
    %1998 = vmatprep.subr.mxu0 0.0
    %1999 = vmatpush1.msra.mxu0 0.0
    %2000 = vmatprep.subr.mxu0 0.0
    %2001 = vmatpush1.msra.mxu0 0.0
    %2002 = vmatprep.subr.mxu0 0.0
    %2003 = vmatpush1.msra.mxu0 0.0
    %2004 = vmatprep.subr.mxu0 0.0
    %2005 = vmatpush1.msra.mxu0 0.0
    %2006 = vmatprep.subr.mxu0 0.0
    %2007 = vmatpush1.msra.mxu0 0.0
    %2008 = vmatprep.subr.mxu0 0.0
    %2009 = vmatpush1.msra.mxu0 0.0
    %2010 = vmatprep.subr.mxu0 0.0
    %2011 = vmatpush1.msra.mxu0 0.0
    %2012 = vmatprep.subr.mxu0 0.0
    %2013 = vmatpush1.msra.mxu0 0.0
    %2014 = vmatprep.subr.mxu0 0.0
    %2015 = vmatpush1.msra.mxu0 0.0
    %2016 = vmatprep.subr.mxu0 0.0
    %2017 = vmatpush1.msra.mxu0 0.0
    %2018 = vmatprep.subr.mxu0 0.0
    %2019 = vmatpush1.msra.mxu0 0.0
    %2020 = vmatprep.mubr.f32.mxu0 0.0
    %2021 = vmatmul.mubr.f32.gmra.mrb[0].mxu0 %v1954
    %v2022 = vpop.f32.mrb[0].mxu0
    %v2023 = vadd.f32 %v1951, %v2022
    %v2024 = vpop.f32.mrb[0].mxu0
    %v2025 = vadd.f32 %v1951, %v2024
    %2026 = vdwg.mxu0
    %2027 = vmatprep.subr.mxu0 %v1885
    %2028 = vmatpush1.msra.mxu0 %v1884
    %2029 = vmatprep.subr.mxu0 %v1901
    %2030 = vmatpush1.msra.mxu0 %v1900
    %2031 = vmatprep.subr.mxu0 %v1917
    %2032 = vmatpush1.msra.mxu0 %v1916
    %2033 = vmatprep.subr.mxu0 %v1933
    %2034 = vmatpush1.msra.mxu0 %v1932
    %2035 = vmatprep.subr.mxu0 0.0
    %2036 = vmatpush1.msra.mxu0 0.0
    %2037 = vmatprep.subr.mxu0 0.0
    %2038 = vmatpush1.msra.mxu0 0.0
    %2039 = vmatprep.subr.mxu0 0.0
    %2040 = vmatpush1.msra.mxu0 0.0
    %2041 = vmatprep.subr.mxu0 0.0
    %2042 = vmatpush1.msra.mxu0 0.0
    %2043 = vmatprep.subr.mxu0 0.0
    %2044 = vmatpush1.msra.mxu0 0.0
    %2045 = vmatprep.subr.mxu0 0.0
    %2046 = vmatpush1.msra.mxu0 0.0
    %2047 = vmatprep.subr.mxu0 0.0
    %2048 = vmatpush1.msra.mxu0 0.0
    %2049 = vmatprep.subr.mxu0 0.0
    %2050 = vmatpush1.msra.mxu0 0.0
    %2051 = vmatprep.subr.mxu0 0.0
    %2052 = vmatpush1.msra.mxu0 0.0
    %2053 = vmatprep.subr.mxu0 0.0
    %2054 = vmatpush1.msra.mxu0 0.0
    %2055 = vmatprep.subr.mxu0 0.0
    %2056 = vmatpush1.msra.mxu0 0.0
    %2057 = vmatprep.subr.mxu0 0.0
    %2058 = vmatpush1.msra.mxu0 0.0
    %2059 = vmatprep.subr.mxu0 0.0
    %2060 = vmatpush1.msra.mxu0 0.0
    %2061 = vmatprep.subr.mxu0 0.0
    %2062 = vmatpush1.msra.mxu0 0.0
    %2063 = vmatprep.subr.mxu0 0.0
    %2064 = vmatpush1.msra.mxu0 0.0
    %2065 = vmatprep.subr.mxu0 0.0
    %2066 = vmatpush1.msra.mxu0 0.0
    %2067 = vmatprep.subr.mxu0 0.0
    %2068 = vmatpush1.msra.mxu0 0.0
    %2069 = vmatprep.subr.mxu0 0.0
    %2070 = vmatpush1.msra.mxu0 0.0
    %2071 = vmatprep.subr.mxu0 0.0
    %2072 = vmatpush1.msra.mxu0 0.0
    %2073 = vmatprep.subr.mxu0 0.0
    %2074 = vmatpush1.msra.mxu0 0.0
    %2075 = vmatprep.subr.mxu0 0.0
    %2076 = vmatpush1.msra.mxu0 0.0
    %2077 = vmatprep.subr.mxu0 0.0
    %2078 = vmatpush1.msra.mxu0 0.0
    %2079 = vmatprep.subr.mxu0 0.0
    %2080 = vmatpush1.msra.mxu0 0.0
    %2081 = vmatprep.subr.mxu0 0.0
    %2082 = vmatpush1.msra.mxu0 0.0
    %2083 = vmatprep.subr.mxu0 0.0
    %2084 = vmatpush1.msra.mxu0 0.0
    %2085 = vmatprep.subr.mxu0 0.0
    %2086 = vmatpush1.msra.mxu0 0.0
    %2087 = vmatprep.subr.mxu0 0.0
    %2088 = vmatpush1.msra.mxu0 0.0
    %2089 = vmatprep.subr.mxu0 0.0
    %2090 = vmatpush1.msra.mxu0 0.0
    %2091 = vmatprep.mubr.f32.mxu0 0.0
    %2092 = vmatmul.mubr.f32.gmra.mrb[0].mxu0 %v1954
    %v2093 = vpop.f32.mrb[0].mxu0
    %v2094 = vadd.f32 %v1951, %v2093
    %v2095 = vpop.f32.mrb[0].mxu0
    %v2096 = vadd.f32 %v1951, %v2095
    %2097 = vdwg.mxu0
    %2098 = vmatprep.subr.mxu0 %v1887
    %2099 = vmatpush1.msra.mxu0 %v1886
    %2100 = vmatprep.subr.mxu0 %v1903
    %2101 = vmatpush1.msra.mxu0 %v1902
    %2102 = vmatprep.subr.mxu0 %v1919
    %2103 = vmatpush1.msra.mxu0 %v1918
    %2104 = vmatprep.subr.mxu0 %v1935
    %2105 = vmatpush1.msra.mxu0 %v1934
    %2106 = vmatprep.subr.mxu0 0.0
    %2107 = vmatpush1.msra.mxu0 0.0
    %2108 = vmatprep.subr.mxu0 0.0
    %2109 = vmatpush1.msra.mxu0 0.0
    %2110 = vmatprep.subr.mxu0 0.0
    %2111 = vmatpush1.msra.mxu0 0.0
    %2112 = vmatprep.subr.mxu0 0.0
    %2113 = vmatpush1.msra.mxu0 0.0
    %2114 = vmatprep.subr.mxu0 0.0
    %2115 = vmatpush1.msra.mxu0 0.0
    %2116 = vmatprep.subr.mxu0 0.0
    %2117 = vmatpush1.msra.mxu0 0.0
    %2118 = vmatprep.subr.mxu0 0.0
    %2119 = vmatpush1.msra.mxu0 0.0
    %2120 = vmatprep.subr.mxu0 0.0
    %2121 = vmatpush1.msra.mxu0 0.0
    %2122 = vmatprep.subr.mxu0 0.0
    %2123 = vmatpush1.msra.mxu0 0.0
    %2124 = vmatprep.subr.mxu0 0.0
    %2125 = vmatpush1.msra.mxu0 0.0
    %2126 = vmatprep.subr.mxu0 0.0
    %2127 = vmatpush1.msra.mxu0 0.0
    %2128 = vmatprep.subr.mxu0 0.0
    %2129 = vmatpush1.msra.mxu0 0.0
    %2130 = vmatprep.subr.mxu0 0.0
    %2131 = vmatpush1.msra.mxu0 0.0
    %2132 = vmatprep.subr.mxu0 0.0
    %2133 = vmatpush1.msra.mxu0 0.0
    %2134 = vmatprep.subr.mxu0 0.0
    %2135 = vmatpush1.msra.mxu0 0.0
    %2136 = vmatprep.subr.mxu0 0.0
    %2137 = vmatpush1.msra.mxu0 0.0
    %2138 = vmatprep.subr.mxu0 0.0
    %2139 = vmatpush1.msra.mxu0 0.0
    %2140 = vmatprep.subr.mxu0 0.0
    %2141 = vmatpush1.msra.mxu0 0.0
    %2142 = vmatprep.subr.mxu0 0.0
    %2143 = vmatpush1.msra.mxu0 0.0
    %2144 = vmatprep.subr.mxu0 0.0
    %2145 = vmatpush1.msra.mxu0 0.0
    %2146 = vmatprep.subr.mxu0 0.0
    %2147 = vmatpush1.msra.mxu0 0.0
    %2148 = vmatprep.subr.mxu0 0.0
    %2149 = vmatpush1.msra.mxu0 0.0
    %2150 = vmatprep.subr.mxu0 0.0
    %2151 = vmatpush1.msra.mxu0 0.0
    %2152 = vmatprep.subr.mxu0 0.0
    %2153 = vmatpush1.msra.mxu0 0.0
    %2154 = vmatprep.subr.mxu0 0.0
    %2155 = vmatpush1.msra.mxu0 0.0
    %2156 = vmatprep.subr.mxu0 0.0
    %2157 = vmatpush1.msra.mxu0 0.0
    %2158 = vmatprep.subr.mxu0 0.0
    %2159 = vmatpush1.msra.mxu0 0.0
    %2160 = vmatprep.subr.mxu0 0.0
    %2161 = vmatpush1.msra.mxu0 0.0
    %2162 = vmatprep.mubr.f32.mxu0 0.0
    %2163 = vmatmul.mubr.f32.gmra.mrb[0].mxu0 %v1954
    %v2164 = vpop.f32.mrb[0].mxu0
    %v2165 = vadd.f32 %v1951, %v2164
    %v2166 = vpop.f32.mrb[0].mxu0
    %v2167 = vadd.f32 %v1951, %v2166
    %2168 = vdwg.mxu0
    %2169 = vmatprep.subr.mxu0 %v1889
    %2170 = vmatpush1.msra.mxu0 %v1888
    %2171 = vmatprep.subr.mxu0 %v1905
    %2172 = vmatpush1.msra.mxu0 %v1904
    %2173 = vmatprep.subr.mxu0 %v1921
    %2174 = vmatpush1.msra.mxu0 %v1920
    %2175 = vmatprep.subr.mxu0 %v1937
    %2176 = vmatpush1.msra.mxu0 %v1936
    %2177 = vmatprep.subr.mxu0 0.0
    %2178 = vmatpush1.msra.mxu0 0.0
    %2179 = vmatprep.subr.mxu0 0.0
    %2180 = vmatpush1.msra.mxu0 0.0
    %2181 = vmatprep.subr.mxu0 0.0
    %2182 = vmatpush1.msra.mxu0 0.0
    %2183 = vmatprep.subr.mxu0 0.0
    %2184 = vmatpush1.msra.mxu0 0.0
    %2185 = vmatprep.subr.mxu0 0.0
    %2186 = vmatpush1.msra.mxu0 0.0
    %2187 = vmatprep.subr.mxu0 0.0
    %2188 = vmatpush1.msra.mxu0 0.0
    %2189 = vmatprep.subr.mxu0 0.0
    %2190 = vmatpush1.msra.mxu0 0.0
    %2191 = vmatprep.subr.mxu0 0.0
    %2192 = vmatpush1.msra.mxu0 0.0
    %2193 = vmatprep.subr.mxu0 0.0
    %2194 = vmatpush1.msra.mxu0 0.0
    %2195 = vmatprep.subr.mxu0 0.0
    %2196 = vmatpush1.msra.mxu0 0.0
    %2197 = vmatprep.subr.mxu0 0.0
    %2198 = vmatpush1.msra.mxu0 0.0
    %2199 = vmatprep.subr.mxu0 0.0
    %2200 = vmatpush1.msra.mxu0 0.0
    %2201 = vmatprep.subr.mxu0 0.0
    %2202 = vmatpush1.msra.mxu0 0.0
    %2203 = vmatprep.subr.mxu0 0.0
    %2204 = vmatpush1.msra.mxu0 0.0
    %2205 = vmatprep.subr.mxu0 0.0
    %2206 = vmatpush1.msra.mxu0 0.0
    %2207 = vmatprep.subr.mxu0 0.0
    %2208 = vmatpush1.msra.mxu0 0.0
    %2209 = vmatprep.subr.mxu0 0.0
    %2210 = vmatpush1.msra.mxu0 0.0
    %2211 = vmatprep.subr.mxu0 0.0
    %2212 = vmatpush1.msra.mxu0 0.0
    %2213 = vmatprep.subr.mxu0 0.0
    %2214 = vmatpush1.msra.mxu0 0.0
    %2215 = vmatprep.subr.mxu0 0.0
    %2216 = vmatpush1.msra.mxu0 0.0
    %2217 = vmatprep.subr.mxu0 0.0
    %2218 = vmatpush1.msra.mxu0 0.0
    %2219 = vmatprep.subr.mxu0 0.0
    %2220 = vmatpush1.msra.mxu0 0.0
    %2221 = vmatprep.subr.mxu0 0.0
    %2222 = vmatpush1.msra.mxu0 0.0
    %2223 = vmatprep.subr.mxu0 0.0
    %2224 = vmatpush1.msra.mxu0 0.0
    %2225 = vmatprep.subr.mxu0 0.0
    %2226 = vmatpush1.msra.mxu0 0.0
    %2227 = vmatprep.subr.mxu0 0.0
    %2228 = vmatpush1.msra.mxu0 0.0
    %2229 = vmatprep.subr.mxu0 0.0
    %2230 = vmatpush1.msra.mxu0 0.0
    %2231 = vmatprep.subr.mxu0 0.0
    %2232 = vmatpush1.msra.mxu0 0.0
    %2233 = vmatprep.mubr.f32.mxu0 0.0
    %2234 = vmatmul.mubr.f32.gmra.mrb[0].mxu0 %v1954
    %v2235 = vpop.f32.mrb[0].mxu0
    %v2236 = vadd.f32 %v1951, %v2235
    %v2237 = vpop.f32.mrb[0].mxu0
    %v2238 = vadd.f32 %v1951, %v2237
    %2239 = vdwg.mxu0
    %2240 = vmatprep.subr.mxu0 %v1891
    %2241 = vmatpush1.msra.mxu0 %v1890
    %2242 = vmatprep.subr.mxu0 %v1907
    %2243 = vmatpush1.msra.mxu0 %v1906
    %2244 = vmatprep.subr.mxu0 %v1923
    %2245 = vmatpush1.msra.mxu0 %v1922
    %2246 = vmatprep.subr.mxu0 %v1939
    %2247 = vmatpush1.msra.mxu0 %v1938
    %2248 = vmatprep.subr.mxu0 0.0
    %2249 = vmatpush1.msra.mxu0 0.0
    %2250 = vmatprep.subr.mxu0 0.0
    %2251 = vmatpush1.msra.mxu0 0.0
    %2252 = vmatprep.subr.mxu0 0.0
    %2253 = vmatpush1.msra.mxu0 0.0
    %2254 = vmatprep.subr.mxu0 0.0
    %2255 = vmatpush1.msra.mxu0 0.0
    %2256 = vmatprep.subr.mxu0 0.0
    %2257 = vmatpush1.msra.mxu0 0.0
    %2258 = vmatprep.subr.mxu0 0.0
    %2259 = vmatpush1.msra.mxu0 0.0
    %2260 = vmatprep.subr.mxu0 0.0
    %2261 = vmatpush1.msra.mxu0 0.0
    %2262 = vmatprep.subr.mxu0 0.0
    %2263 = vmatpush1.msra.mxu0 0.0
    %2264 = vmatprep.subr.mxu0 0.0
    %2265 = vmatpush1.msra.mxu0 0.0
    %2266 = vmatprep.subr.mxu0 0.0
    %2267 = vmatpush1.msra.mxu0 0.0
    %2268 = vmatprep.subr.mxu0 0.0
    %2269 = vmatpush1.msra.mxu0 0.0
    %2270 = vmatprep.subr.mxu0 0.0
    %2271 = vmatpush1.msra.mxu0 0.0
    %2272 = vmatprep.subr.mxu0 0.0
    %2273 = vmatpush1.msra.mxu0 0.0
    %2274 = vmatprep.subr.mxu0 0.0
    %2275 = vmatpush1.msra.mxu0 0.0
    %2276 = vmatprep.subr.mxu0 0.0
    %2277 = vmatpush1.msra.mxu0 0.0
    %2278 = vmatprep.subr.mxu0 0.0
    %2279 = vmatpush1.msra.mxu0 0.0
    %2280 = vmatprep.subr.mxu0 0.0
    %2281 = vmatpush1.msra.mxu0 0.0
    %2282 = vmatprep.subr.mxu0 0.0
    %2283 = vmatpush1.msra.mxu0 0.0
    %2284 = vmatprep.subr.mxu0 0.0
    %2285 = vmatpush1.msra.mxu0 0.0
    %2286 = vmatprep.subr.mxu0 0.0
    %2287 = vmatpush1.msra.mxu0 0.0
    %2288 = vmatprep.subr.mxu0 0.0
    %2289 = vmatpush1.msra.mxu0 0.0
    %2290 = vmatprep.subr.mxu0 0.0
    %2291 = vmatpush1.msra.mxu0 0.0
    %2292 = vmatprep.subr.mxu0 0.0
    %2293 = vmatpush1.msra.mxu0 0.0
    %2294 = vmatprep.subr.mxu0 0.0
    %2295 = vmatpush1.msra.mxu0 0.0
    %2296 = vmatprep.subr.mxu0 0.0
    %2297 = vmatpush1.msra.mxu0 0.0
    %2298 = vmatprep.subr.mxu0 0.0
    %2299 = vmatpush1.msra.mxu0 0.0
    %2300 = vmatprep.subr.mxu0 0.0
    %2301 = vmatpush1.msra.mxu0 0.0
    %2302 = vmatprep.subr.mxu0 0.0
    %2303 = vmatpush1.msra.mxu0 0.0
    %2304 = vmatprep.mubr.f32.mxu0 0.0
    %2305 = vmatmul.mubr.f32.gmra.mrb[0].mxu0 %v1954
    %v2306 = vpop.f32.mrb[0].mxu0
    %v2307 = vadd.f32 %v1951, %v2306
    %v2308 = vpop.f32.mrb[0].mxu0
    %v2309 = vadd.f32 %v1951, %v2308
    %2310 = vdwg.mxu0
    %2311 = vmatprep.subr.mxu0 %v1893
    %2312 = vmatpush1.msra.mxu0 %v1892
    %2313 = vmatprep.subr.mxu0 %v1909
    %2314 = vmatpush1.msra.mxu0 %v1908
    %2315 = vmatprep.subr.mxu0 %v1925
    %2316 = vmatpush1.msra.mxu0 %v1924
    %2317 = vmatprep.subr.mxu0 %v1941
    %2318 = vmatpush1.msra.mxu0 %v1940
    %2319 = vmatprep.subr.mxu0 0.0
    %2320 = vmatpush1.msra.mxu0 0.0
    %2321 = vmatprep.subr.mxu0 0.0
    %2322 = vmatpush1.msra.mxu0 0.0
    %2323 = vmatprep.subr.mxu0 0.0
    %2324 = vmatpush1.msra.mxu0 0.0
    %2325 = vmatprep.subr.mxu0 0.0
    %2326 = vmatpush1.msra.mxu0 0.0
    %2327 = vmatprep.subr.mxu0 0.0
    %2328 = vmatpush1.msra.mxu0 0.0
    %2329 = vmatprep.subr.mxu0 0.0
    %2330 = vmatpush1.msra.mxu0 0.0
    %2331 = vmatprep.subr.mxu0 0.0
    %2332 = vmatpush1.msra.mxu0 0.0
    %2333 = vmatprep.subr.mxu0 0.0
    %2334 = vmatpush1.msra.mxu0 0.0
    %2335 = vmatprep.subr.mxu0 0.0
    %2336 = vmatpush1.msra.mxu0 0.0
    %2337 = vmatprep.subr.mxu0 0.0
    %2338 = vmatpush1.msra.mxu0 0.0
    %2339 = vmatprep.subr.mxu0 0.0
    %2340 = vmatpush1.msra.mxu0 0.0
    %2341 = vmatprep.subr.mxu0 0.0
    %2342 = vmatpush1.msra.mxu0 0.0
    %2343 = vmatprep.subr.mxu0 0.0
    %2344 = vmatpush1.msra.mxu0 0.0
    %2345 = vmatprep.subr.mxu0 0.0
    %2346 = vmatpush1.msra.mxu0 0.0
    %2347 = vmatprep.subr.mxu0 0.0
    %2348 = vmatpush1.msra.mxu0 0.0
    %2349 = vmatprep.subr.mxu0 0.0
    %2350 = vmatpush1.msra.mxu0 0.0
    %2351 = vmatprep.subr.mxu0 0.0
    %2352 = vmatpush1.msra.mxu0 0.0
    %2353 = vmatprep.subr.mxu0 0.0
    %2354 = vmatpush1.msra.mxu0 0.0
    %2355 = vmatprep.subr.mxu0 0.0
    %2356 = vmatpush1.msra.mxu0 0.0
    %2357 = vmatprep.subr.mxu0 0.0
    %2358 = vmatpush1.msra.mxu0 0.0
    %2359 = vmatprep.subr.mxu0 0.0
    %2360 = vmatpush1.msra.mxu0 0.0
    %2361 = vmatprep.subr.mxu0 0.0
    %2362 = vmatpush1.msra.mxu0 0.0
    %2363 = vmatprep.subr.mxu0 0.0
    %2364 = vmatpush1.msra.mxu0 0.0
    %2365 = vmatprep.subr.mxu0 0.0
    %2366 = vmatpush1.msra.mxu0 0.0
    %2367 = vmatprep.subr.mxu0 0.0
    %2368 = vmatpush1.msra.mxu0 0.0
    %2369 = vmatprep.subr.mxu0 0.0
    %2370 = vmatpush1.msra.mxu0 0.0
    %2371 = vmatprep.subr.mxu0 0.0
    %2372 = vmatpush1.msra.mxu0 0.0
    %2373 = vmatprep.subr.mxu0 0.0
    %2374 = vmatpush1.msra.mxu0 0.0
    %2375 = vmatprep.mubr.f32.mxu0 0.0
    %2376 = vmatmul.mubr.f32.gmra.mrb[0].mxu0 %v1954
    %v2377 = vpop.f32.mrb[0].mxu0
    %v2378 = vadd.f32 %v1951, %v2377
    %v2379 = vpop.f32.mrb[0].mxu0
    %v2380 = vadd.f32 %v1951, %v2379
    %2381 = vdwg.mxu0
    %2382 = vmatprep.subr.mxu0 %v1895
    %2383 = vmatpush1.msra.mxu0 %v1894
    %2384 = vmatprep.subr.mxu0 %v1911
    %2385 = vmatpush1.msra.mxu0 %v1910
    %2386 = vmatprep.subr.mxu0 %v1927
    %2387 = vmatpush1.msra.mxu0 %v1926
    %2388 = vmatprep.subr.mxu0 %v1943
    %2389 = vmatpush1.msra.mxu0 %v1942
    %2390 = vmatprep.subr.mxu0 0.0
    %2391 = vmatpush1.msra.mxu0 0.0
    %2392 = vmatprep.subr.mxu0 0.0
    %2393 = vmatpush1.msra.mxu0 0.0
    %2394 = vmatprep.subr.mxu0 0.0
    %2395 = vmatpush1.msra.mxu0 0.0
    %2396 = vmatprep.subr.mxu0 0.0
    %2397 = vmatpush1.msra.mxu0 0.0
    %2398 = vmatprep.subr.mxu0 0.0
    %2399 = vmatpush1.msra.mxu0 0.0
    %2400 = vmatprep.subr.mxu0 0.0
    %2401 = vmatpush1.msra.mxu0 0.0
    %2402 = vmatprep.subr.mxu0 0.0
    %2403 = vmatpush1.msra.mxu0 0.0
    %2404 = vmatprep.subr.mxu0 0.0
    %2405 = vmatpush1.msra.mxu0 0.0
    %2406 = vmatprep.subr.mxu0 0.0
    %2407 = vmatpush1.msra.mxu0 0.0
    %2408 = vmatprep.subr.mxu0 0.0
    %2409 = vmatpush1.msra.mxu0 0.0
    %2410 = vmatprep.subr.mxu0 0.0
    %2411 = vmatpush1.msra.mxu0 0.0
    %2412 = vmatprep.subr.mxu0 0.0
    %2413 = vmatpush1.msra.mxu0 0.0
    %2414 = vmatprep.subr.mxu0 0.0
    %2415 = vmatpush1.msra.mxu0 0.0
    %2416 = vmatprep.subr.mxu0 0.0
    %2417 = vmatpush1.msra.mxu0 0.0
    %2418 = vmatprep.subr.mxu0 0.0
    %2419 = vmatpush1.msra.mxu0 0.0
    %2420 = vmatprep.subr.mxu0 0.0
    %2421 = vmatpush1.msra.mxu0 0.0
    %2422 = vmatprep.subr.mxu0 0.0
    %2423 = vmatpush1.msra.mxu0 0.0
    %2424 = vmatprep.subr.mxu0 0.0
    %2425 = vmatpush1.msra.mxu0 0.0
    %2426 = vmatprep.subr.mxu0 0.0
    %2427 = vmatpush1.msra.mxu0 0.0
    %2428 = vmatprep.subr.mxu0 0.0
    %2429 = vmatpush1.msra.mxu0 0.0
    %2430 = vmatprep.subr.mxu0 0.0
    %2431 = vmatpush1.msra.mxu0 0.0
    %2432 = vmatprep.subr.mxu0 0.0
    %2433 = vmatpush1.msra.mxu0 0.0
    %2434 = vmatprep.subr.mxu0 0.0
    %2435 = vmatpush1.msra.mxu0 0.0
    %2436 = vmatprep.subr.mxu0 0.0
    %2437 = vmatpush1.msra.mxu0 0.0
    %2438 = vmatprep.subr.mxu0 0.0
    %2439 = vmatpush1.msra.mxu0 0.0
    %2440 = vmatprep.subr.mxu0 0.0
    %2441 = vmatpush1.msra.mxu0 0.0
    %2442 = vmatprep.subr.mxu0 0.0
    %2443 = vmatpush1.msra.mxu0 0.0
    %2444 = vmatprep.subr.mxu0 0.0
    %2445 = vmatpush1.msra.mxu0 0.0
    %2446 = vmatprep.mubr.f32.mxu0 0.0
    %2447 = vmatmul.mubr.f32.gmra.mrb[0].mxu0 %v1954
    %v2448 = vpop.f32.mrb[0].mxu0
    %v2449 = vadd.f32 %v1951, %v2448
    %v2450 = vpop.f32.mrb[0].mxu0
    %v2451 = vadd.f32 %v1951, %v2450
    %2452 = vdwg.mxu0
    %2453 = vmatprep.subr.mxu0 %v1897
    %2454 = vmatpush1.msra.mxu0 %v1896
    %2455 = vmatprep.subr.mxu0 %v1913
    %2456 = vmatpush1.msra.mxu0 %v1912
    %2457 = vmatprep.subr.mxu0 %v1929
    %2458 = vmatpush1.msra.mxu0 %v1928
    %2459 = vmatprep.subr.mxu0 %v1945
    %2460 = vmatpush1.msra.mxu0 %v1944
    %2461 = vmatprep.subr.mxu0 0.0
    %2462 = vmatpush1.msra.mxu0 0.0
    %2463 = vmatprep.subr.mxu0 0.0
    %2464 = vmatpush1.msra.mxu0 0.0
    %2465 = vmatprep.subr.mxu0 0.0
    %2466 = vmatpush1.msra.mxu0 0.0
    %2467 = vmatprep.subr.mxu0 0.0
    %2468 = vmatpush1.msra.mxu0 0.0
    %2469 = vmatprep.subr.mxu0 0.0
    %2470 = vmatpush1.msra.mxu0 0.0
    %2471 = vmatprep.subr.mxu0 0.0
    %2472 = vmatpush1.msra.mxu0 0.0
    %2473 = vmatprep.subr.mxu0 0.0
    %2474 = vmatpush1.msra.mxu0 0.0
    %2475 = vmatprep.subr.mxu0 0.0
    %2476 = vmatpush1.msra.mxu0 0.0
    %2477 = vmatprep.subr.mxu0 0.0
    %2478 = vmatpush1.msra.mxu0 0.0
    %2479 = vmatprep.subr.mxu0 0.0
    %2480 = vmatpush1.msra.mxu0 0.0
    %2481 = vmatprep.subr.mxu0 0.0
    %2482 = vmatpush1.msra.mxu0 0.0
    %2483 = vmatprep.subr.mxu0 0.0
    %2484 = vmatpush1.msra.mxu0 0.0
    %2485 = vmatprep.subr.mxu0 0.0
    %2486 = vmatpush1.msra.mxu0 0.0
    %2487 = vmatprep.subr.mxu0 0.0
    %2488 = vmatpush1.msra.mxu0 0.0
    %2489 = vmatprep.subr.mxu0 0.0
    %2490 = vmatpush1.msra.mxu0 0.0
    %2491 = vmatprep.subr.mxu0 0.0
    %2492 = vmatpush1.msra.mxu0 0.0
    %2493 = vmatprep.subr.mxu0 0.0
    %2494 = vmatpush1.msra.mxu0 0.0
    %2495 = vmatprep.subr.mxu0 0.0
    %2496 = vmatpush1.msra.mxu0 0.0
    %2497 = vmatprep.subr.mxu0 0.0
    %2498 = vmatpush1.msra.mxu0 0.0
    %2499 = vmatprep.subr.mxu0 0.0
    %2500 = vmatpush1.msra.mxu0 0.0
    %2501 = vmatprep.subr.mxu0 0.0
    %2502 = vmatpush1.msra.mxu0 0.0
    %2503 = vmatprep.subr.mxu0 0.0
    %2504 = vmatpush1.msra.mxu0 0.0
    %2505 = vmatprep.subr.mxu0 0.0
    %2506 = vmatpush1.msra.mxu0 0.0
    %2507 = vmatprep.subr.mxu0 0.0
    %2508 = vmatpush1.msra.mxu0 0.0
    %2509 = vmatprep.subr.mxu0 0.0
    %2510 = vmatpush1.msra.mxu0 0.0
    %2511 = vmatprep.subr.mxu0 0.0
    %2512 = vmatpush1.msra.mxu0 0.0
    %2513 = vmatprep.subr.mxu0 0.0
    %2514 = vmatpush1.msra.mxu0 0.0
    %2515 = vmatprep.subr.mxu0 0.0
    %2516 = vmatpush1.msra.mxu0 0.0
    %2517 = vmatprep.mubr.f32.mxu0 0.0
    %2518 = vmatmul.mubr.f32.gmra.mrb[0].mxu0 %v1954
    %v2519 = vpop.f32.mrb[0].mxu0
    %v2520 = vadd.f32 %v1951, %v2519
    %v2521 = vpop.f32.mrb[0].mxu0
    %v2522 = vadd.f32 %v1951, %v2521
    %2523 = vdwg.mxu0
    %v2524 = vmul.f32 %v2023, %v1611
    %v2525 = vmul.f32 %v2025, %v1613
    %v2526 = vmul.f32 %v2094, %v1615
    %v2527 = vmul.f32 %v2096, %v1617
    %v2528 = vmul.f32 %v2165, %v1619
    %v2529 = vmul.f32 %v2167, %v1621
    %v2530 = vmul.f32 %v2236, %v1623
    %v2531 = vmul.f32 %v2238, %v1625
    %v2532 = vmul.f32 %v2307, %v1627
    %v2533 = vmul.f32 %v2309, %v1629
    %v2534 = vmul.f32 %v2378, %v1631
    %v2535 = vmul.f32 %v2380, %v1633
    %v2536 = vmul.f32 %v2449, %v1635
    %v2537 = vmul.f32 %v2451, %v1637
    %v2538 = vmul.f32 %v2520, %v1639
    %v2539 = vmul.f32 %v2522, %v1641
    %v2556 = vrot.slane %v2023, 1
    %v2557 = vrot.slane %v2025, 1
    %v2558 = vrot.slane %v2094, 1
    %v2559 = vrot.slane %v2096, 1
    %v2560 = vrot.slane %v2165, 1
    %v2561 = vrot.slane %v2167, 1
    %v2562 = vrot.slane %v2236, 1
    %v2563 = vrot.slane %v2238, 1
    %v2564 = vrot.slane %v2307, 1
    %v2565 = vrot.slane %v2309, 1
    %v2566 = vrot.slane %v2378, 1
    %v2567 = vrot.slane %v2380, 1
    %v2568 = vrot.slane %v2449, 1
    %v2569 = vrot.slane %v2451, 1
    %v2570 = vrot.slane %v2520, 1
    %v2571 = vrot.slane %v2522, 1
    %v2588 = vadd.f32 %v2524, %v2556
    %v2589 = vadd.f32 %v2525, %v2557
    %v2590 = vadd.f32 %v2526, %v2558
    %v2591 = vadd.f32 %v2527, %v2559
    %v2592 = vadd.f32 %v2528, %v2560
    %v2593 = vadd.f32 %v2529, %v2561
    %v2594 = vadd.f32 %v2530, %v2562
    %v2595 = vadd.f32 %v2531, %v2563
    %v2596 = vadd.f32 %v2532, %v2564
    %v2597 = vadd.f32 %v2533, %v2565
    %v2598 = vadd.f32 %v2534, %v2566
    %v2599 = vadd.f32 %v2535, %v2567
    %v2600 = vadd.f32 %v2536, %v2568
    %v2601 = vadd.f32 %v2537, %v2569
    %v2602 = vadd.f32 %v2538, %v2570
    %v2603 = vadd.f32 %v2539, %v2571
    %v2604 = vand.u32 2147483647, %v2588
    %v2605 = vand.u32 2147483647, %v2589
    %v2606 = vand.u32 2147483647, %v2590
    %v2607 = vand.u32 2147483647, %v2591
    %v2608 = vand.u32 2147483647, %v2592
    %v2609 = vand.u32 2147483647, %v2593
    %v2610 = vand.u32 2147483647, %v2594
    %v2611 = vand.u32 2147483647, %v2595
    %v2612 = vand.u32 2147483647, %v2596
    %v2613 = vand.u32 2147483647, %v2597
    %v2614 = vand.u32 2147483647, %v2598
    %v2615 = vand.u32 2147483647, %v2599
    %v2616 = vand.u32 2147483647, %v2600
    %v2617 = vand.u32 2147483647, %v2601
    %v2618 = vand.u32 2147483647, %v2602
    %v2619 = vand.u32 2147483647, %v2603
    %v2620 = vsub.f32 0.0, %v2604
    %v2621 = vsub.f32 0.0, %v2605
    %v2622 = vsub.f32 0.0, %v2606
    %v2623 = vsub.f32 0.0, %v2607
    %v2624 = vsub.f32 0.0, %v2608
    %v2625 = vsub.f32 0.0, %v2609
    %v2626 = vsub.f32 0.0, %v2610
    %v2627 = vsub.f32 0.0, %v2611
    %v2628 = vsub.f32 0.0, %v2612
    %v2629 = vsub.f32 0.0, %v2613
    %v2630 = vsub.f32 0.0, %v2614
    %v2631 = vsub.f32 0.0, %v2615
    %v2632 = vsub.f32 0.0, %v2616
    %v2633 = vsub.f32 0.0, %v2617
    %v2634 = vsub.f32 0.0, %v2618
    %v2635 = vsub.f32 0.0, %v2619
    %v2636 = vmul.f32 %v2620, 1.442695
    %v2637 = vpow.pop %v2636
    %v2638 = vmul.f32 %v2621, 1.442695
    %v2639 = vpow.pop %v2638
    %v2640 = vmul.f32 %v2622, 1.442695
    %v2641 = vpow.pop %v2640
    %v2642 = vmul.f32 %v2623, 1.442695
    %v2643 = vpow.pop %v2642
    %v2644 = vmul.f32 %v2624, 1.442695
    %v2645 = vpow.pop %v2644
    %v2646 = vmul.f32 %v2625, 1.442695
    %v2647 = vpow.pop %v2646
    %v2648 = vmul.f32 %v2626, 1.442695
    %v2649 = vpow.pop %v2648
    %v2650 = vmul.f32 %v2627, 1.442695
    %v2651 = vpow.pop %v2650
    %v2652 = vmul.f32 %v2628, 1.442695
    %v2653 = vpow.pop %v2652
    %v2654 = vmul.f32 %v2629, 1.442695
    %v2655 = vpow.pop %v2654
    %v2656 = vmul.f32 %v2630, 1.442695
    %v2657 = vpow.pop %v2656
    %v2658 = vmul.f32 %v2631, 1.442695
    %v2659 = vpow.pop %v2658
    %v2660 = vmul.f32 %v2632, 1.442695
    %v2661 = vpow.pop %v2660
    %v2662 = vmul.f32 %v2633, 1.442695
    %v2663 = vpow.pop %v2662
    %v2664 = vmul.f32 %v2634, 1.442695
    %v2665 = vpow.pop %v2664
    %v2666 = vmul.f32 %v2635, 1.442695
    %v2667 = vpow.pop %v2666
    %v2668 = vadd.f32 %v2637, 1.0
    %v2669 = vadd.f32 %v2639, 1.0
    %v2670 = vadd.f32 %v2641, 1.0
    %v2671 = vadd.f32 %v2643, 1.0
    %v2672 = vadd.f32 %v2645, 1.0
    %v2673 = vadd.f32 %v2647, 1.0
    %v2674 = vadd.f32 %v2649, 1.0
    %v2675 = vadd.f32 %v2651, 1.0
    %v2676 = vadd.f32 %v2653, 1.0
    %v2677 = vadd.f32 %v2655, 1.0
    %v2678 = vadd.f32 %v2657, 1.0
    %v2679 = vadd.f32 %v2659, 1.0
    %v2680 = vadd.f32 %v2661, 1.0
    %v2681 = vadd.f32 %v2663, 1.0
    %v2682 = vadd.f32 %v2665, 1.0
    %v2683 = vadd.f32 %v2667, 1.0
    %v2684 = vrcp.pop %v2668
    %v2685 = vrcp.pop %v2669
    %v2686 = vrcp.pop %v2670
    %v2687 = vrcp.pop %v2671
    %v2688 = vrcp.pop %v2672
    %v2689 = vrcp.pop %v2673
    %v2690 = vrcp.pop %v2674
    %v2691 = vrcp.pop %v2675
    %v2692 = vrcp.pop %v2676
    %v2693 = vrcp.pop %v2677
    %v2694 = vrcp.pop %v2678
    %v2695 = vrcp.pop %v2679
    %v2696 = vrcp.pop %v2680
    %v2697 = vrcp.pop %v2681
    %v2698 = vrcp.pop %v2682
    %v2699 = vrcp.pop %v2683
    %vm2700 = vcmp.ge.f32.partialorder %v2588, 0.0
    %vm2701 = vcmp.ge.f32.partialorder %v2589, 0.0
    %vm2702 = vcmp.ge.f32.partialorder %v2590, 0.0
    %vm2703 = vcmp.ge.f32.partialorder %v2591, 0.0
    %vm2704 = vcmp.ge.f32.partialorder %v2592, 0.0
    %vm2705 = vcmp.ge.f32.partialorder %v2593, 0.0
    %vm2706 = vcmp.ge.f32.partialorder %v2594, 0.0
    %vm2707 = vcmp.ge.f32.partialorder %v2595, 0.0
    %vm2708 = vcmp.ge.f32.partialorder %v2596, 0.0
    %vm2709 = vcmp.ge.f32.partialorder %v2597, 0.0
    %vm2710 = vcmp.ge.f32.partialorder %v2598, 0.0
    %vm2711 = vcmp.ge.f32.partialorder %v2599, 0.0
    %vm2712 = vcmp.ge.f32.partialorder %v2600, 0.0
    %vm2713 = vcmp.ge.f32.partialorder %v2601, 0.0
    %vm2714 = vcmp.ge.f32.partialorder %v2602, 0.0
    %vm2715 = vcmp.ge.f32.partialorder %v2603, 0.0
    %v2716 = vsub.f32 1.0, %v2684
    %v2717 = vsub.f32 1.0, %v2685
    %v2718 = vsub.f32 1.0, %v2686
    %v2719 = vsub.f32 1.0, %v2687
    %v2720 = vsub.f32 1.0, %v2688
    %v2721 = vsub.f32 1.0, %v2689
    %v2722 = vsub.f32 1.0, %v2690
    %v2723 = vsub.f32 1.0, %v2691
    %v2724 = vsub.f32 1.0, %v2692
    %v2725 = vsub.f32 1.0, %v2693
    %v2726 = vsub.f32 1.0, %v2694
    %v2727 = vsub.f32 1.0, %v2695
    %v2728 = vsub.f32 1.0, %v2696
    %v2729 = vsub.f32 1.0, %v2697
    %v2730 = vsub.f32 1.0, %v2698
    %v2731 = vsub.f32 1.0, %v2699
    %v2732 = vsel %vm2700, %v2684, %v2716
    %v2733 = vsel %vm2701, %v2685, %v2717
    %v2734 = vsel %vm2702, %v2686, %v2718
    %v2735 = vsel %vm2703, %v2687, %v2719
    %v2736 = vsel %vm2704, %v2688, %v2720
    %v2737 = vsel %vm2705, %v2689, %v2721
    %v2738 = vsel %vm2706, %v2690, %v2722
    %v2739 = vsel %vm2707, %v2691, %v2723
    %v2740 = vsel %vm2708, %v2692, %v2724
    %v2741 = vsel %vm2709, %v2693, %v2725
    %v2742 = vsel %vm2710, %v2694, %v2726
    %v2743 = vsel %vm2711, %v2695, %v2727
    %v2744 = vsel %vm2712, %v2696, %v2728
    %v2745 = vsel %vm2713, %v2697, %v2729
    %v2746 = vsel %vm2714, %v2698, %v2730
    %v2747 = vsel %vm2715, %v2699, %v2731
    %v2748 = vand.u32 2147483647, %v2023
    %v2749 = vand.u32 2147483647, %v2025
    %v2750 = vand.u32 2147483647, %v2094
    %v2751 = vand.u32 2147483647, %v2096
    %v2752 = vand.u32 2147483647, %v2165
    %v2753 = vand.u32 2147483647, %v2167
    %v2754 = vand.u32 2147483647, %v2236
    %v2755 = vand.u32 2147483647, %v2238
    %v2756 = vand.u32 2147483647, %v2307
    %v2757 = vand.u32 2147483647, %v2309
    %v2758 = vand.u32 2147483647, %v2378
    %v2759 = vand.u32 2147483647, %v2380
    %v2760 = vand.u32 2147483647, %v2449
    %v2761 = vand.u32 2147483647, %v2451
    %v2762 = vand.u32 2147483647, %v2520
    %v2763 = vand.u32 2147483647, %v2522
    %v2764 = vmul.f32 %v2748, %v2684
    %v2765 = vmul.f32 %v2749, %v2685
    %v2766 = vmul.f32 %v2750, %v2686
    %v2767 = vmul.f32 %v2751, %v2687
    %v2768 = vmul.f32 %v2752, %v2688
    %v2769 = vmul.f32 %v2753, %v2689
    %v2770 = vmul.f32 %v2754, %v2690
    %v2771 = vmul.f32 %v2755, %v2691
    %v2772 = vmul.f32 %v2756, %v2692
    %v2773 = vmul.f32 %v2757, %v2693
    %v2774 = vmul.f32 %v2758, %v2694
    %v2775 = vmul.f32 %v2759, %v2695
    %v2776 = vmul.f32 %v2760, %v2696
    %v2777 = vmul.f32 %v2761, %v2697
    %v2778 = vmul.f32 %v2762, %v2698
    %v2779 = vmul.f32 %v2763, %v2699
    %v2780 = vmul.f32 %v2764, %v2684
    %v2781 = vmul.f32 %v2765, %v2685
    %v2782 = vmul.f32 %v2766, %v2686
    %v2783 = vmul.f32 %v2767, %v2687
    %v2784 = vmul.f32 %v2768, %v2688
    %v2785 = vmul.f32 %v2769, %v2689
    %v2786 = vmul.f32 %v2770, %v2690
    %v2787 = vmul.f32 %v2771, %v2691
    %v2788 = vmul.f32 %v2772, %v2692
    %v2789 = vmul.f32 %v2773, %v2693
    %v2790 = vmul.f32 %v2774, %v2694
    %v2791 = vmul.f32 %v2775, %v2695
    %v2792 = vmul.f32 %v2776, %v2696
    %v2793 = vmul.f32 %v2777, %v2697
    %v2794 = vmul.f32 %v2778, %v2698
    %v2795 = vmul.f32 %v2779, %v2699
    %v2796 = vlog2.pop %v2780
    %v2797 = vmul.f32 %v2796, 0.6931472
    %v2798 = vlog2.pop %v2781
    %v2799 = vmul.f32 %v2798, 0.6931472
    %v2800 = vlog2.pop %v2782
    %v2801 = vmul.f32 %v2800, 0.6931472
    %v2802 = vlog2.pop %v2783
    %v2803 = vmul.f32 %v2802, 0.6931472
    %v2804 = vlog2.pop %v2784
    %v2805 = vmul.f32 %v2804, 0.6931472
    %v2806 = vlog2.pop %v2785
    %v2807 = vmul.f32 %v2806, 0.6931472
    %v2808 = vlog2.pop %v2786
    %v2809 = vmul.f32 %v2808, 0.6931472
    %v2810 = vlog2.pop %v2787
    %v2811 = vmul.f32 %v2810, 0.6931472
    %v2812 = vlog2.pop %v2788
    %v2813 = vmul.f32 %v2812, 0.6931472
    %v2814 = vlog2.pop %v2789
    %v2815 = vmul.f32 %v2814, 0.6931472
    %v2816 = vlog2.pop %v2790
    %v2817 = vmul.f32 %v2816, 0.6931472
    %v2818 = vlog2.pop %v2791
    %v2819 = vmul.f32 %v2818, 0.6931472
    %v2820 = vlog2.pop %v2792
    %v2821 = vmul.f32 %v2820, 0.6931472
    %v2822 = vlog2.pop %v2793
    %v2823 = vmul.f32 %v2822, 0.6931472
    %v2824 = vlog2.pop %v2794
    %v2825 = vmul.f32 %v2824, 0.6931472
    %v2826 = vlog2.pop %v2795
    %v2827 = vmul.f32 %v2826, 0.6931472
    %v2828 = vsub.f32 %v2797, %v2604
    %v2829 = vsub.f32 %v2799, %v2605
    %v2830 = vsub.f32 %v2801, %v2606
    %v2831 = vsub.f32 %v2803, %v2607
    %v2832 = vsub.f32 %v2805, %v2608
    %v2833 = vsub.f32 %v2807, %v2609
    %v2834 = vsub.f32 %v2809, %v2610
    %v2835 = vsub.f32 %v2811, %v2611
    %v2836 = vsub.f32 %v2813, %v2612
    %v2837 = vsub.f32 %v2815, %v2613
    %v2838 = vsub.f32 %v2817, %v2614
    %v2839 = vsub.f32 %v2819, %v2615
    %v2840 = vsub.f32 %v2821, %v2616
    %v2841 = vsub.f32 %v2823, %v2617
    %v2842 = vsub.f32 %v2825, %v2618
    %v2843 = vsub.f32 %v2827, %v2619
    %vm2844 = vcmp.lt.f32.partialorder %v2023, 0.0
    %vm2845 = vcmp.lt.f32.partialorder %v2025, 0.0
    %vm2846 = vcmp.lt.f32.partialorder %v2094, 0.0
    %vm2847 = vcmp.lt.f32.partialorder %v2096, 0.0
    %vm2848 = vcmp.lt.f32.partialorder %v2165, 0.0
    %vm2849 = vcmp.lt.f32.partialorder %v2167, 0.0
    %vm2850 = vcmp.lt.f32.partialorder %v2236, 0.0
    %vm2851 = vcmp.lt.f32.partialorder %v2238, 0.0
    %vm2852 = vcmp.lt.f32.partialorder %v2307, 0.0
    %vm2853 = vcmp.lt.f32.partialorder %v2309, 0.0
    %vm2854 = vcmp.lt.f32.partialorder %v2378, 0.0
    %vm2855 = vcmp.lt.f32.partialorder %v2380, 0.0
    %vm2856 = vcmp.lt.f32.partialorder %v2449, 0.0
    %vm2857 = vcmp.lt.f32.partialorder %v2451, 0.0
    %vm2858 = vcmp.lt.f32.partialorder %v2520, 0.0
    %vm2859 = vcmp.lt.f32.partialorder %v2522, 0.0
    %v2860 = vsub.f32 1.0, %v2732
    %v2861 = vsub.f32 1.0, %v2733
    %v2862 = vsub.f32 1.0, %v2734
    %v2863 = vsub.f32 1.0, %v2735
    %v2864 = vsub.f32 1.0, %v2736
    %v2865 = vsub.f32 1.0, %v2737
    %v2866 = vsub.f32 1.0, %v2738
    %v2867 = vsub.f32 1.0, %v2739
    %v2868 = vsub.f32 1.0, %v2740
    %v2869 = vsub.f32 1.0, %v2741
    %v2870 = vsub.f32 1.0, %v2742
    %v2871 = vsub.f32 1.0, %v2743
    %v2872 = vsub.f32 1.0, %v2744
    %v2873 = vsub.f32 1.0, %v2745
    %v2874 = vsub.f32 1.0, %v2746
    %v2875 = vsub.f32 1.0, %v2747
    %v2876 = vsel %vm2844, %v2860, %v2732
    %v2877 = vsel %vm2845, %v2861, %v2733
    %v2878 = vsel %vm2846, %v2862, %v2734
    %v2879 = vsel %vm2847, %v2863, %v2735
    %v2880 = vsel %vm2848, %v2864, %v2736
    %v2881 = vsel %vm2849, %v2865, %v2737
    %v2882 = vsel %vm2850, %v2866, %v2738
    %v2883 = vsel %vm2851, %v2867, %v2739
    %v2884 = vsel %vm2852, %v2868, %v2740
    %v2885 = vsel %vm2853, %v2869, %v2741
    %v2886 = vsel %vm2854, %v2870, %v2742
    %v2887 = vsel %vm2855, %v2871, %v2743
    %v2888 = vsel %vm2856, %v2872, %v2744
    %v2889 = vsel %vm2857, %v2873, %v2745
    %v2890 = vsel %vm2858, %v2874, %v2746
    %v2891 = vsel %vm2859, %v2875, %v2747
    %vm2892 = vcmp.ge.f32.partialorder %v2876, 0.0
    %vm2893 = vcmp.ge.f32.partialorder %v2877, 0.0
    %vm2894 = vcmp.ge.f32.partialorder %v2878, 0.0
    %vm2895 = vcmp.ge.f32.partialorder %v2879, 0.0
    %vm2896 = vcmp.ge.f32.partialorder %v2880, 0.0
    %vm2897 = vcmp.ge.f32.partialorder %v2881, 0.0
    %vm2898 = vcmp.ge.f32.partialorder %v2882, 0.0
    %vm2899 = vcmp.ge.f32.partialorder %v2883, 0.0
    %vm2900 = vcmp.ge.f32.partialorder %v2884, 0.0
    %vm2901 = vcmp.ge.f32.partialorder %v2885, 0.0
    %vm2902 = vcmp.ge.f32.partialorder %v2886, 0.0
    %vm2903 = vcmp.ge.f32.partialorder %v2887, 0.0
    %vm2904 = vcmp.ge.f32.partialorder %v2888, 0.0
    %vm2905 = vcmp.ge.f32.partialorder %v2889, 0.0
    %vm2906 = vcmp.ge.f32.partialorder %v2890, 0.0
    %vm2907 = vcmp.ge.f32.partialorder %v2891, 0.0
    %vm2908 = vcmp.le.f32.partialorder %v2876, 1.0
    %vm2909 = vcmp.le.f32.partialorder %v2877, 1.0
    %vm2910 = vcmp.le.f32.partialorder %v2878, 1.0
    %vm2911 = vcmp.le.f32.partialorder %v2879, 1.0
    %vm2912 = vcmp.le.f32.partialorder %v2880, 1.0
    %vm2913 = vcmp.le.f32.partialorder %v2881, 1.0
    %vm2914 = vcmp.le.f32.partialorder %v2882, 1.0
    %vm2915 = vcmp.le.f32.partialorder %v2883, 1.0
    %vm2916 = vcmp.le.f32.partialorder %v2884, 1.0
    %vm2917 = vcmp.le.f32.partialorder %v2885, 1.0
    %vm2918 = vcmp.le.f32.partialorder %v2886, 1.0
    %vm2919 = vcmp.le.f32.partialorder %v2887, 1.0
    %vm2920 = vcmp.le.f32.partialorder %v2888, 1.0
    %vm2921 = vcmp.le.f32.partialorder %v2889, 1.0
    %vm2922 = vcmp.le.f32.partialorder %v2890, 1.0
    %vm2923 = vcmp.le.f32.partialorder %v2891, 1.0
    %vm2924 = vmand %vm2892, %vm2908
    %vm2925 = vmand %vm2893, %vm2909
    %vm2926 = vmand %vm2894, %vm2910
    %vm2927 = vmand %vm2895, %vm2911
    %vm2928 = vmand %vm2896, %vm2912
    %vm2929 = vmand %vm2897, %vm2913
    %vm2930 = vmand %vm2898, %vm2914
    %vm2931 = vmand %vm2899, %vm2915
    %vm2932 = vmand %vm2900, %vm2916
    %vm2933 = vmand %vm2901, %vm2917
    %vm2934 = vmand %vm2902, %vm2918
    %vm2935 = vmand %vm2903, %vm2919
    %vm2936 = vmand %vm2904, %vm2920
    %vm2937 = vmand %vm2905, %vm2921
    %vm2938 = vmand %vm2906, %vm2922
    %vm2939 = vmand %vm2907, %vm2923
    %v2940 = vsel %vm2924, %v2828, -inf
    %v2941 = vsel %vm2925, %v2829, -inf
    %v2942 = vsel %vm2926, %v2830, -inf
    %v2943 = vsel %vm2927, %v2831, -inf
    %v2944 = vsel %vm2928, %v2832, -inf
    %v2945 = vsel %vm2929, %v2833, -inf
    %v2946 = vsel %vm2930, %v2834, -inf
    %v2947 = vsel %vm2931, %v2835, -inf
    %v2948 = vsel %vm2932, %v2836, -inf
    %v2949 = vsel %vm2933, %v2837, -inf
    %v2950 = vsel %vm2934, %v2838, -inf
    %v2951 = vsel %vm2935, %v2839, -inf
    %v2952 = vsel %vm2936, %v2840, -inf
    %v2953 = vsel %vm2937, %v2841, -inf
    %v2954 = vsel %vm2938, %v2842, -inf
    %v2955 = vsel %vm2939, %v2843, -inf
    %v2972 = vcombine.low %v2940, %v2941
    %v2973 = vcombine.low %v2942, %v2943
    %v2974 = vcombine.low %v2944, %v2945
    %v2975 = vcombine.low %v2946, %v2947
    %v2977 = vunpack.c.l.s4 1966171168
    %v2978 = vunpack.c.0.s8 %v2977
    %v2979 = vlaneseq
    %v2980 = vshrl.u32 %v2979, 7
    %v2981 = vsub.s32 %v2978, %v2980
    %v2982 = vrot.slane %v2972, %v2981
    %v2984 = vunpack.c.l.s4 1966171168
    %v2985 = vunpack.c.0.s8 %v2984
    %v2986 = vlaneseq
    %v2987 = vshrl.u32 %v2986, 7
    %v2988 = vsub.s32 %v2985, %v2987
    %v2989 = vrot.slane %v2973, %v2988
    %v2991 = vunpack.c.l.s4 1966171168
    %v2992 = vunpack.c.0.s8 %v2991
    %v2993 = vlaneseq
    %v2994 = vshrl.u32 %v2993, 7
    %v2995 = vsub.s32 %v2992, %v2994
    %v2996 = vrot.slane %v2974, %v2995
    %v2998 = vunpack.c.l.s4 1966171168
    %v2999 = vunpack.c.0.s8 %v2998
    %v3000 = vlaneseq
    %v3001 = vshrl.u32 %v3000, 7
    %v3002 = vsub.s32 %v2999, %v3001
    %v3003 = vrot.slane %v2975, %v3002
    %v3004 = vcombine.low %v2982, %v2989
    %v3005 = vcombine.low %v2996, %v3003
    %v3007 = vunpack.c.l.s4 1966171168
    %v3008 = vunpack.c.0.s8 %v3007
    %v3009 = vlaneseq
    %v3010 = vshrl.u32 %v3009, 7
    %v3011 = vsub.s32 %v3008, %v3010
    %v3012 = vrot.slane %v3004, %v3011
    %v3014 = vunpack.c.l.s4 1966171168
    %v3015 = vunpack.c.0.s8 %v3014
    %v3016 = vlaneseq
    %v3017 = vshrl.u32 %v3016, 7
    %v3018 = vsub.s32 %v3015, %v3017
    %v3019 = vrot.slane %v3005, %v3018
    %v3020 = vcombine.low %v3012, %v3019
    %v3021 = vcombine.low %v2948, %v2949
    %v3022 = vcombine.low %v2950, %v2951
    %v3023 = vcombine.low %v2952, %v2953
    %v3024 = vcombine.low %v2954, %v2955
    %v3026 = vunpack.c.l.s4 1966171168
    %v3027 = vunpack.c.0.s8 %v3026
    %v3028 = vlaneseq
    %v3029 = vshrl.u32 %v3028, 7
    %v3030 = vsub.s32 %v3027, %v3029
    %v3031 = vrot.slane %v3021, %v3030
    %v3033 = vunpack.c.l.s4 1966171168
    %v3034 = vunpack.c.0.s8 %v3033
    %v3035 = vlaneseq
    %v3036 = vshrl.u32 %v3035, 7
    %v3037 = vsub.s32 %v3034, %v3036
    %v3038 = vrot.slane %v3022, %v3037
    %v3040 = vunpack.c.l.s4 1966171168
    %v3041 = vunpack.c.0.s8 %v3040
    %v3042 = vlaneseq
    %v3043 = vshrl.u32 %v3042, 7
    %v3044 = vsub.s32 %v3041, %v3043
    %v3045 = vrot.slane %v3023, %v3044
    %v3047 = vunpack.c.l.s4 1966171168
    %v3048 = vunpack.c.0.s8 %v3047
    %v3049 = vlaneseq
    %v3050 = vshrl.u32 %v3049, 7
    %v3051 = vsub.s32 %v3048, %v3050
    %v3052 = vrot.slane %v3024, %v3051
    %v3053 = vcombine.low %v3031, %v3038
    %v3054 = vcombine.low %v3045, %v3052
    %v3056 = vunpack.c.l.s4 1966171168
    %v3057 = vunpack.c.0.s8 %v3056
    %v3058 = vlaneseq
    %v3059 = vshrl.u32 %v3058, 7
    %v3060 = vsub.s32 %v3057, %v3059
    %v3061 = vrot.slane %v3053, %v3060
    %v3063 = vunpack.c.l.s4 1966171168
    %v3064 = vunpack.c.0.s8 %v3063
    %v3065 = vlaneseq
    %v3066 = vshrl.u32 %v3065, 7
    %v3067 = vsub.s32 %v3064, %v3066
    %v3068 = vrot.slane %v3054, %v3067
    %v3069 = vcombine.low %v3061, %v3068
    %3072 = vst [vmem:[#allocation6] sm:$0xff] %v3020
    %3073 = vst [vmem:[#allocation6 + $0x8] sm:$0xff] %v3069
    // Predicated region
    $region42: #{tpu_custom_call.1} parent=1 // pred_check
      _
    $region43: #{tpu_custom_call.1} parent=1 // pred_check_branch
      %3075 = sbr.rel (0) target = $region45
    $region44: #{tpu_custom_call.1} parent=1 // pred_region
      %s3077 = ssub.s32 256, 256
      %3078 = vsyncadd [#allocation5], %s3077
      %s3080 = sshll.u32 [#allocation6], 4
      %s3081 = int_to_ptr.vmem [resolvable:$true] %s3080
      %3083 = dma.vmem_to_hbm [thread:$0]  %s3081, 256, %s9, [#allocation5]
    $region45: #{tpu_custom_call.1} parent=1 // pred_fallthru
      _
    // Predicated region
    $region46: #{tpu_custom_call.1} parent=1 // pred_check
      _
    $region47: #{tpu_custom_call.1} parent=1 // pred_check_branch
      %3085 = sbr.rel (0) target = $region49
    $region48: #{tpu_custom_call.1} parent=1 // pred_region
      %3086 = dma.done [#allocation5], 256
    $region49: #{tpu_custom_call.1} parent=1 // pred_fallthru
      _
    %3087 = vsyncpa [#allocation4], 1
    %3088 = vsyncpa [#allocation5], 1

</llo_original>
